<compile_context>
chip_gen: v7x
topology: tpu7x:2x2x1
jax: 0.10.0
libtpu: 0.0.40
codegen_flags: <defaults>
</compile_context>

<pallas_src>
import functools
import math

import jax
import jax.numpy as jnp
from jax.experimental import pallas as pl
from jax.experimental.pallas import tpu as pltpu

# ---- synthetic BERT config (small) ----
HIDDEN = 32
HEADS = 2
HEAD_DIM = HIDDEN // HEADS
LAYERS = 2
INTERMEDIATE = 64
VOCAB = 128
MAX_POS = 16
LN_EPS = 1e-12


def _round_up(x, m):
    return (x + m - 1) // m * m


# ---------------- packed parameter blob layouts ----------------
# Per-layer blob: (L_ROWS, L_WIDTH) f32, one per layer, stacked along rows.
L_WIDTH = max(HIDDEN, INTERMEDIATE)          # 64 lanes
L_WQ = 0                                     # (HIDDEN, HIDDEN)
L_WK = L_WQ + HIDDEN
L_WV = L_WK + HIDDEN
L_WO = L_WV + HIDDEN
L_W1 = L_WO + HIDDEN                         # (HIDDEN, INTERMEDIATE)
L_W2 = L_W1 + HIDDEN                         # (INTERMEDIATE, HIDDEN)
L_BQ = L_W2 + INTERMEDIATE                   # bias / LN rows (1 row each)
L_BK = L_BQ + 1
L_BV = L_BK + 1
L_BO = L_BV + 1
L_B1 = L_BO + 1
L_B2 = L_B1 + 1
L_LN1G = L_B2 + 1
L_LN1B = L_LN1G + 1
L_LN2G = L_LN1B + 1
L_LN2B = L_LN2G + 1
L_ROWS = _round_up(L_LN2B + 1, 8)            # 8-aligned so every layer base is aligned

# Misc blob: embeddings + pooler + RACE head, (M_ROWS, HIDDEN) f32.
M_TOK = 0                                    # (VOCAB, HIDDEN)
M_POS = M_TOK + VOCAB                        # (MAX_POS, HIDDEN)
M_WP = M_POS + MAX_POS                       # (HIDDEN, HIDDEN)   pooler weight
M_WFC1 = M_WP + HIDDEN                       # (HIDDEN, HIDDEN)   fc1 weight
M_TYPE = M_WFC1 + HIDDEN                     # (2, HIDDEN)        token-type embeddings
M_EMB_LNG = M_TYPE + 2                       # 1 row each below
M_EMB_LNB = M_EMB_LNG + 1
M_BP = M_EMB_LNB + 1
M_BFC1 = M_BP + 1
M_WFC2 = M_BFC1 + 1                          # fc2 weight (HIDDEN -> 1) stored as a row
M_BFC2 = M_WFC2 + 1
M_ROWS = _round_up(M_BFC2 + 1, 8)


def _vmem():
    return pl.BlockSpec(memory_space=pltpu.MemorySpace.VMEM)


# ---------------- fused Pallas kernel ----------------

def _make_fused_kernel(n_rows, seq):
    """Embedding + encoder + pooler + RACE head, one kernel, VMEM-resident."""
    rs = n_rows * seq
    scale = 1.0 / math.sqrt(HEAD_DIM)
    # index math (pos-id / sequence-block-id) uses shift/AND -> needs pow2 seq.
    assert seq > 0 and (seq & (seq - 1)) == 0, "seq must be a power of two"
    shift = seq.bit_length() - 1

    def kernel(ids_ref, layers_ref, misc_ref, o_ref):
        f32 = jnp.float32

        def layer_norm(v, g, b):
            mean = jnp.mean(v, axis=-1, keepdims=True)
            var = jnp.mean(jnp.square(v - mean), axis=-1, keepdims=True)
            return (v - mean) * jax.lax.rsqrt(var + LN_EPS) * g + b

        # ---- embeddings: gather done in-kernel as one-hot MXU matmuls ----
        ids = ids_ref[...]                                             # (rs, 1) int32
        tok_oh = jnp.where(
            ids == jax.lax.broadcasted_iota(jnp.int32, (rs, VOCAB), 1), 1.0, 0.0)
        x = jnp.dot(tok_oh, misc_ref[M_TOK:M_TOK + VOCAB, :],
                    preferred_element_type=f32)                        # (rs, H)

        # position embedding + token-type-0 embedding (all-zero segment ids)
        pos_eff = (misc_ref[M_POS:M_POS + seq, :]
                   + misc_ref[M_TYPE:M_TYPE + 1, :])                   # (seq, H)
        r2 = jax.lax.broadcasted_iota(jnp.int32, (rs, seq), 0)
        c2 = jax.lax.broadcasted_iota(jnp.int32, (rs, seq), 1)
        pos_oh = jnp.where((r2 & (seq - 1)) == c2, 1.0, 0.0)           # (rs, seq)
        x = x + jnp.dot(pos_oh, pos_eff, preferred_element_type=f32)

        x = layer_norm(x, misc_ref[M_EMB_LNG:M_EMB_LNG + 1, :],
                       misc_ref[M_EMB_LNB:M_EMB_LNB + 1, :])

        # block-diagonal attention mask: a row only attends within its own sequence
        ri = jax.lax.broadcasted_iota(jnp.int32, (rs, rs), 0)
        ci = jax.lax.broadcasted_iota(jnp.int32, (rs, rs), 1)
        attn_mask = (ri >> shift) == (ci >> shift)                     # (rs, rs) bool

        # ---- statically unrolled transformer layers, all data in VMEM/vregs ----
        for l in range(LAYERS):
            base = l * L_ROWS
            wq = layers_ref[base + L_WQ:base + L_WQ + HIDDEN, :HIDDEN]
            wk = layers_ref[base + L_WK:base + L_WK + HIDDEN, :HIDDEN]
            wv = layers_ref[base + L_WV:base + L_WV + HIDDEN, :HIDDEN]
            wo = layers_ref[base + L_WO:base + L_WO + HIDDEN, :HIDDEN]
            w1 = layers_ref[base + L_W1:base + L_W1 + HIDDEN, :INTERMEDIATE]
            w2 = layers_ref[base + L_W2:base + L_W2 + INTERMEDIATE, :HIDDEN]
            bq = layers_ref[base + L_BQ:base + L_BQ + 1, :HIDDEN]
            bk = layers_ref[base + L_BK:base + L_BK + 1, :HIDDEN]
            bv = layers_ref[base + L_BV:base + L_BV + 1, :HIDDEN]
            bo = layers_ref[base + L_BO:base + L_BO + 1, :HIDDEN]
            b1 = layers_ref[base + L_B1:base + L_B1 + 1, :INTERMEDIATE]
            b2 = layers_ref[base + L_B2:base + L_B2 + 1, :HIDDEN]
            ln1g = layers_ref[base + L_LN1G:base + L_LN1G + 1, :HIDDEN]
            ln1b = layers_ref[base + L_LN1B:base + L_LN1B + 1, :HIDDEN]
            ln2g = layers_ref[base + L_LN2G:base + L_LN2G + 1, :HIDDEN]
            ln2b = layers_ref[base + L_LN2B:base + L_LN2B + 1, :HIDDEN]

            # projections: 3 lane-aligned (rs,H)@(H,H) matmuls (no fused-QKV lane slicing)
            q = jnp.dot(x, wq, preferred_element_type=f32) + bq
            k = jnp.dot(x, wk, preferred_element_type=f32) + bk
            v = jnp.dot(x, wv, preferred_element_type=f32) + bv

            # per-head block-diagonal attention over ALL sequences at once (2-D only)
            ctx_heads = []
            for h in range(HEADS):
                lo = h * HEAD_DIM
                qh = q[:, lo:lo + HEAD_DIM]                            # (rs, Dh)
                kh = k[:, lo:lo + HEAD_DIM]
                vh = v[:, lo:lo + HEAD_DIM]
                # S = Q_h @ K_h^T  (rhs contracted on its last dim)
                s = jax.lax.dot_general(
                    qh * scale, kh, (((1,), (1,)), ((), ())),
                    preferred_element_type=f32)                        # (rs, rs)
                s = jnp.where(attn_mask, s, -1e30)
                s = s - jnp.max(s, axis=-1, keepdims=True)
                p = jnp.exp(s)
                p = p / jnp.sum(p, axis=-1, keepdims=True)             # exact division
                ctx_heads.append(
                    jnp.dot(p, vh, preferred_element_type=f32))        # (rs, Dh)
            ctx = jnp.concatenate(ctx_heads, axis=-1)                  # (rs, H)

            # single output projection + residual + LN1
            attn = jnp.dot(ctx, wo, preferred_element_type=f32) + bo
            x = layer_norm(attn + x, ln1g, ln1b)

            # FFN + residual + LN2
            ffn = jnp.dot(x, w1, preferred_element_type=f32) + b1
            # TODO(synk): HF BERT default is exact erf-GELU; tanh approximation used here.
            ffn = jax.nn.gelu(ffn, approximate=True)
            ffn = jnp.dot(ffn, w2, preferred_element_type=f32) + b2
            x = layer_norm(ffn + x, ln2g, ln2b)

        # ---- BERT pooler: tanh(W_p @ h[:, 0]) == bert_model(token_ids)[1] ----
        # CLS rows (0, seq, 2*seq, ...) selected via a one-hot matmul (no 3-D reshape).
        sr = jax.lax.broadcasted_iota(jnp.int32, (n_rows, rs), 0) * seq
        sc = jax.lax.broadcasted_iota(jnp.int32, (n_rows, rs), 1)
        sel = jnp.where(sr == sc, 1.0, 0.0)                            # (n_rows, rs)
        cls = jnp.dot(sel, x, preferred_element_type=f32)              # (n_rows, H)
        pooled = jnp.tanh(
            jnp.dot(cls, misc_ref[M_WP:M_WP + HIDDEN, :], preferred_element_type=f32)
            + misc_ref[M_BP:M_BP + 1, :])

        # ---- RACE head: fc1 -> dropout(identity in eval) -> fc2 ----
        h1 = (jnp.dot(pooled, misc_ref[M_WFC1:M_WFC1 + HIDDEN, :],
                      preferred_element_type=f32)
              + misc_ref[M_BFC1:M_BFC1 + 1, :])
        # TODO(synk): nn.Dropout is identity in eval mode; training-mode stochastic dropout not implemented.
        # fc2 (H -> 1) as a VPU row-reduce instead of an N=1 MXU matmul.
        logits = (jnp.sum(h1 * misc_ref[M_WFC2:M_WFC2 + 1, :], axis=-1, keepdims=True)
                  + misc_ref[M_BFC2:M_BFC2 + 1, 0:1])
        o_ref[...] = logits                                            # (n_rows, 1)

    return kernel


# ---------------- parameters (packed at init time, not per call) ----------------

def init_params(key):
    def normal(k, shape):
        return jax.random.normal(k, shape, jnp.float32) * 0.02

    ks = iter(jax.random.split(key, 6 + 6 * LAYERS))

    # misc blob: embeddings + pooler + RACE head
    misc = jnp.zeros((M_ROWS, HIDDEN), jnp.float32)
    misc = misc.at[M_TOK:M_TOK + VOCAB].set(normal(next(ks), (VOCAB, HIDDEN)))
    misc = misc.at[M_POS:M_POS + MAX_POS].set(normal(next(ks), (MAX_POS, HIDDEN)))
    misc = misc.at[M_WP:M_WP + HIDDEN].set(normal(next(ks), (HIDDEN, HIDDEN)))
    misc = misc.at[M_WFC1:M_WFC1 + HIDDEN].set(normal(next(ks), (HIDDEN, HIDDEN)))
    misc = misc.at[M_TYPE:M_TYPE + 2].set(normal(next(ks), (2, HIDDEN)))
    misc = misc.at[M_EMB_LNG].set(1.0)                      # embedding LN gamma
    misc = misc.at[M_WFC2].set(normal(next(ks), (HIDDEN,)))  # fc2 weight as a row
    # LN betas / all biases stay zero

    # per-layer blobs, flattened along rows: (LAYERS * L_ROWS, L_WIDTH)
    blobs = []
    for _ in range(LAYERS):
        b = jnp.zeros((L_ROWS, L_WIDTH), jnp.float32)
        b = b.at[L_WQ:L_WQ + HIDDEN, :HIDDEN].set(normal(next(ks), (HIDDEN, HIDDEN)))
        b = b.at[L_WK:L_WK + HIDDEN, :HIDDEN].set(normal(next(ks), (HIDDEN, HIDDEN)))
        b = b.at[L_WV:L_WV + HIDDEN, :HIDDEN].set(normal(next(ks), (HIDDEN, HIDDEN)))
        b = b.at[L_WO:L_WO + HIDDEN, :HIDDEN].set(normal(next(ks), (HIDDEN, HIDDEN)))
        b = b.at[L_W1:L_W1 + HIDDEN, :INTERMEDIATE].set(
            normal(next(ks), (HIDDEN, INTERMEDIATE)))
        b = b.at[L_W2:L_W2 + INTERMEDIATE, :HIDDEN].set(
            normal(next(ks), (INTERMEDIATE, HIDDEN)))
        b = b.at[L_LN1G, :HIDDEN].set(1.0)
        b = b.at[L_LN2G, :HIDDEN].set(1.0)
        blobs.append(b)
    layers = jnp.concatenate(blobs, axis=0)

    return {"layers": layers, "misc": misc}


# ---------------- forward ----------------

def bert_for_race_forward(params, token_ids):
    batch, options, seq = token_ids.shape
    n_rows = batch * options
    # metadata-only reshape; all real work happens inside the single pallas_call
    ids = token_ids.reshape(n_rows * seq, 1).astype(jnp.int32)

    kernel = _make_fused_kernel(n_rows, seq)
    logits = pl.pallas_call(
        kernel,
        out_shape=jax.ShapeDtypeStruct((n_rows, 1), jnp.float32),
        in_specs=[_vmem(), _vmem(), _vmem()],
        out_specs=_vmem(),
    )(ids, params["layers"], params["misc"])

    # out = fc2_out.view(-1, options_num); note: self.sigmoid is unused in forward
    return logits.reshape(-1, options)


if __name__ == "__main__":
    key = jax.random.PRNGKey(0)
    pkey, dkey = jax.random.split(key)
    params = init_params(pkey)

    batch, options, seq = 2, 4, 8
    token_ids = jax.random.randint(dkey, (batch, options, seq), 0, VOCAB,
                                   dtype=jnp.int32)

    fwd = jax.jit(functools.partial(bert_for_race_forward, params))
    out = jax.block_until_ready(fwd(token_ids))
    assert out.shape == (batch, options), out.shape
    assert out.dtype == jnp.float32
    assert bool(jnp.all(jnp.isfinite(out)))
    print("KERNEL_OK")
</pallas_src>

<mosaic_0001>
module attributes {stable_mosaic.version = 11 : i64} {
  func.func @kernel(%arg0: memref<64x1xi32, #tpu.memory_space<vmem>>, %arg1: memref<480x64xf32, #tpu.memory_space<vmem>>, %arg2: memref<216x32xf32, #tpu.memory_space<vmem>>, %arg3: memref<8x1xf32, #tpu.memory_space<vmem>>) attributes {dimension_semantics = [], scalar_prefetch = 0 : i64, scratch_operands = 0 : i64, tpu.core_type = #tpu.core_type<tc>} {
    %c0 = arith.constant 0 : index
    %c0_0 = arith.constant 0 : index
    %0 = vector.load %arg0[%c0, %c0_0] : memref<64x1xi32, #tpu.memory_space<vmem>>, vector<64x1xi32>
    %1 = tpu.iota {dimensions = array<i32: 1>} : vector<64x128xi32>
    %2 = vector.broadcast %0 : vector<64x1xi32> to vector<64x128xi32>
    %3 = arith.cmpi eq, %2, %1 : vector<64x128xi32>
    %cst = arith.constant 1.000000e+00 : f32
    %cst_1 = arith.constant 0.000000e+00 : f32
    %4 = vector.broadcast %cst : f32 to vector<64x128xf32>
    %5 = vector.broadcast %cst_1 : f32 to vector<64x128xf32>
    %6 = arith.select %3, %4, %5 : vector<64x128xi1>, vector<64x128xf32>
    %c0_2 = arith.constant 0 : index
    %c0_3 = arith.constant 0 : index
    %7 = vector.load %arg2[%c0_2, %c0_3] : memref<216x32xf32, #tpu.memory_space<vmem>>, vector<128x32xf32>
    %cst_4 = arith.constant dense<0.000000e+00> : vector<64x32xf32>
    %8 = tpu.matmul %6, %7, %cst_4 {dimension_numbers = #tpu.dot_dimension_numbers<[1], [0], [0], [1], [0, 0, 1, 1], [], []>} : vector<64x128xf32>, vector<128x32xf32>, vector<64x32xf32> -> vector<64x32xf32>
    %c128 = arith.constant 128 : index
    %c0_5 = arith.constant 0 : index
    %9 = vector.load %arg2[%c128, %c0_5] : memref<216x32xf32, #tpu.memory_space<vmem>>, vector<8x32xf32>
    %c208 = arith.constant 208 : index
    %c0_6 = arith.constant 0 : index
    %10 = vector.load %arg2[%c208, %c0_6] : memref<216x32xf32, #tpu.memory_space<vmem>>, vector<1x32xf32>
    %11 = vector.broadcast %10 : vector<1x32xf32> to vector<8x32xf32>
    %12 = arith.addf %9, %11 : vector<8x32xf32>
    %13 = tpu.iota {dimensions = array<i32: 0>} : vector<64x8xi32>
    %14 = tpu.iota {dimensions = array<i32: 1>} : vector<64x8xi32>
    %c7_i32 = arith.constant 7 : i32
    %15 = vector.broadcast %c7_i32 : i32 to vector<64x8xi32>
    %16 = arith.andi %13, %15 : vector<64x8xi32>
    %17 = arith.cmpi eq, %16, %14 : vector<64x8xi32>
    %cst_7 = arith.constant 1.000000e+00 : f32
    %cst_8 = arith.constant 0.000000e+00 : f32
    %18 = vector.broadcast %cst_7 : f32 to vector<64x8xf32>
    %19 = vector.broadcast %cst_8 : f32 to vector<64x8xf32>
    %20 = arith.select %17, %18, %19 : vector<64x8xi1>, vector<64x8xf32>
    %cst_9 = arith.constant dense<0.000000e+00> : vector<64x32xf32>
    %21 = tpu.matmul %20, %12, %cst_9 {dimension_numbers = #tpu.dot_dimension_numbers<[1], [0], [0], [1], [0, 0, 1, 1], [], []>} : vector<64x8xf32>, vector<8x32xf32>, vector<64x32xf32> -> vector<64x32xf32>
    %22 = arith.addf %8, %21 : vector<64x32xf32>
    %c210 = arith.constant 210 : index
    %c0_10 = arith.constant 0 : index
    %23 = vector.load %arg2[%c210, %c0_10] : memref<216x32xf32, #tpu.memory_space<vmem>>, vector<1x32xf32>
    %c211 = arith.constant 211 : index
    %c0_11 = arith.constant 0 : index
    %24 = vector.load %arg2[%c211, %c0_11] : memref<216x32xf32, #tpu.memory_space<vmem>>, vector<1x32xf32>
    %cst_12 = arith.constant dense<0.000000e+00> : vector<64xf32>
    %25 = vector.multi_reduction <add>, %22, %cst_12 [1] : vector<64x32xf32> to vector<64xf32>
    %26 = vector.shape_cast %25 : vector<64xf32> to vector<64x1xf32>
    %cst_13 = arith.constant 3.200000e+01 : f32
    %27 = vector.broadcast %cst_13 : f32 to vector<64x1xf32>
    %28 = arith.divf %26, %27 : vector<64x1xf32>
    %29 = vector.broadcast %28 : vector<64x1xf32> to vector<64x32xf32>
    %30 = arith.subf %22, %29 : vector<64x32xf32>
    %31 = arith.mulf %30, %30 : vector<64x32xf32>
    %cst_14 = arith.constant dense<0.000000e+00> : vector<64xf32>
    %32 = vector.multi_reduction <add>, %31, %cst_14 [1] : vector<64x32xf32> to vector<64xf32>
    %33 = vector.shape_cast %32 : vector<64xf32> to vector<64x1xf32>
    %cst_15 = arith.constant 3.200000e+01 : f32
    %34 = vector.broadcast %cst_15 : f32 to vector<64x1xf32>
    %35 = arith.divf %33, %34 : vector<64x1xf32>
    %36 = vector.broadcast %28 : vector<64x1xf32> to vector<64x32xf32>
    %37 = arith.subf %22, %36 : vector<64x32xf32>
    %cst_16 = arith.constant 9.99999996E-13 : f32
    %38 = vector.broadcast %cst_16 : f32 to vector<64x1xf32>
    %39 = arith.addf %35, %38 : vector<64x1xf32>
    %40 = math.rsqrt %39 : vector<64x1xf32>
    %41 = vector.broadcast %40 : vector<64x1xf32> to vector<64x32xf32>
    %42 = arith.mulf %37, %41 : vector<64x32xf32>
    %43 = vector.broadcast %23 : vector<1x32xf32> to vector<64x32xf32>
    %44 = arith.mulf %42, %43 : vector<64x32xf32>
    %45 = vector.broadcast %24 : vector<1x32xf32> to vector<64x32xf32>
    %46 = arith.addf %44, %45 : vector<64x32xf32>
    %47 = tpu.iota {dimensions = array<i32: 0>} : vector<64x64xi32>
    %48 = tpu.iota {dimensions = array<i32: 1>} : vector<64x64xi32>
    %c3_i32 = arith.constant 3 : i32
    %49 = vector.broadcast %c3_i32 : i32 to vector<64x64xi32>
    %50 = arith.shrsi %47, %49 : vector<64x64xi32>
    %c3_i32_17 = arith.constant 3 : i32
    %51 = vector.broadcast %c3_i32_17 : i32 to vector<64x64xi32>
    %52 = arith.shrsi %48, %51 : vector<64x64xi32>
    %53 = arith.cmpi eq, %50, %52 : vector<64x64xi32>
    %c0_18 = arith.constant 0 : index
    %c0_19 = arith.constant 0 : index
    %54 = vector.load %arg1[%c0_18, %c0_19] : memref<480x64xf32, #tpu.memory_space<vmem>>, vector<32x32xf32>
    %c32 = arith.constant 32 : index
    %c0_20 = arith.constant 0 : index
    %55 = vector.load %arg1[%c32, %c0_20] : memref<480x64xf32, #tpu.memory_space<vmem>>, vector<32x32xf32>
    %c64 = arith.constant 64 : index
    %c0_21 = arith.constant 0 : index
    %56 = vector.load %arg1[%c64, %c0_21] : memref<480x64xf32, #tpu.memory_space<vmem>>, vector<32x32xf32>
    %c96 = arith.constant 96 : index
    %c0_22 = arith.constant 0 : index
    %57 = vector.load %arg1[%c96, %c0_22] : memref<480x64xf32, #tpu.memory_space<vmem>>, vector<32x32xf32>
    %c128_23 = arith.constant 128 : index
    %c0_24 = arith.constant 0 : index
    %58 = vector.load %arg1[%c128_23, %c0_24] : memref<480x64xf32, #tpu.memory_space<vmem>>, vector<32x64xf32>
    %c160 = arith.constant 160 : index
    %c0_25 = arith.constant 0 : index
    %59 = vector.load %arg1[%c160, %c0_25] : memref<480x64xf32, #tpu.memory_space<vmem>>, vector<64x32xf32>
    %c224 = arith.constant 224 : index
    %c0_26 = arith.constant 0 : index
    %60 = vector.load %arg1[%c224, %c0_26] : memref<480x64xf32, #tpu.memory_space<vmem>>, vector<1x32xf32>
    %c225 = arith.constant 225 : index
    %c0_27 = arith.constant 0 : index
    %61 = vector.load %arg1[%c225, %c0_27] : memref<480x64xf32, #tpu.memory_space<vmem>>, vector<1x32xf32>
    %c226 = arith.constant 226 : index
    %c0_28 = arith.constant 0 : index
    %62 = vector.load %arg1[%c226, %c0_28] : memref<480x64xf32, #tpu.memory_space<vmem>>, vector<1x32xf32>
    %c227 = arith.constant 227 : index
    %c0_29 = arith.constant 0 : index
    %63 = vector.load %arg1[%c227, %c0_29] : memref<480x64xf32, #tpu.memory_space<vmem>>, vector<1x32xf32>
    %c228 = arith.constant 228 : index
    %c0_30 = arith.constant 0 : index
    %64 = vector.load %arg1[%c228, %c0_30] : memref<480x64xf32, #tpu.memory_space<vmem>>, vector<1x64xf32>
    %c229 = arith.constant 229 : index
    %c0_31 = arith.constant 0 : index
    %65 = vector.load %arg1[%c229, %c0_31] : memref<480x64xf32, #tpu.memory_space<vmem>>, vector<1x32xf32>
    %c230 = arith.constant 230 : index
    %c0_32 = arith.constant 0 : index
    %66 = vector.load %arg1[%c230, %c0_32] : memref<480x64xf32, #tpu.memory_space<vmem>>, vector<1x32xf32>
    %c231 = arith.constant 231 : index
    %c0_33 = arith.constant 0 : index
    %67 = vector.load %arg1[%c231, %c0_33] : memref<480x64xf32, #tpu.memory_space<vmem>>, vector<1x32xf32>
    %c232 = arith.constant 232 : index
    %c0_34 = arith.constant 0 : index
    %68 = vector.load %arg1[%c232, %c0_34] : memref<480x64xf32, #tpu.memory_space<vmem>>, vector<1x32xf32>
    %c233 = arith.constant 233 : index
    %c0_35 = arith.constant 0 : index
    %69 = vector.load %arg1[%c233, %c0_35] : memref<480x64xf32, #tpu.memory_space<vmem>>, vector<1x32xf32>
    %cst_36 = arith.constant dense<0.000000e+00> : vector<64x32xf32>
    %70 = tpu.matmul %46, %54, %cst_36 {dimension_numbers = #tpu.dot_dimension_numbers<[1], [0], [0], [1], [0, 0, 1, 1], [], []>} : vector<64x32xf32>, vector<32x32xf32>, vector<64x32xf32> -> vector<64x32xf32>
    %71 = vector.broadcast %60 : vector<1x32xf32> to vector<64x32xf32>
    %72 = arith.addf %70, %71 : vector<64x32xf32>
    %cst_37 = arith.constant dense<0.000000e+00> : vector<64x32xf32>
    %73 = tpu.matmul %46, %55, %cst_37 {dimension_numbers = #tpu.dot_dimension_numbers<[1], [0], [0], [1], [0, 0, 1, 1], [], []>} : vector<64x32xf32>, vector<32x32xf32>, vector<64x32xf32> -> vector<64x32xf32>
    %74 = vector.broadcast %61 : vector<1x32xf32> to vector<64x32xf32>
    %75 = arith.addf %73, %74 : vector<64x32xf32>
    %cst_38 = arith.constant dense<0.000000e+00> : vector<64x32xf32>
    %76 = tpu.matmul %46, %56, %cst_38 {dimension_numbers = #tpu.dot_dimension_numbers<[1], [0], [0], [1], [0, 0, 1, 1], [], []>} : vector<64x32xf32>, vector<32x32xf32>, vector<64x32xf32> -> vector<64x32xf32>
    %77 = vector.broadcast %62 : vector<1x32xf32> to vector<64x32xf32>
    %78 = arith.addf %76, %77 : vector<64x32xf32>
    %79 = vector.extract_strided_slice %72 {offsets = [0, 0], sizes = [64, 16], strides = [1, 1]} : vector<64x32xf32> to vector<64x16xf32>
    %80 = vector.extract_strided_slice %75 {offsets = [0, 0], sizes = [64, 16], strides = [1, 1]} : vector<64x32xf32> to vector<64x16xf32>
    %81 = vector.extract_strided_slice %78 {offsets = [0, 0], sizes = [64, 16], strides = [1, 1]} : vector<64x32xf32> to vector<64x16xf32>
    %cst_39 = arith.constant 2.500000e-01 : f32
    %82 = vector.broadcast %cst_39 : f32 to vector<64x16xf32>
    %83 = arith.mulf %79, %82 : vector<64x16xf32>
    %cst_40 = arith.constant dense<0.000000e+00> : vector<64x64xf32>
    %84 = tpu.matmul %83, %80, %cst_40 {dimension_numbers = #tpu.dot_dimension_numbers<[1], [1], [0], [0], [0, 0, 1, 0], [], []>} : vector<64x16xf32>, vector<64x16xf32>, vector<64x64xf32> -> vector<64x64xf32>
    %cst_41 = arith.constant -1.000000e+30 : f32
    %85 = vector.broadcast %cst_41 : f32 to vector<64x64xf32>
    %86 = arith.select %53, %84, %85 : vector<64x64xi1>, vector<64x64xf32>
    %cst_42 = arith.constant dense<0xFF800000> : vector<64xf32>
    %87 = vector.multi_reduction <maximumf>, %86, %cst_42 [1] : vector<64x64xf32> to vector<64xf32>
    %88 = vector.shape_cast %87 : vector<64xf32> to vector<64x1xf32>
    %89 = vector.broadcast %88 : vector<64x1xf32> to vector<64x64xf32>
    %90 = arith.subf %86, %89 : vector<64x64xf32>
    %91 = math.exp %90 : vector<64x64xf32>
    %cst_43 = arith.constant dense<0.000000e+00> : vector<64xf32>
    %92 = vector.multi_reduction <add>, %91, %cst_43 [1] : vector<64x64xf32> to vector<64xf32>
    %93 = vector.shape_cast %92 : vector<64xf32> to vector<64x1xf32>
    %94 = vector.broadcast %93 : vector<64x1xf32> to vector<64x64xf32>
    %95 = arith.divf %91, %94 : vector<64x64xf32>
    %cst_44 = arith.constant dense<0.000000e+00> : vector<64x16xf32>
    %96 = tpu.matmul %95, %81, %cst_44 {dimension_numbers = #tpu.dot_dimension_numbers<[1], [0], [0], [1], [0, 0, 1, 1], [], []>} : vector<64x64xf32>, vector<64x16xf32>, vector<64x16xf32> -> vector<64x16xf32>
    %97 = vector.extract_strided_slice %72 {offsets = [0, 16], sizes = [64, 16], strides = [1, 1]} : vector<64x32xf32> to vector<64x16xf32>
    %98 = vector.extract_strided_slice %75 {offsets = [0, 16], sizes = [64, 16], strides = [1, 1]} : vector<64x32xf32> to vector<64x16xf32>
    %99 = vector.extract_strided_slice %78 {offsets = [0, 16], sizes = [64, 16], strides = [1, 1]} : vector<64x32xf32> to vector<64x16xf32>
    %cst_45 = arith.constant 2.500000e-01 : f32
    %100 = vector.broadcast %cst_45 : f32 to vector<64x16xf32>
    %101 = arith.mulf %97, %100 : vector<64x16xf32>
    %cst_46 = arith.constant dense<0.000000e+00> : vector<64x64xf32>
    %102 = tpu.matmul %101, %98, %cst_46 {dimension_numbers = #tpu.dot_dimension_numbers<[1], [1], [0], [0], [0, 0, 1, 0], [], []>} : vector<64x16xf32>, vector<64x16xf32>, vector<64x64xf32> -> vector<64x64xf32>
    %cst_47 = arith.constant -1.000000e+30 : f32
    %103 = vector.broadcast %cst_47 : f32 to vector<64x64xf32>
    %104 = arith.select %53, %102, %103 : vector<64x64xi1>, vector<64x64xf32>
    %cst_48 = arith.constant dense<0xFF800000> : vector<64xf32>
    %105 = vector.multi_reduction <maximumf>, %104, %cst_48 [1] : vector<64x64xf32> to vector<64xf32>
    %106 = vector.shape_cast %105 : vector<64xf32> to vector<64x1xf32>
    %107 = vector.broadcast %106 : vector<64x1xf32> to vector<64x64xf32>
    %108 = arith.subf %104, %107 : vector<64x64xf32>
    %109 = math.exp %108 : vector<64x64xf32>
    %cst_49 = arith.constant dense<0.000000e+00> : vector<64xf32>
    %110 = vector.multi_reduction <add>, %109, %cst_49 [1] : vector<64x64xf32> to vector<64xf32>
    %111 = vector.shape_cast %110 : vector<64xf32> to vector<64x1xf32>
    %112 = vector.broadcast %111 : vector<64x1xf32> to vector<64x64xf32>
    %113 = arith.divf %109, %112 : vector<64x64xf32>
    %cst_50 = arith.constant dense<0.000000e+00> : vector<64x16xf32>
    %114 = tpu.matmul %113, %99, %cst_50 {dimension_numbers = #tpu.dot_dimension_numbers<[1], [0], [0], [1], [0, 0, 1, 1], [], []>} : vector<64x64xf32>, vector<64x16xf32>, vector<64x16xf32> -> vector<64x16xf32>
    %115 = tpu.concatenate %96, %114 in 1 : vector<64x16xf32>, vector<64x16xf32> -> vector<64x32xf32>
    %cst_51 = arith.constant dense<0.000000e+00> : vector<64x32xf32>
    %116 = tpu.matmul %115, %57, %cst_51 {dimension_numbers = #tpu.dot_dimension_numbers<[1], [0], [0], [1], [0, 0, 1, 1], [], []>} : vector<64x32xf32>, vector<32x32xf32>, vector<64x32xf32> -> vector<64x32xf32>
    %117 = vector.broadcast %63 : vector<1x32xf32> to vector<64x32xf32>
    %118 = arith.addf %116, %117 : vector<64x32xf32>
    %119 = arith.addf %118, %46 : vector<64x32xf32>
    %cst_52 = arith.constant dense<0.000000e+00> : vector<64xf32>
    %120 = vector.multi_reduction <add>, %119, %cst_52 [1] : vector<64x32xf32> to vector<64xf32>
    %121 = vector.shape_cast %120 : vector<64xf32> to vector<64x1xf32>
    %cst_53 = arith.constant 3.200000e+01 : f32
    %122 = vector.broadcast %cst_53 : f32 to vector<64x1xf32>
    %123 = arith.divf %121, %122 : vector<64x1xf32>
    %124 = vector.broadcast %123 : vector<64x1xf32> to vector<64x32xf32>
    %125 = arith.subf %119, %124 : vector<64x32xf32>
    %126 = arith.mulf %125, %125 : vector<64x32xf32>
    %cst_54 = arith.constant dense<0.000000e+00> : vector<64xf32>
    %127 = vector.multi_reduction <add>, %126, %cst_54 [1] : vector<64x32xf32> to vector<64xf32>
    %128 = vector.shape_cast %127 : vector<64xf32> to vector<64x1xf32>
    %cst_55 = arith.constant 3.200000e+01 : f32
    %129 = vector.broadcast %cst_55 : f32 to vector<64x1xf32>
    %130 = arith.divf %128, %129 : vector<64x1xf32>
    %131 = vector.broadcast %123 : vector<64x1xf32> to vector<64x32xf32>
    %132 = arith.subf %119, %131 : vector<64x32xf32>
    %cst_56 = arith.constant 9.99999996E-13 : f32
    %133 = vector.broadcast %cst_56 : f32 to vector<64x1xf32>
    %134 = arith.addf %130, %133 : vector<64x1xf32>
    %135 = math.rsqrt %134 : vector<64x1xf32>
    %136 = vector.broadcast %135 : vector<64x1xf32> to vector<64x32xf32>
    %137 = arith.mulf %132, %136 : vector<64x32xf32>
    %138 = vector.broadcast %66 : vector<1x32xf32> to vector<64x32xf32>
    %139 = arith.mulf %137, %138 : vector<64x32xf32>
    %140 = vector.broadcast %67 : vector<1x32xf32> to vector<64x32xf32>
    %141 = arith.addf %139, %140 : vector<64x32xf32>
    %cst_57 = arith.constant dense<0.000000e+00> : vector<64x64xf32>
    %142 = tpu.matmul %141, %58, %cst_57 {dimension_numbers = #tpu.dot_dimension_numbers<[1], [0], [0], [1], [0, 0, 1, 1], [], []>} : vector<64x32xf32>, vector<32x64xf32>, vector<64x64xf32> -> vector<64x64xf32>
    %143 = vector.broadcast %64 : vector<1x64xf32> to vector<64x64xf32>
    %144 = arith.addf %142, %143 : vector<64x64xf32>
    %145 = arith.mulf %144, %144 : vector<64x64xf32>
    %146 = arith.mulf %144, %145 : vector<64x64xf32>
    %cst_58 = arith.constant 4.471500e-02 : f32
    %147 = vector.broadcast %cst_58 : f32 to vector<64x64xf32>
    %148 = arith.mulf %147, %146 : vector<64x64xf32>
    %149 = arith.addf %144, %148 : vector<64x64xf32>
    %cst_59 = arith.constant 0.797884583 : f32
    %150 = vector.broadcast %cst_59 : f32 to vector<64x64xf32>
    %151 = arith.mulf %150, %149 : vector<64x64xf32>
    %152 = math.tanh %151 : vector<64x64xf32>
    %cst_60 = arith.constant 1.000000e+00 : f32
    %153 = vector.broadcast %cst_60 : f32 to vector<64x64xf32>
    %154 = arith.addf %153, %152 : vector<64x64xf32>
    %cst_61 = arith.constant 5.000000e-01 : f32
    %155 = vector.broadcast %cst_61 : f32 to vector<64x64xf32>
    %156 = arith.mulf %155, %154 : vector<64x64xf32>
    %157 = arith.mulf %144, %156 : vector<64x64xf32>
    %cst_62 = arith.constant dense<0.000000e+00> : vector<64x32xf32>
    %158 = tpu.matmul %157, %59, %cst_62 {dimension_numbers = #tpu.dot_dimension_numbers<[1], [0], [0], [1], [0, 0, 1, 1], [], []>} : vector<64x64xf32>, vector<64x32xf32>, vector<64x32xf32> -> vector<64x32xf32>
    %159 = vector.broadcast %65 : vector<1x32xf32> to vector<64x32xf32>
    %160 = arith.addf %158, %159 : vector<64x32xf32>
    %161 = arith.addf %160, %141 : vector<64x32xf32>
    %cst_63 = arith.constant dense<0.000000e+00> : vector<64xf32>
    %162 = vector.multi_reduction <add>, %161, %cst_63 [1] : vector<64x32xf32> to vector<64xf32>
    %163 = vector.shape_cast %162 : vector<64xf32> to vector<64x1xf32>
    %cst_64 = arith.constant 3.200000e+01 : f32
    %164 = vector.broadcast %cst_64 : f32 to vector<64x1xf32>
    %165 = arith.divf %163, %164 : vector<64x1xf32>
    %166 = vector.broadcast %165 : vector<64x1xf32> to vector<64x32xf32>
    %167 = arith.subf %161, %166 : vector<64x32xf32>
    %168 = arith.mulf %167, %167 : vector<64x32xf32>
    %cst_65 = arith.constant dense<0.000000e+00> : vector<64xf32>
    %169 = vector.multi_reduction <add>, %168, %cst_65 [1] : vector<64x32xf32> to vector<64xf32>
    %170 = vector.shape_cast %169 : vector<64xf32> to vector<64x1xf32>
    %cst_66 = arith.constant 3.200000e+01 : f32
    %171 = vector.broadcast %cst_66 : f32 to vector<64x1xf32>
    %172 = arith.divf %170, %171 : vector<64x1xf32>
    %173 = vector.broadcast %165 : vector<64x1xf32> to vector<64x32xf32>
    %174 = arith.subf %161, %173 : vector<64x32xf32>
    %cst_67 = arith.constant 9.99999996E-13 : f32
    %175 = vector.broadcast %cst_67 : f32 to vector<64x1xf32>
    %176 = arith.addf %172, %175 : vector<64x1xf32>
    %177 = math.rsqrt %176 : vector<64x1xf32>
    %178 = vector.broadcast %177 : vector<64x1xf32> to vector<64x32xf32>
    %179 = arith.mulf %174, %178 : vector<64x32xf32>
    %180 = vector.broadcast %68 : vector<1x32xf32> to vector<64x32xf32>
    %181 = arith.mulf %179, %180 : vector<64x32xf32>
    %182 = vector.broadcast %69 : vector<1x32xf32> to vector<64x32xf32>
    %183 = arith.addf %181, %182 : vector<64x32xf32>
    %c240 = arith.constant 240 : index
    %c0_68 = arith.constant 0 : index
    %184 = vector.load %arg1[%c240, %c0_68] : memref<480x64xf32, #tpu.memory_space<vmem>>, vector<32x32xf32>
    %c272 = arith.constant 272 : index
    %c0_69 = arith.constant 0 : index
    %185 = vector.load %arg1[%c272, %c0_69] : memref<480x64xf32, #tpu.memory_space<vmem>>, vector<32x32xf32>
    %c304 = arith.constant 304 : index
    %c0_70 = arith.constant 0 : index
    %186 = vector.load %arg1[%c304, %c0_70] : memref<480x64xf32, #tpu.memory_space<vmem>>, vector<32x32xf32>
    %c336 = arith.constant 336 : index
    %c0_71 = arith.constant 0 : index
    %187 = vector.load %arg1[%c336, %c0_71] : memref<480x64xf32, #tpu.memory_space<vmem>>, vector<32x32xf32>
    %c368 = arith.constant 368 : index
    %c0_72 = arith.constant 0 : index
    %188 = vector.load %arg1[%c368, %c0_72] : memref<480x64xf32, #tpu.memory_space<vmem>>, vector<32x64xf32>
    %c400 = arith.constant 400 : index
    %c0_73 = arith.constant 0 : index
    %189 = vector.load %arg1[%c400, %c0_73] : memref<480x64xf32, #tpu.memory_space<vmem>>, vector<64x32xf32>
    %c464 = arith.constant 464 : index
    %c0_74 = arith.constant 0 : index
    %190 = vector.load %arg1[%c464, %c0_74] : memref<480x64xf32, #tpu.memory_space<vmem>>, vector<1x32xf32>
    %c465 = arith.constant 465 : index
    %c0_75 = arith.constant 0 : index
    %191 = vector.load %arg1[%c465, %c0_75] : memref<480x64xf32, #tpu.memory_space<vmem>>, vector<1x32xf32>
    %c466 = arith.constant 466 : index
    %c0_76 = arith.constant 0 : index
    %192 = vector.load %arg1[%c466, %c0_76] : memref<480x64xf32, #tpu.memory_space<vmem>>, vector<1x32xf32>
    %c467 = arith.constant 467 : index
    %c0_77 = arith.constant 0 : index
    %193 = vector.load %arg1[%c467, %c0_77] : memref<480x64xf32, #tpu.memory_space<vmem>>, vector<1x32xf32>
    %c468 = arith.constant 468 : index
    %c0_78 = arith.constant 0 : index
    %194 = vector.load %arg1[%c468, %c0_78] : memref<480x64xf32, #tpu.memory_space<vmem>>, vector<1x64xf32>
    %c469 = arith.constant 469 : index
    %c0_79 = arith.constant 0 : index
    %195 = vector.load %arg1[%c469, %c0_79] : memref<480x64xf32, #tpu.memory_space<vmem>>, vector<1x32xf32>
    %c470 = arith.constant 470 : index
    %c0_80 = arith.constant 0 : index
    %196 = vector.load %arg1[%c470, %c0_80] : memref<480x64xf32, #tpu.memory_space<vmem>>, vector<1x32xf32>
    %c471 = arith.constant 471 : index
    %c0_81 = arith.constant 0 : index
    %197 = vector.load %arg1[%c471, %c0_81] : memref<480x64xf32, #tpu.memory_space<vmem>>, vector<1x32xf32>
    %c472 = arith.constant 472 : index
    %c0_82 = arith.constant 0 : index
    %198 = vector.load %arg1[%c472, %c0_82] : memref<480x64xf32, #tpu.memory_space<vmem>>, vector<1x32xf32>
    %c473 = arith.constant 473 : index
    %c0_83 = arith.constant 0 : index
    %199 = vector.load %arg1[%c473, %c0_83] : memref<480x64xf32, #tpu.memory_space<vmem>>, vector<1x32xf32>
    %cst_84 = arith.constant dense<0.000000e+00> : vector<64x32xf32>
    %200 = tpu.matmul %183, %184, %cst_84 {dimension_numbers = #tpu.dot_dimension_numbers<[1], [0], [0], [1], [0, 0, 1, 1], [], []>} : vector<64x32xf32>, vector<32x32xf32>, vector<64x32xf32> -> vector<64x32xf32>
    %201 = vector.broadcast %190 : vector<1x32xf32> to vector<64x32xf32>
    %202 = arith.addf %200, %201 : vector<64x32xf32>
    %cst_85 = arith.constant dense<0.000000e+00> : vector<64x32xf32>
    %203 = tpu.matmul %183, %185, %cst_85 {dimension_numbers = #tpu.dot_dimension_numbers<[1], [0], [0], [1], [0, 0, 1, 1], [], []>} : vector<64x32xf32>, vector<32x32xf32>, vector<64x32xf32> -> vector<64x32xf32>
    %204 = vector.broadcast %191 : vector<1x32xf32> to vector<64x32xf32>
    %205 = arith.addf %203, %204 : vector<64x32xf32>
    %cst_86 = arith.constant dense<0.000000e+00> : vector<64x32xf32>
    %206 = tpu.matmul %183, %186, %cst_86 {dimension_numbers = #tpu.dot_dimension_numbers<[1], [0], [0], [1], [0, 0, 1, 1], [], []>} : vector<64x32xf32>, vector<32x32xf32>, vector<64x32xf32> -> vector<64x32xf32>
    %207 = vector.broadcast %192 : vector<1x32xf32> to vector<64x32xf32>
    %208 = arith.addf %206, %207 : vector<64x32xf32>
    %209 = vector.extract_strided_slice %202 {offsets = [0, 0], sizes = [64, 16], strides = [1, 1]} : vector<64x32xf32> to vector<64x16xf32>
    %210 = vector.extract_strided_slice %205 {offsets = [0, 0], sizes = [64, 16], strides = [1, 1]} : vector<64x32xf32> to vector<64x16xf32>
    %211 = vector.extract_strided_slice %208 {offsets = [0, 0], sizes = [64, 16], strides = [1, 1]} : vector<64x32xf32> to vector<64x16xf32>
    %cst_87 = arith.constant 2.500000e-01 : f32
    %212 = vector.broadcast %cst_87 : f32 to vector<64x16xf32>
    %213 = arith.mulf %209, %212 : vector<64x16xf32>
    %cst_88 = arith.constant dense<0.000000e+00> : vector<64x64xf32>
    %214 = tpu.matmul %213, %210, %cst_88 {dimension_numbers = #tpu.dot_dimension_numbers<[1], [1], [0], [0], [0, 0, 1, 0], [], []>} : vector<64x16xf32>, vector<64x16xf32>, vector<64x64xf32> -> vector<64x64xf32>
    %cst_89 = arith.constant -1.000000e+30 : f32
    %215 = vector.broadcast %cst_89 : f32 to vector<64x64xf32>
    %216 = arith.select %53, %214, %215 : vector<64x64xi1>, vector<64x64xf32>
    %cst_90 = arith.constant dense<0xFF800000> : vector<64xf32>
    %217 = vector.multi_reduction <maximumf>, %216, %cst_90 [1] : vector<64x64xf32> to vector<64xf32>
    %218 = vector.shape_cast %217 : vector<64xf32> to vector<64x1xf32>
    %219 = vector.broadcast %218 : vector<64x1xf32> to vector<64x64xf32>
    %220 = arith.subf %216, %219 : vector<64x64xf32>
    %221 = math.exp %220 : vector<64x64xf32>
    %cst_91 = arith.constant dense<0.000000e+00> : vector<64xf32>
    %222 = vector.multi_reduction <add>, %221, %cst_91 [1] : vector<64x64xf32> to vector<64xf32>
    %223 = vector.shape_cast %222 : vector<64xf32> to vector<64x1xf32>
    %224 = vector.broadcast %223 : vector<64x1xf32> to vector<64x64xf32>
    %225 = arith.divf %221, %224 : vector<64x64xf32>
    %cst_92 = arith.constant dense<0.000000e+00> : vector<64x16xf32>
    %226 = tpu.matmul %225, %211, %cst_92 {dimension_numbers = #tpu.dot_dimension_numbers<[1], [0], [0], [1], [0, 0, 1, 1], [], []>} : vector<64x64xf32>, vector<64x16xf32>, vector<64x16xf32> -> vector<64x16xf32>
    %227 = vector.extract_strided_slice %202 {offsets = [0, 16], sizes = [64, 16], strides = [1, 1]} : vector<64x32xf32> to vector<64x16xf32>
    %228 = vector.extract_strided_slice %205 {offsets = [0, 16], sizes = [64, 16], strides = [1, 1]} : vector<64x32xf32> to vector<64x16xf32>
    %229 = vector.extract_strided_slice %208 {offsets = [0, 16], sizes = [64, 16], strides = [1, 1]} : vector<64x32xf32> to vector<64x16xf32>
    %cst_93 = arith.constant 2.500000e-01 : f32
    %230 = vector.broadcast %cst_93 : f32 to vector<64x16xf32>
    %231 = arith.mulf %227, %230 : vector<64x16xf32>
    %cst_94 = arith.constant dense<0.000000e+00> : vector<64x64xf32>
    %232 = tpu.matmul %231, %228, %cst_94 {dimension_numbers = #tpu.dot_dimension_numbers<[1], [1], [0], [0], [0, 0, 1, 0], [], []>} : vector<64x16xf32>, vector<64x16xf32>, vector<64x64xf32> -> vector<64x64xf32>
    %cst_95 = arith.constant -1.000000e+30 : f32
    %233 = vector.broadcast %cst_95 : f32 to vector<64x64xf32>
    %234 = arith.select %53, %232, %233 : vector<64x64xi1>, vector<64x64xf32>
    %cst_96 = arith.constant dense<0xFF800000> : vector<64xf32>
    %235 = vector.multi_reduction <maximumf>, %234, %cst_96 [1] : vector<64x64xf32> to vector<64xf32>
    %236 = vector.shape_cast %235 : vector<64xf32> to vector<64x1xf32>
    %237 = vector.broadcast %236 : vector<64x1xf32> to vector<64x64xf32>
    %238 = arith.subf %234, %237 : vector<64x64xf32>
    %239 = math.exp %238 : vector<64x64xf32>
    %cst_97 = arith.constant dense<0.000000e+00> : vector<64xf32>
    %240 = vector.multi_reduction <add>, %239, %cst_97 [1] : vector<64x64xf32> to vector<64xf32>
    %241 = vector.shape_cast %240 : vector<64xf32> to vector<64x1xf32>
    %242 = vector.broadcast %241 : vector<64x1xf32> to vector<64x64xf32>
    %243 = arith.divf %239, %242 : vector<64x64xf32>
    %cst_98 = arith.constant dense<0.000000e+00> : vector<64x16xf32>
    %244 = tpu.matmul %243, %229, %cst_98 {dimension_numbers = #tpu.dot_dimension_numbers<[1], [0], [0], [1], [0, 0, 1, 1], [], []>} : vector<64x64xf32>, vector<64x16xf32>, vector<64x16xf32> -> vector<64x16xf32>
    %245 = tpu.concatenate %226, %244 in 1 : vector<64x16xf32>, vector<64x16xf32> -> vector<64x32xf32>
    %cst_99 = arith.constant dense<0.000000e+00> : vector<64x32xf32>
    %246 = tpu.matmul %245, %187, %cst_99 {dimension_numbers = #tpu.dot_dimension_numbers<[1], [0], [0], [1], [0, 0, 1, 1], [], []>} : vector<64x32xf32>, vector<32x32xf32>, vector<64x32xf32> -> vector<64x32xf32>
    %247 = vector.broadcast %193 : vector<1x32xf32> to vector<64x32xf32>
    %248 = arith.addf %246, %247 : vector<64x32xf32>
    %249 = arith.addf %248, %183 : vector<64x32xf32>
    %cst_100 = arith.constant dense<0.000000e+00> : vector<64xf32>
    %250 = vector.multi_reduction <add>, %249, %cst_100 [1] : vector<64x32xf32> to vector<64xf32>
    %251 = vector.shape_cast %250 : vector<64xf32> to vector<64x1xf32>
    %cst_101 = arith.constant 3.200000e+01 : f32
    %252 = vector.broadcast %cst_101 : f32 to vector<64x1xf32>
    %253 = arith.divf %251, %252 : vector<64x1xf32>
    %254 = vector.broadcast %253 : vector<64x1xf32> to vector<64x32xf32>
    %255 = arith.subf %249, %254 : vector<64x32xf32>
    %256 = arith.mulf %255, %255 : vector<64x32xf32>
    %cst_102 = arith.constant dense<0.000000e+00> : vector<64xf32>
    %257 = vector.multi_reduction <add>, %256, %cst_102 [1] : vector<64x32xf32> to vector<64xf32>
    %258 = vector.shape_cast %257 : vector<64xf32> to vector<64x1xf32>
    %cst_103 = arith.constant 3.200000e+01 : f32
    %259 = vector.broadcast %cst_103 : f32 to vector<64x1xf32>
    %260 = arith.divf %258, %259 : vector<64x1xf32>
    %261 = vector.broadcast %253 : vector<64x1xf32> to vector<64x32xf32>
    %262 = arith.subf %249, %261 : vector<64x32xf32>
    %cst_104 = arith.constant 9.99999996E-13 : f32
    %263 = vector.broadcast %cst_104 : f32 to vector<64x1xf32>
    %264 = arith.addf %260, %263 : vector<64x1xf32>
    %265 = math.rsqrt %264 : vector<64x1xf32>
    %266 = vector.broadcast %265 : vector<64x1xf32> to vector<64x32xf32>
    %267 = arith.mulf %262, %266 : vector<64x32xf32>
    %268 = vector.broadcast %196 : vector<1x32xf32> to vector<64x32xf32>
    %269 = arith.mulf %267, %268 : vector<64x32xf32>
    %270 = vector.broadcast %197 : vector<1x32xf32> to vector<64x32xf32>
    %271 = arith.addf %269, %270 : vector<64x32xf32>
    %cst_105 = arith.constant dense<0.000000e+00> : vector<64x64xf32>
    %272 = tpu.matmul %271, %188, %cst_105 {dimension_numbers = #tpu.dot_dimension_numbers<[1], [0], [0], [1], [0, 0, 1, 1], [], []>} : vector<64x32xf32>, vector<32x64xf32>, vector<64x64xf32> -> vector<64x64xf32>
    %273 = vector.broadcast %194 : vector<1x64xf32> to vector<64x64xf32>
    %274 = arith.addf %272, %273 : vector<64x64xf32>
    %275 = arith.mulf %274, %274 : vector<64x64xf32>
    %276 = arith.mulf %274, %275 : vector<64x64xf32>
    %cst_106 = arith.constant 4.471500e-02 : f32
    %277 = vector.broadcast %cst_106 : f32 to vector<64x64xf32>
    %278 = arith.mulf %277, %276 : vector<64x64xf32>
    %279 = arith.addf %274, %278 : vector<64x64xf32>
    %cst_107 = arith.constant 0.797884583 : f32
    %280 = vector.broadcast %cst_107 : f32 to vector<64x64xf32>
    %281 = arith.mulf %280, %279 : vector<64x64xf32>
    %282 = math.tanh %281 : vector<64x64xf32>
    %cst_108 = arith.constant 1.000000e+00 : f32
    %283 = vector.broadcast %cst_108 : f32 to vector<64x64xf32>
    %284 = arith.addf %283, %282 : vector<64x64xf32>
    %cst_109 = arith.constant 5.000000e-01 : f32
    %285 = vector.broadcast %cst_109 : f32 to vector<64x64xf32>
    %286 = arith.mulf %285, %284 : vector<64x64xf32>
    %287 = arith.mulf %274, %286 : vector<64x64xf32>
    %cst_110 = arith.constant dense<0.000000e+00> : vector<64x32xf32>
    %288 = tpu.matmul %287, %189, %cst_110 {dimension_numbers = #tpu.dot_dimension_numbers<[1], [0], [0], [1], [0, 0, 1, 1], [], []>} : vector<64x64xf32>, vector<64x32xf32>, vector<64x32xf32> -> vector<64x32xf32>
    %289 = vector.broadcast %195 : vector<1x32xf32> to vector<64x32xf32>
    %290 = arith.addf %288, %289 : vector<64x32xf32>
    %291 = arith.addf %290, %271 : vector<64x32xf32>
    %cst_111 = arith.constant dense<0.000000e+00> : vector<64xf32>
    %292 = vector.multi_reduction <add>, %291, %cst_111 [1] : vector<64x32xf32> to vector<64xf32>
    %293 = vector.shape_cast %292 : vector<64xf32> to vector<64x1xf32>
    %cst_112 = arith.constant 3.200000e+01 : f32
    %294 = vector.broadcast %cst_112 : f32 to vector<64x1xf32>
    %295 = arith.divf %293, %294 : vector<64x1xf32>
    %296 = vector.broadcast %295 : vector<64x1xf32> to vector<64x32xf32>
    %297 = arith.subf %291, %296 : vector<64x32xf32>
    %298 = arith.mulf %297, %297 : vector<64x32xf32>
    %cst_113 = arith.constant dense<0.000000e+00> : vector<64xf32>
    %299 = vector.multi_reduction <add>, %298, %cst_113 [1] : vector<64x32xf32> to vector<64xf32>
    %300 = vector.shape_cast %299 : vector<64xf32> to vector<64x1xf32>
    %cst_114 = arith.constant 3.200000e+01 : f32
    %301 = vector.broadcast %cst_114 : f32 to vector<64x1xf32>
    %302 = arith.divf %300, %301 : vector<64x1xf32>
    %303 = vector.broadcast %295 : vector<64x1xf32> to vector<64x32xf32>
    %304 = arith.subf %291, %303 : vector<64x32xf32>
    %cst_115 = arith.constant 9.99999996E-13 : f32
    %305 = vector.broadcast %cst_115 : f32 to vector<64x1xf32>
    %306 = arith.addf %302, %305 : vector<64x1xf32>
    %307 = math.rsqrt %306 : vector<64x1xf32>
    %308 = vector.broadcast %307 : vector<64x1xf32> to vector<64x32xf32>
    %309 = arith.mulf %304, %308 : vector<64x32xf32>
    %310 = vector.broadcast %198 : vector<1x32xf32> to vector<64x32xf32>
    %311 = arith.mulf %309, %310 : vector<64x32xf32>
    %312 = vector.broadcast %199 : vector<1x32xf32> to vector<64x32xf32>
    %313 = arith.addf %311, %312 : vector<64x32xf32>
    %314 = tpu.iota {dimensions = array<i32: 0>} : vector<8x64xi32>
    %c8_i32 = arith.constant 8 : i32
    %315 = vector.broadcast %c8_i32 : i32 to vector<8x64xi32>
    %316 = arith.muli %314, %315 : vector<8x64xi32>
    %317 = tpu.iota {dimensions = array<i32: 1>} : vector<8x64xi32>
    %318 = arith.cmpi eq, %316, %317 : vector<8x64xi32>
    %cst_116 = arith.constant 1.000000e+00 : f32
    %cst_117 = arith.constant 0.000000e+00 : f32
    %319 = vector.broadcast %cst_116 : f32 to vector<8x64xf32>
    %320 = vector.broadcast %cst_117 : f32 to vector<8x64xf32>
    %321 = arith.select %318, %319, %320 : vector<8x64xi1>, vector<8x64xf32>
    %cst_118 = arith.constant dense<0.000000e+00> : vector<8x32xf32>
    %322 = tpu.matmul %321, %313, %cst_118 {dimension_numbers = #tpu.dot_dimension_numbers<[1], [0], [0], [1], [0, 0, 1, 1], [], []>} : vector<8x64xf32>, vector<64x32xf32>, vector<8x32xf32> -> vector<8x32xf32>
    %c144 = arith.constant 144 : index
    %c0_119 = arith.constant 0 : index
    %323 = vector.load %arg2[%c144, %c0_119] : memref<216x32xf32, #tpu.memory_space<vmem>>, vector<32x32xf32>
    %cst_120 = arith.constant dense<0.000000e+00> : vector<8x32xf32>
    %324 = tpu.matmul %322, %323, %cst_120 {dimension_numbers = #tpu.dot_dimension_numbers<[1], [0], [0], [1], [0, 0, 1, 1], [], []>} : vector<8x32xf32>, vector<32x32xf32>, vector<8x32xf32> -> vector<8x32xf32>
    %c212 = arith.constant 212 : index
    %c0_121 = arith.constant 0 : index
    %325 = vector.load %arg2[%c212, %c0_121] : memref<216x32xf32, #tpu.memory_space<vmem>>, vector<1x32xf32>
    %326 = vector.broadcast %325 : vector<1x32xf32> to vector<8x32xf32>
    %327 = arith.addf %324, %326 : vector<8x32xf32>
    %328 = math.tanh %327 : vector<8x32xf32>
    %c176 = arith.constant 176 : index
    %c0_122 = arith.constant 0 : index
    %329 = vector.load %arg2[%c176, %c0_122] : memref<216x32xf32, #tpu.memory_space<vmem>>, vector<32x32xf32>
    %cst_123 = arith.constant dense<0.000000e+00> : vector<8x32xf32>
    %330 = tpu.matmul %328, %329, %cst_123 {dimension_numbers = #tpu.dot_dimension_numbers<[1], [0], [0], [1], [0, 0, 1, 1], [], []>} : vector<8x32xf32>, vector<32x32xf32>, vector<8x32xf32> -> vector<8x32xf32>
    %c213 = arith.constant 213 : index
    %c0_124 = arith.constant 0 : index
    %331 = vector.load %arg2[%c213, %c0_124] : memref<216x32xf32, #tpu.memory_space<vmem>>, vector<1x32xf32>
    %332 = vector.broadcast %331 : vector<1x32xf32> to vector<8x32xf32>
    %333 = arith.addf %330, %332 : vector<8x32xf32>
    %c214 = arith.constant 214 : index
    %c0_125 = arith.constant 0 : index
    %334 = vector.load %arg2[%c214, %c0_125] : memref<216x32xf32, #tpu.memory_space<vmem>>, vector<1x32xf32>
    %335 = vector.broadcast %334 : vector<1x32xf32> to vector<8x32xf32>
    %336 = arith.mulf %333, %335 : vector<8x32xf32>
    %cst_126 = arith.constant dense<0.000000e+00> : vector<8xf32>
    %337 = vector.multi_reduction <add>, %336, %cst_126 [1] : vector<8x32xf32> to vector<8xf32>
    %338 = vector.shape_cast %337 : vector<8xf32> to vector<8x1xf32>
    %c215 = arith.constant 215 : index
    %c0_127 = arith.constant 0 : index
    %339 = vector.load %arg2[%c215, %c0_127] : memref<216x32xf32, #tpu.memory_space<vmem>>, vector<1x1xf32>
    %340 = vector.broadcast %339 : vector<1x1xf32> to vector<8x1xf32>
    %341 = arith.addf %338, %340 : vector<8x1xf32>
    %c0_128 = arith.constant 0 : index
    %c0_129 = arith.constant 0 : index
    %342 = vector.load %arg3[%c0_128, %c0_129] : memref<8x1xf32, #tpu.memory_space<vmem>>, vector<8x1xf32>
    tpu.vector_store %arg3[%c0_128, %c0_129], %341 {strides = array<i32>} : memref<8x1xf32, #tpu.memory_space<vmem>>, vector<8x1xf32>,
    return
  }
}

</mosaic_0001>

<llo_original>
// kernel: bert_for_race_forward.1
$region0: #{bert_for_race_forward.1}
  #allocation0 [shape = 'u32[]', space=smem, size = 0x4, offset = 0x4, fixed_abs, tag = 'smem constant byte address 0x4 - core index']
  #allocation1 [shape = 'u32[144,128]{1,0:T(1,128)}', space=vmem, size = 0x12000, scoped, tag = 'internal scratch']
  %s0 = inlined_call_operand.vmem [shape: s32[64,1], index: 0, kind: input, shape index: {}]
  %s1 = inlined_call_operand.hbm [shape: f32[480,64], index: 1, kind: input, shape index: {}]
  %s2 = inlined_call_operand.hbm [shape: f32[216,32], index: 2, kind: input, shape index: {}]
  %s3 = inlined_call_operand.vmem [shape: f32[8,1], index: 3, kind: output, shape index: {}]
  %s4 = sld [smem:[#allocation0]]
  $region30: #{bert_for_race_forward.1} parent=0
    _
  %s6 = ssub.s32 1, %s4
  %s7 = scalar_select 0, %s6, %s4
  $region1: #{bert_for_race_forward.1} parent=0
    #allocation2 [shape = 'u8[245760]{0}', space=vmem, size = 0x3c000, scoped, tag = 'input window, operand 1, single buffered']
    #allocation3 [shape = 's32[1]{0}', space=sflag, size = 0x4, scoped, tag = 'scoped memory for bert_for_race_forward.1']
    #allocation4 [shape = 'u8[110592]{0}', space=vmem, size = 0x1b000, scoped, tag = 'input window, operand 2, single buffered']
    #allocation5 [shape = 's32[1]{0}', space=sflag, size = 0x4, scoped, tag = 'scoped memory for bert_for_race_forward.1']
    %8 = vsyncpa [#allocation3], 0
    %9 = vsyncpa [#allocation5], 0
    // Predicated region
    $region2: #{bert_for_race_forward.1} parent=1 // pred_check
      _
    $region3: #{bert_for_race_forward.1} parent=1 // pred_check_branch
      %11 = sbr.rel (0) target = $region5
    $region4: #{bert_for_race_forward.1} parent=1 // pred_region
      _
    $region5: #{bert_for_race_forward.1} parent=1 // pred_fallthru
      _
    // Predicated region
    $region6: #{bert_for_race_forward.1} parent=1 // pred_check
      _
    $region7: #{bert_for_race_forward.1} parent=1 // pred_check_branch
      %13 = sbr.rel (0) target = $region9
    $region8: #{bert_for_race_forward.1} parent=1 // pred_region
      %s15 = ssub.s32 7680, 7680
      %16 = vsyncadd [#allocation3], %s15
      %s17 = sshll.u32 [#allocation2], 4
      %s18 = int_to_ptr.vmem [resolvable:$true] %s17
      %23 = dma.hbm_to_vmem [thread:$0]  %s1, 7680, %s18, [#allocation3], 128, 128, 8
    $region9: #{bert_for_race_forward.1} parent=1 // pred_fallthru
      _
    // Predicated region
    $region10: #{bert_for_race_forward.1} parent=1 // pred_check
      _
    $region11: #{bert_for_race_forward.1} parent=1 // pred_check_branch
      %25 = sbr.rel (0) target = $region13
    $region12: #{bert_for_race_forward.1} parent=1 // pred_region
      %s27 = ssub.s32 3456, 3456
      %28 = vsyncadd [#allocation5], %s27
      %s29 = sshll.u32 [#allocation4], 4
      %s30 = int_to_ptr.vmem [resolvable:$true] %s29
      %35 = dma.hbm_to_vmem [thread:$0]  %s2, 3456, %s30, [#allocation5], 128, 128, 8
    $region13: #{bert_for_race_forward.1} parent=1 // pred_fallthru
      _
    // Predicated region
    $region14: #{bert_for_race_forward.1} parent=1 // pred_check
      _
    $region15: #{bert_for_race_forward.1} parent=1 // pred_check_branch
      %37 = sbr.rel (0) target = $region17
    $region16: #{bert_for_race_forward.1} parent=1 // pred_region
      %38 = dma.done [#allocation3], 7680
    $region17: #{bert_for_race_forward.1} parent=1 // pred_fallthru
      _
    // Predicated region
    $region18: #{bert_for_race_forward.1} parent=1 // pred_check
      _
    $region19: #{bert_for_race_forward.1} parent=1 // pred_check_branch
      %40 = sbr.rel (0) target = $region21
    $region20: #{bert_for_race_forward.1} parent=1 // pred_region
      %41 = dma.done [#allocation5], 3456
    $region21: #{bert_for_race_forward.1} parent=1 // pred_fallthru
      _
    %v42 = vld [vmem:[%s0] sm:$0xff]
    %v43 = vld [vmem:[%s0 + $0x8] sm:$0xff]
    %v44 = vld [vmem:[%s0 + $0x10] sm:$0xff]
    %v45 = vld [vmem:[%s0 + $0x18] sm:$0xff]
    %v46 = vld [vmem:[%s0 + $0x20] sm:$0xff]
    %v47 = vld [vmem:[%s0 + $0x28] sm:$0xff]
    %v48 = vld [vmem:[%s0 + $0x30] sm:$0xff]
    %v49 = vld [vmem:[%s0 + $0x38] sm:$0xff]
    %v50 = vlaneseq
    %v51 = vand.u32 %v50, 127
    %52 = vset.pattern.permute.xlu0 0
    %53 = vperm.xlu0 %52, %v42
    %v54 = vpop.permute.xlu0 %53
    %55 = vset.pattern.permute.xlu0 0
    %56 = vperm.xlu0 %55, %v43
    %v57 = vpop.permute.xlu0 %56
    %58 = vset.pattern.permute.xlu0 0
    %59 = vperm.xlu0 %58, %v44
    %v60 = vpop.permute.xlu0 %59
    %61 = vset.pattern.permute.xlu0 0
    %62 = vperm.xlu0 %61, %v45
    %v63 = vpop.permute.xlu0 %62
    %64 = vset.pattern.permute.xlu0 0
    %65 = vperm.xlu0 %64, %v46
    %v66 = vpop.permute.xlu0 %65
    %67 = vset.pattern.permute.xlu0 0
    %68 = vperm.xlu0 %67, %v47
    %v69 = vpop.permute.xlu0 %68
    %70 = vset.pattern.permute.xlu0 0
    %71 = vperm.xlu0 %70, %v48
    %v72 = vpop.permute.xlu0 %71
    %73 = vset.pattern.permute.xlu0 0
    %74 = vperm.xlu0 %73, %v49
    %v75 = vpop.permute.xlu0 %74
    %vm76 = vcmp.eq.s32.totalorder %v54, %v51
    %vm77 = vcmp.eq.s32.totalorder %v57, %v51
    %vm78 = vcmp.eq.s32.totalorder %v60, %v51
    %vm79 = vcmp.eq.s32.totalorder %v63, %v51
    %vm80 = vcmp.eq.s32.totalorder %v66, %v51
    %vm81 = vcmp.eq.s32.totalorder %v69, %v51
    %vm82 = vcmp.eq.s32.totalorder %v72, %v51
    %vm83 = vcmp.eq.s32.totalorder %v75, %v51
    %v84 = vsel %vm76, 1.0, 0.0
    %v85 = vsel %vm77, 1.0, 0.0
    %v86 = vsel %vm78, 1.0, 0.0
    %v87 = vsel %vm79, 1.0, 0.0
    %v88 = vsel %vm80, 1.0, 0.0
    %v89 = vsel %vm81, 1.0, 0.0
    %v90 = vsel %vm82, 1.0, 0.0
    %v91 = vsel %vm83, 1.0, 0.0
    %v92 = vld [vmem:[#allocation4] sm:$0xff]
    %v93 = vld [vmem:[#allocation4 + $0x8] sm:$0xff]
    %v94 = vld [vmem:[#allocation4 + $0x10] sm:$0xff]
    %v95 = vld [vmem:[#allocation4 + $0x18] sm:$0xff]
    %v96 = vld [vmem:[#allocation4 + $0x20] sm:$0xff]
    %v97 = vld [vmem:[#allocation4 + $0x28] sm:$0xff]
    %v98 = vld [vmem:[#allocation4 + $0x30] sm:$0xff]
    %v99 = vld [vmem:[#allocation4 + $0x38] sm:$0xff]
    %v100 = vld [vmem:[#allocation4 + $0x40] sm:$0xff]
    %v101 = vld [vmem:[#allocation4 + $0x48] sm:$0xff]
    %v102 = vld [vmem:[#allocation4 + $0x50] sm:$0xff]
    %v103 = vld [vmem:[#allocation4 + $0x58] sm:$0xff]
    %v104 = vld [vmem:[#allocation4 + $0x60] sm:$0xff]
    %v105 = vld [vmem:[#allocation4 + $0x68] sm:$0xff]
    %v106 = vld [vmem:[#allocation4 + $0x70] sm:$0xff]
    %v107 = vld [vmem:[#allocation4 + $0x78] sm:$0xff]
    %v108 = vld [vmem:[#allocation4 + $0x80] sm:$0xff]
    %v109 = vld [vmem:[#allocation4 + $0xd0] sm:$0x1]
    %v110 = vlaneseq
    %v111 = vshrl.u32 %v110, 7
    %v112 = vsub.s32 0, %v111
    %v113 = vrot.slane %v109, %v112
    %v114 = vadd.f32 %v108, %v113
    %v115 = vlaneseq
    %v116 = vshrl.u32 %v115, 7
    %v117 = vadd.s32 %v116, 8
    %v118 = vadd.s32 %v116, 16
    %v119 = vadd.s32 %v116, 24
    %v120 = vadd.s32 %v116, 32
    %v121 = vadd.s32 %v116, 40
    %v122 = vadd.s32 %v116, 48
    %v123 = vadd.s32 %v116, 56
    %v124 = vand.u32 %v116, 7
    %v125 = vand.u32 %v117, 7
    %v126 = vand.u32 %v118, 7
    %v127 = vand.u32 %v119, 7
    %v128 = vand.u32 %v120, 7
    %v129 = vand.u32 %v121, 7
    %v130 = vand.u32 %v122, 7
    %v131 = vand.u32 %v123, 7
    %vm132 = vcmp.eq.s32.totalorder %v124, %v51
    %vm133 = vcmp.eq.s32.totalorder %v125, %v51
    %vm134 = vcmp.eq.s32.totalorder %v126, %v51
    %vm135 = vcmp.eq.s32.totalorder %v127, %v51
    %vm136 = vcmp.eq.s32.totalorder %v128, %v51
    %vm137 = vcmp.eq.s32.totalorder %v129, %v51
    %vm138 = vcmp.eq.s32.totalorder %v130, %v51
    %vm139 = vcmp.eq.s32.totalorder %v131, %v51
    %v140 = vsel %vm132, 1.0, 0.0
    %v141 = vsel %vm133, 1.0, 0.0
    %v142 = vsel %vm134, 1.0, 0.0
    %v143 = vsel %vm135, 1.0, 0.0
    %v144 = vsel %vm136, 1.0, 0.0
    %v145 = vsel %vm137, 1.0, 0.0
    %v146 = vsel %vm138, 1.0, 0.0
    %v147 = vsel %vm139, 1.0, 0.0
    %vm148 = vcmask 64512
    %v150 = vsel %vm148, %v140, 0
    %v153 = vsel %vm148, %v141, 0
    %v156 = vsel %vm148, %v142, 0
    %v159 = vsel %vm148, %v143, 0
    %v162 = vsel %vm148, %v144, 0
    %v165 = vsel %vm148, %v145, 0
    %v168 = vsel %vm148, %v146, 0
    %v171 = vsel %vm148, %v147, 0
    %173 = vmatprep.subr.mxu0 0.0
    %174 = vmatpush1.msra.mxu0 %v114
    %175 = vmatprep.subr.mxu0 0.0
    %176 = vmatpush1.msra.mxu0 0.0
    %177 = vmatprep.subr.mxu0 0.0
    %178 = vmatpush1.msra.mxu0 0.0
    %179 = vmatprep.subr.mxu0 0.0
    %180 = vmatpush1.msra.mxu0 0.0
    %181 = vmatprep.subr.mxu0 0.0
    %182 = vmatpush1.msra.mxu0 0.0
    %183 = vmatprep.subr.mxu0 0.0
    %184 = vmatpush1.msra.mxu0 0.0
    %185 = vmatprep.subr.mxu0 0.0
    %186 = vmatpush1.msra.mxu0 0.0
    %187 = vmatprep.subr.mxu0 0.0
    %188 = vmatpush1.msra.mxu0 0.0
    %189 = vmatprep.subr.mxu0 0.0
    %190 = vmatpush1.msra.mxu0 0.0
    %191 = vmatprep.subr.mxu0 0.0
    %192 = vmatpush1.msra.mxu0 0.0
    %193 = vmatprep.subr.mxu0 0.0
    %194 = vmatpush1.msra.mxu0 0.0
    %195 = vmatprep.subr.mxu0 0.0
    %196 = vmatpush1.msra.mxu0 0.0
    %197 = vmatprep.subr.mxu0 0.0
    %198 = vmatpush1.msra.mxu0 0.0
    %199 = vmatprep.subr.mxu0 0.0
    %200 = vmatpush1.msra.mxu0 0.0
    %201 = vmatprep.subr.mxu0 0.0
    %202 = vmatpush1.msra.mxu0 0.0
    %203 = vmatprep.subr.mxu0 0.0
    %204 = vmatpush1.msra.mxu0 0.0
    %205 = vmatprep.subr.mxu0 0.0
    %206 = vmatpush1.msra.mxu0 0.0
    %207 = vmatprep.subr.mxu0 0.0
    %208 = vmatpush1.msra.mxu0 0.0
    %209 = vmatprep.subr.mxu0 0.0
    %210 = vmatpush1.msra.mxu0 0.0
    %211 = vmatprep.subr.mxu0 0.0
    %212 = vmatpush1.msra.mxu0 0.0
    %213 = vmatprep.subr.mxu0 0.0
    %214 = vmatpush1.msra.mxu0 0.0
    %215 = vmatprep.subr.mxu0 0.0
    %216 = vmatpush1.msra.mxu0 0.0
    %217 = vmatprep.subr.mxu0 0.0
    %218 = vmatpush1.msra.mxu0 0.0
    %219 = vmatprep.subr.mxu0 0.0
    %220 = vmatpush1.msra.mxu0 0.0
    %221 = vmatprep.subr.mxu0 0.0
    %222 = vmatpush1.msra.mxu0 0.0
    %223 = vmatprep.subr.mxu0 0.0
    %224 = vmatpush1.msra.mxu0 0.0
    %225 = vmatprep.subr.mxu0 0.0
    %226 = vmatpush1.msra.mxu0 0.0
    %227 = vmatprep.subr.mxu0 0.0
    %228 = vmatpush1.msra.mxu0 0.0
    %229 = vmatprep.subr.mxu0 0.0
    %230 = vmatpush1.msra.mxu0 0.0
    %231 = vmatprep.subr.mxu0 0.0
    %232 = vmatpush1.msra.mxu0 0.0
    %233 = vmatprep.subr.mxu0 0.0
    %234 = vmatpush1.msra.mxu0 0.0
    %235 = vmatprep.subr.mxu0 0.0
    %236 = vmatpush1.msra.mxu0 0.0
    %237 = vmatprep.mubr.f32.mxu0 0.0
    %238 = vmatmul.mubr.f32.gmra.mrb[0].mxu0 %v150
    %v239 = vpop.f32.mrb[0].mxu0
    %v240 = vadd.f32 0.0, %v239
    %v241 = vpop.f32.mrb[0].mxu0
    %242 = vmatprep.mubr.f32.mxu0 0.0
    %243 = vmatmul.mubr.f32.gmra.mrb[0].mxu0 %v153
    %v244 = vpop.f32.mrb[0].mxu0
    %v245 = vadd.f32 0.0, %v244
    %v246 = vpop.f32.mrb[0].mxu0
    %247 = vmatprep.mubr.f32.mxu0 0.0
    %248 = vmatmul.mubr.f32.gmra.mrb[0].mxu0 %v156
    %v249 = vpop.f32.mrb[0].mxu0
    %v250 = vadd.f32 0.0, %v249
    %v251 = vpop.f32.mrb[0].mxu0
    %252 = vmatprep.mubr.f32.mxu0 0.0
    %253 = vmatmul.mubr.f32.gmra.mrb[0].mxu0 %v159
    %v254 = vpop.f32.mrb[0].mxu0
    %v255 = vadd.f32 0.0, %v254
    %v256 = vpop.f32.mrb[0].mxu0
    %257 = vmatprep.mubr.f32.mxu0 0.0
    %258 = vmatmul.mubr.f32.gmra.mrb[0].mxu0 %v162
    %v259 = vpop.f32.mrb[0].mxu0
    %v260 = vadd.f32 0.0, %v259
    %v261 = vpop.f32.mrb[0].mxu0
    %262 = vmatprep.mubr.f32.mxu0 0.0
    %263 = vmatmul.mubr.f32.gmra.mrb[0].mxu0 %v165
    %v264 = vpop.f32.mrb[0].mxu0
    %v265 = vadd.f32 0.0, %v264
    %v266 = vpop.f32.mrb[0].mxu0
    %267 = vmatprep.mubr.f32.mxu0 0.0
    %268 = vmatmul.mubr.f32.gmra.mrb[0].mxu0 %v168
    %v269 = vpop.f32.mrb[0].mxu0
    %v270 = vadd.f32 0.0, %v269
    %v271 = vpop.f32.mrb[0].mxu0
    %272 = vmatprep.mubr.f32.mxu0 0.0
    %273 = vmatmul.mubr.f32.gmra.mrb[0].mxu0 %v171
    %v274 = vpop.f32.mrb[0].mxu0
    %v275 = vadd.f32 0.0, %v274
    %v276 = vpop.f32.mrb[0].mxu0
    %277 = vdwg.mxu0
    %278 = vmatprep.subr.mxu0 0.0
    %279 = vmatpush1.msra.mxu0 %v92
    %280 = vmatprep.subr.mxu0 0.0
    %281 = vmatpush1.msra.mxu0 %v93
    %282 = vmatprep.subr.mxu0 0.0
    %283 = vmatpush1.msra.mxu0 %v94
    %284 = vmatprep.subr.mxu0 0.0
    %285 = vmatpush1.msra.mxu0 %v95
    %286 = vmatprep.subr.mxu0 0.0
    %287 = vmatpush1.msra.mxu0 %v96
    %288 = vmatprep.subr.mxu0 0.0
    %289 = vmatpush1.msra.mxu0 %v97
    %290 = vmatprep.subr.mxu0 0.0
    %291 = vmatpush1.msra.mxu0 %v98
    %292 = vmatprep.subr.mxu0 0.0
    %293 = vmatpush1.msra.mxu0 %v99
    %294 = vmatprep.subr.mxu0 0.0
    %295 = vmatpush1.msra.mxu0 %v100
    %296 = vmatprep.subr.mxu0 0.0
    %297 = vmatpush1.msra.mxu0 %v101
    %298 = vmatprep.subr.mxu0 0.0
    %299 = vmatpush1.msra.mxu0 %v102
    %300 = vmatprep.subr.mxu0 0.0
    %301 = vmatpush1.msra.mxu0 %v103
    %302 = vmatprep.subr.mxu0 0.0
    %303 = vmatpush1.msra.mxu0 %v104
    %304 = vmatprep.subr.mxu0 0.0
    %305 = vmatpush1.msra.mxu0 %v105
    %306 = vmatprep.subr.mxu0 0.0
    %307 = vmatpush1.msra.mxu0 %v106
    %308 = vmatprep.subr.mxu0 0.0
    %309 = vmatpush1.msra.mxu0 %v107
    %310 = vmatprep.subr.mxu0 0.0
    %311 = vmatpush1.msra.mxu0 0.0
    %312 = vmatprep.subr.mxu0 0.0
    %313 = vmatpush1.msra.mxu0 0.0
    %314 = vmatprep.subr.mxu0 0.0
    %315 = vmatpush1.msra.mxu0 0.0
    %316 = vmatprep.subr.mxu0 0.0
    %317 = vmatpush1.msra.mxu0 0.0
    %318 = vmatprep.subr.mxu0 0.0
    %319 = vmatpush1.msra.mxu0 0.0
    %320 = vmatprep.subr.mxu0 0.0
    %321 = vmatpush1.msra.mxu0 0.0
    %322 = vmatprep.subr.mxu0 0.0
    %323 = vmatpush1.msra.mxu0 0.0
    %324 = vmatprep.subr.mxu0 0.0
    %325 = vmatpush1.msra.mxu0 0.0
    %326 = vmatprep.subr.mxu0 0.0
    %327 = vmatpush1.msra.mxu0 0.0
    %328 = vmatprep.subr.mxu0 0.0
    %329 = vmatpush1.msra.mxu0 0.0
    %330 = vmatprep.subr.mxu0 0.0
    %331 = vmatpush1.msra.mxu0 0.0
    %332 = vmatprep.subr.mxu0 0.0
    %333 = vmatpush1.msra.mxu0 0.0
    %334 = vmatprep.subr.mxu0 0.0
    %335 = vmatpush1.msra.mxu0 0.0
    %336 = vmatprep.subr.mxu0 0.0
    %337 = vmatpush1.msra.mxu0 0.0
    %338 = vmatprep.subr.mxu0 0.0
    %339 = vmatpush1.msra.mxu0 0.0
    %340 = vmatprep.subr.mxu0 0.0
    %341 = vmatpush1.msra.mxu0 0.0
    %342 = vmatprep.mubr.f32.mxu0 0.0
    %343 = vmatmul.mubr.f32.gmra.mrb[0].mxu0 %v84
    %v344 = vpop.f32.mrb[0].mxu0
    %v345 = vadd.f32 %v240, %v344
    %v346 = vpop.f32.mrb[0].mxu0
    %347 = vmatprep.mubr.f32.mxu0 0.0
    %348 = vmatmul.mubr.f32.gmra.mrb[0].mxu0 %v85
    %v349 = vpop.f32.mrb[0].mxu0
    %v350 = vadd.f32 %v245, %v349
    %v351 = vpop.f32.mrb[0].mxu0
    %352 = vmatprep.mubr.f32.mxu0 0.0
    %353 = vmatmul.mubr.f32.gmra.mrb[0].mxu0 %v86
    %v354 = vpop.f32.mrb[0].mxu0
    %v355 = vadd.f32 %v250, %v354
    %v356 = vpop.f32.mrb[0].mxu0
    %357 = vmatprep.mubr.f32.mxu0 0.0
    %358 = vmatmul.mubr.f32.gmra.mrb[0].mxu0 %v87
    %v359 = vpop.f32.mrb[0].mxu0
    %v360 = vadd.f32 %v255, %v359
    %v361 = vpop.f32.mrb[0].mxu0
    %362 = vmatprep.mubr.f32.mxu0 0.0
    %363 = vmatmul.mubr.f32.gmra.mrb[0].mxu0 %v88
    %v364 = vpop.f32.mrb[0].mxu0
    %v365 = vadd.f32 %v260, %v364
    %v366 = vpop.f32.mrb[0].mxu0
    %367 = vmatprep.mubr.f32.mxu0 0.0
    %368 = vmatmul.mubr.f32.gmra.mrb[0].mxu0 %v89
    %v369 = vpop.f32.mrb[0].mxu0
    %v370 = vadd.f32 %v265, %v369
    %v371 = vpop.f32.mrb[0].mxu0
    %372 = vmatprep.mubr.f32.mxu0 0.0
    %373 = vmatmul.mubr.f32.gmra.mrb[0].mxu0 %v90
    %v374 = vpop.f32.mrb[0].mxu0
    %v375 = vadd.f32 %v270, %v374
    %v376 = vpop.f32.mrb[0].mxu0
    %377 = vmatprep.mubr.f32.mxu0 0.0
    %378 = vmatmul.mubr.f32.gmra.mrb[0].mxu0 %v91
    %v379 = vpop.f32.mrb[0].mxu0
    %v380 = vadd.f32 %v275, %v379
    %v381 = vpop.f32.mrb[0].mxu0
    %382 = vdwg.mxu0
    %v383 = vld [vmem:[#allocation4 + $0xd2] sm:$0x1]
    %v384 = vld [vmem:[#allocation4 + $0xd3] sm:$0x1]
    %vm385 = vcmask 261120
    %v386 = vsel %vm385, %v345, 0.0
    %387 = vadd.xlane.f32.xlu0 %v386
    %v388 = vpop.xlane.xlu0 %387
    %v389 = vsel %vm385, %v350, 0.0
    %390 = vadd.xlane.f32.xlu0 %v389
    %v391 = vpop.xlane.xlu0 %390
    %v392 = vsel %vm385, %v355, 0.0
    %393 = vadd.xlane.f32.xlu0 %v392
    %v394 = vpop.xlane.xlu0 %393
    %v395 = vsel %vm385, %v360, 0.0
    %396 = vadd.xlane.f32.xlu0 %v395
    %v397 = vpop.xlane.xlu0 %396
    %v398 = vsel %vm385, %v365, 0.0
    %399 = vadd.xlane.f32.xlu0 %v398
    %v400 = vpop.xlane.xlu0 %399
    %v401 = vsel %vm385, %v370, 0.0
    %402 = vadd.xlane.f32.xlu0 %v401
    %v403 = vpop.xlane.xlu0 %402
    %v404 = vsel %vm385, %v375, 0.0
    %405 = vadd.xlane.f32.xlu0 %v404
    %v406 = vpop.xlane.xlu0 %405
    %v407 = vsel %vm385, %v380, 0.0
    %408 = vadd.xlane.f32.xlu0 %v407
    %v409 = vpop.xlane.xlu0 %408
    %v410 = vrcp.pop 32.0
    %v411 = vmul.f32 %v388, %v410
    %v412 = vmul.f32 %v391, %v410
    %v413 = vmul.f32 %v394, %v410
    %v414 = vmul.f32 %v397, %v410
    %v415 = vmul.f32 %v400, %v410
    %v416 = vmul.f32 %v403, %v410
    %v417 = vmul.f32 %v406, %v410
    %v418 = vmul.f32 %v409, %v410
    %v419 = vsub.f32 %v345, %v411
    %v420 = vsub.f32 %v350, %v412
    %v421 = vsub.f32 %v355, %v413
    %v422 = vsub.f32 %v360, %v414
    %v423 = vsub.f32 %v365, %v415
    %v424 = vsub.f32 %v370, %v416
    %v425 = vsub.f32 %v375, %v417
    %v426 = vsub.f32 %v380, %v418
    %v427 = vmul.f32 %v419, %v419
    %v428 = vmul.f32 %v420, %v420
    %v429 = vmul.f32 %v421, %v421
    %v430 = vmul.f32 %v422, %v422
    %v431 = vmul.f32 %v423, %v423
    %v432 = vmul.f32 %v424, %v424
    %v433 = vmul.f32 %v425, %v425
    %v434 = vmul.f32 %v426, %v426
    %v435 = vsel %vm385, %v427, 0.0
    %436 = vadd.xlane.f32.xlu0 %v435
    %v437 = vpop.xlane.xlu0 %436
    %v438 = vsel %vm385, %v428, 0.0
    %439 = vadd.xlane.f32.xlu0 %v438
    %v440 = vpop.xlane.xlu0 %439
    %v441 = vsel %vm385, %v429, 0.0
    %442 = vadd.xlane.f32.xlu0 %v441
    %v443 = vpop.xlane.xlu0 %442
    %v444 = vsel %vm385, %v430, 0.0
    %445 = vadd.xlane.f32.xlu0 %v444
    %v446 = vpop.xlane.xlu0 %445
    %v447 = vsel %vm385, %v431, 0.0
    %448 = vadd.xlane.f32.xlu0 %v447
    %v449 = vpop.xlane.xlu0 %448
    %v450 = vsel %vm385, %v432, 0.0
    %451 = vadd.xlane.f32.xlu0 %v450
    %v452 = vpop.xlane.xlu0 %451
    %v453 = vsel %vm385, %v433, 0.0
    %454 = vadd.xlane.f32.xlu0 %v453
    %v455 = vpop.xlane.xlu0 %454
    %v456 = vsel %vm385, %v434, 0.0
    %457 = vadd.xlane.f32.xlu0 %v456
    %v458 = vpop.xlane.xlu0 %457
    %v459 = vmul.f32 %v437, %v410
    %v460 = vmul.f32 %v440, %v410
    %v461 = vmul.f32 %v443, %v410
    %v462 = vmul.f32 %v446, %v410
    %v463 = vmul.f32 %v449, %v410
    %v464 = vmul.f32 %v452, %v410
    %v465 = vmul.f32 %v455, %v410
    %v466 = vmul.f32 %v458, %v410
    %v467 = vadd.f32 %v459, 1e-12
    %v468 = vadd.f32 %v460, 1e-12
    %v469 = vadd.f32 %v461, 1e-12
    %v470 = vadd.f32 %v462, 1e-12
    %v471 = vadd.f32 %v463, 1e-12
    %v472 = vadd.f32 %v464, 1e-12
    %v473 = vadd.f32 %v465, 1e-12
    %v474 = vadd.f32 %v466, 1e-12
    %v475 = vrsqrt.pop %v467
    %v476 = vrsqrt.pop %v468
    %v477 = vrsqrt.pop %v469
    %v478 = vrsqrt.pop %v470
    %v479 = vrsqrt.pop %v471
    %v480 = vrsqrt.pop %v472
    %v481 = vrsqrt.pop %v473
    %v482 = vrsqrt.pop %v474
    %v483 = vmul.f32 %v419, %v475
    %v484 = vmul.f32 %v420, %v476
    %v485 = vmul.f32 %v421, %v477
    %v486 = vmul.f32 %v422, %v478
    %v487 = vmul.f32 %v423, %v479
    %v488 = vmul.f32 %v424, %v480
    %v489 = vmul.f32 %v425, %v481
    %v490 = vmul.f32 %v426, %v482
    %v491 = vlaneseq
    %v492 = vshrl.u32 %v491, 7
    %v493 = vsub.s32 0, %v492
    %v494 = vrot.slane %v383, %v493
    %v495 = vmul.f32 %v483, %v494
    %v496 = vmul.f32 %v484, %v494
    %v497 = vmul.f32 %v485, %v494
    %v498 = vmul.f32 %v486, %v494
    %v499 = vmul.f32 %v487, %v494
    %v500 = vmul.f32 %v488, %v494
    %v501 = vmul.f32 %v489, %v494
    %v502 = vmul.f32 %v490, %v494
    %v503 = vlaneseq
    %v504 = vshrl.u32 %v503, 7
    %v505 = vsub.s32 0, %v504
    %v506 = vrot.slane %v384, %v505
    %v507 = vadd.f32 %v495, %v506
    %v508 = vadd.f32 %v496, %v506
    %v509 = vadd.f32 %v497, %v506
    %v510 = vadd.f32 %v498, %v506
    %v511 = vadd.f32 %v499, %v506
    %v512 = vadd.f32 %v500, %v506
    %v513 = vadd.f32 %v501, %v506
    %v514 = vadd.f32 %v502, %v506
    %v515 = vshra.s32 %v116, 3
    %v516 = vshra.s32 %v117, 3
    %v517 = vshra.s32 %v118, 3
    %v518 = vshra.s32 %v119, 3
    %v519 = vshra.s32 %v120, 3
    %v520 = vshra.s32 %v121, 3
    %v521 = vshra.s32 %v122, 3
    %v522 = vshra.s32 %v123, 3
    %v523 = vshra.s32 %v51, 3
    %vm524 = vcmp.eq.s32.totalorder %v515, %v523
    %vm525 = vcmp.eq.s32.totalorder %v516, %v523
    %vm526 = vcmp.eq.s32.totalorder %v517, %v523
    %vm527 = vcmp.eq.s32.totalorder %v518, %v523
    %vm528 = vcmp.eq.s32.totalorder %v519, %v523
    %vm529 = vcmp.eq.s32.totalorder %v520, %v523
    %vm530 = vcmp.eq.s32.totalorder %v521, %v523
    %vm531 = vcmp.eq.s32.totalorder %v522, %v523
    %v532 = vld [vmem:[#allocation2] sm:$0xff]
    %v533 = vld [vmem:[#allocation2 + $0x8] sm:$0xff]
    %v534 = vld [vmem:[#allocation2 + $0x10] sm:$0xff]
    %v535 = vld [vmem:[#allocation2 + $0x18] sm:$0xff]
    %v536 = vld [vmem:[#allocation2 + $0x20] sm:$0xff]
    %v537 = vld [vmem:[#allocation2 + $0x28] sm:$0xff]
    %v538 = vld [vmem:[#allocation2 + $0x30] sm:$0xff]
    %v539 = vld [vmem:[#allocation2 + $0x38] sm:$0xff]
    %v540 = vld [vmem:[#allocation2 + $0x40] sm:$0xff]
    %v541 = vld [vmem:[#allocation2 + $0x48] sm:$0xff]
    %v542 = vld [vmem:[#allocation2 + $0x50] sm:$0xff]
    %v543 = vld [vmem:[#allocation2 + $0x58] sm:$0xff]
    %v544 = vld [vmem:[#allocation2 + $0x60] sm:$0xff]
    %v545 = vld [vmem:[#allocation2 + $0x68] sm:$0xff]
    %v546 = vld [vmem:[#allocation2 + $0x70] sm:$0xff]
    %v547 = vld [vmem:[#allocation2 + $0x78] sm:$0xff]
    %v548 = vld [vmem:[#allocation2 + $0x80] sm:$0xff]
    %v549 = vld [vmem:[#allocation2 + $0x88] sm:$0xff]
    %v550 = vld [vmem:[#allocation2 + $0x90] sm:$0xff]
    %v551 = vld [vmem:[#allocation2 + $0x98] sm:$0xff]
    %v552 = vld [vmem:[#allocation2 + $0xa0] sm:$0xff]
    %v553 = vld [vmem:[#allocation2 + $0xa8] sm:$0xff]
    %v554 = vld [vmem:[#allocation2 + $0xb0] sm:$0xff]
    %v555 = vld [vmem:[#allocation2 + $0xb8] sm:$0xff]
    %v556 = vld [vmem:[#allocation2 + $0xc0] sm:$0xff]
    %v557 = vld [vmem:[#allocation2 + $0xc8] sm:$0xff]
    %v558 = vld [vmem:[#allocation2 + $0xd0] sm:$0xff]
    %v559 = vld [vmem:[#allocation2 + $0xd8] sm:$0xff]
    %v560 = vld [vmem:[#allocation2 + $0xe0] sm:$0x1]
    %v561 = vld [vmem:[#allocation2 + $0xe1] sm:$0x1]
    %v562 = vld [vmem:[#allocation2 + $0xe2] sm:$0x1]
    %v563 = vld [vmem:[#allocation2 + $0xe3] sm:$0x1]
    %v564 = vld [vmem:[#allocation2 + $0xe4] sm:$0x1]
    %v565 = vld [vmem:[#allocation2 + $0xe5] sm:$0x1]
    %v566 = vld [vmem:[#allocation2 + $0xe6] sm:$0x1]
    %v567 = vld [vmem:[#allocation2 + $0xe7] sm:$0x1]
    %v568 = vld [vmem:[#allocation2 + $0xe8] sm:$0x1]
    %v569 = vld [vmem:[#allocation2 + $0xe9] sm:$0x1]
    %v570 = vlaneseq
    %v571 = vshrl.u32 %v570, 7
    %v572 = vsub.s32 0, %v571
    %v573 = vrot.slane %v560, %v572
    %v575 = vsel %vm385, %v507, 0
    %v578 = vsel %vm385, %v508, 0
    %v581 = vsel %vm385, %v509, 0
    %v584 = vsel %vm385, %v510, 0
    %v587 = vsel %vm385, %v511, 0
    %v590 = vsel %vm385, %v512, 0
    %v593 = vsel %vm385, %v513, 0
    %v596 = vsel %vm385, %v514, 0
    %598 = vmatprep.subr.mxu0 0.0
    %599 = vmatpush1.msra.mxu0 %v532
    %600 = vmatprep.subr.mxu0 0.0
    %601 = vmatpush1.msra.mxu0 %v533
    %602 = vmatprep.subr.mxu0 0.0
    %603 = vmatpush1.msra.mxu0 %v534
    %604 = vmatprep.subr.mxu0 0.0
    %605 = vmatpush1.msra.mxu0 %v535
    %606 = vmatprep.subr.mxu0 0.0
    %607 = vmatpush1.msra.mxu0 0.0
    %608 = vmatprep.subr.mxu0 0.0
    %609 = vmatpush1.msra.mxu0 0.0
    %610 = vmatprep.subr.mxu0 0.0
    %611 = vmatpush1.msra.mxu0 0.0
    %612 = vmatprep.subr.mxu0 0.0
    %613 = vmatpush1.msra.mxu0 0.0
    %614 = vmatprep.subr.mxu0 0.0
    %615 = vmatpush1.msra.mxu0 0.0
    %616 = vmatprep.subr.mxu0 0.0
    %617 = vmatpush1.msra.mxu0 0.0
    %618 = vmatprep.subr.mxu0 0.0
    %619 = vmatpush1.msra.mxu0 0.0
    %620 = vmatprep.subr.mxu0 0.0
    %621 = vmatpush1.msra.mxu0 0.0
    %622 = vmatprep.subr.mxu0 0.0
    %623 = vmatpush1.msra.mxu0 0.0
    %624 = vmatprep.subr.mxu0 0.0
    %625 = vmatpush1.msra.mxu0 0.0
    %626 = vmatprep.subr.mxu0 0.0
    %627 = vmatpush1.msra.mxu0 0.0
    %628 = vmatprep.subr.mxu0 0.0
    %629 = vmatpush1.msra.mxu0 0.0
    %630 = vmatprep.subr.mxu0 0.0
    %631 = vmatpush1.msra.mxu0 0.0
    %632 = vmatprep.subr.mxu0 0.0
    %633 = vmatpush1.msra.mxu0 0.0
    %634 = vmatprep.subr.mxu0 0.0
    %635 = vmatpush1.msra.mxu0 0.0
    %636 = vmatprep.subr.mxu0 0.0
    %637 = vmatpush1.msra.mxu0 0.0
    %638 = vmatprep.subr.mxu0 0.0
    %639 = vmatpush1.msra.mxu0 0.0
    %640 = vmatprep.subr.mxu0 0.0
    %641 = vmatpush1.msra.mxu0 0.0
    %642 = vmatprep.subr.mxu0 0.0
    %643 = vmatpush1.msra.mxu0 0.0
    %644 = vmatprep.subr.mxu0 0.0
    %645 = vmatpush1.msra.mxu0 0.0
    %646 = vmatprep.subr.mxu0 0.0
    %647 = vmatpush1.msra.mxu0 0.0
    %648 = vmatprep.subr.mxu0 0.0
    %649 = vmatpush1.msra.mxu0 0.0
    %650 = vmatprep.subr.mxu0 0.0
    %651 = vmatpush1.msra.mxu0 0.0
    %652 = vmatprep.subr.mxu0 0.0
    %653 = vmatpush1.msra.mxu0 0.0
    %654 = vmatprep.subr.mxu0 0.0
    %655 = vmatpush1.msra.mxu0 0.0
    %656 = vmatprep.subr.mxu0 0.0
    %657 = vmatpush1.msra.mxu0 0.0
    %658 = vmatprep.subr.mxu0 0.0
    %659 = vmatpush1.msra.mxu0 0.0
    %660 = vmatprep.subr.mxu0 0.0
    %661 = vmatpush1.msra.mxu0 0.0
    %662 = vmatprep.mubr.f32.mxu0 0.0
    %663 = vmatmul.mubr.f32.gmra.mrb[0].mxu0 %v575
    %v664 = vpop.f32.mrb[0].mxu0
    %v665 = vadd.f32 %v573, %v664
    %v666 = vpop.f32.mrb[0].mxu0
    %667 = vmatprep.mubr.f32.mxu0 0.0
    %668 = vmatmul.mubr.f32.gmra.mrb[0].mxu0 %v578
    %v669 = vpop.f32.mrb[0].mxu0
    %v670 = vadd.f32 %v573, %v669
    %v671 = vpop.f32.mrb[0].mxu0
    %672 = vmatprep.mubr.f32.mxu0 0.0
    %673 = vmatmul.mubr.f32.gmra.mrb[0].mxu0 %v581
    %v674 = vpop.f32.mrb[0].mxu0
    %v675 = vadd.f32 %v573, %v674
    %v676 = vpop.f32.mrb[0].mxu0
    %677 = vmatprep.mubr.f32.mxu0 0.0
    %678 = vmatmul.mubr.f32.gmra.mrb[0].mxu0 %v584
    %v679 = vpop.f32.mrb[0].mxu0
    %v680 = vadd.f32 %v573, %v679
    %v681 = vpop.f32.mrb[0].mxu0
    %682 = vmatprep.mubr.f32.mxu0 0.0
    %683 = vmatmul.mubr.f32.gmra.mrb[0].mxu0 %v587
    %v684 = vpop.f32.mrb[0].mxu0
    %v685 = vadd.f32 %v573, %v684
    %v686 = vpop.f32.mrb[0].mxu0
    %687 = vmatprep.mubr.f32.mxu0 0.0
    %688 = vmatmul.mubr.f32.gmra.mrb[0].mxu0 %v590
    %v689 = vpop.f32.mrb[0].mxu0
    %v690 = vadd.f32 %v573, %v689
    %v691 = vpop.f32.mrb[0].mxu0
    %692 = vmatprep.mubr.f32.mxu0 0.0
    %693 = vmatmul.mubr.f32.gmra.mrb[0].mxu0 %v593
    %v694 = vpop.f32.mrb[0].mxu0
    %v695 = vadd.f32 %v573, %v694
    %v696 = vpop.f32.mrb[0].mxu0
    %697 = vmatprep.mubr.f32.mxu0 0.0
    %698 = vmatmul.mubr.f32.gmra.mrb[0].mxu0 %v596
    %v699 = vpop.f32.mrb[0].mxu0
    %v700 = vadd.f32 %v573, %v699
    %v701 = vpop.f32.mrb[0].mxu0
    %702 = vdwg.mxu0
    %v703 = vlaneseq
    %v704 = vshrl.u32 %v703, 7
    %v705 = vsub.s32 0, %v704
    %v706 = vrot.slane %v561, %v705
    %707 = vmatprep.subr.mxu0 0.0
    %708 = vmatpush1.msra.mxu0 %v536
    %709 = vmatprep.subr.mxu0 0.0
    %710 = vmatpush1.msra.mxu0 %v537
    %711 = vmatprep.subr.mxu0 0.0
    %712 = vmatpush1.msra.mxu0 %v538
    %713 = vmatprep.subr.mxu0 0.0
    %714 = vmatpush1.msra.mxu0 %v539
    %715 = vmatprep.subr.mxu0 0.0
    %716 = vmatpush1.msra.mxu0 0.0
    %717 = vmatprep.subr.mxu0 0.0
    %718 = vmatpush1.msra.mxu0 0.0
    %719 = vmatprep.subr.mxu0 0.0
    %720 = vmatpush1.msra.mxu0 0.0
    %721 = vmatprep.subr.mxu0 0.0
    %722 = vmatpush1.msra.mxu0 0.0
    %723 = vmatprep.subr.mxu0 0.0
    %724 = vmatpush1.msra.mxu0 0.0
    %725 = vmatprep.subr.mxu0 0.0
    %726 = vmatpush1.msra.mxu0 0.0
    %727 = vmatprep.subr.mxu0 0.0
    %728 = vmatpush1.msra.mxu0 0.0
    %729 = vmatprep.subr.mxu0 0.0
    %730 = vmatpush1.msra.mxu0 0.0
    %731 = vmatprep.subr.mxu0 0.0
    %732 = vmatpush1.msra.mxu0 0.0
    %733 = vmatprep.subr.mxu0 0.0
    %734 = vmatpush1.msra.mxu0 0.0
    %735 = vmatprep.subr.mxu0 0.0
    %736 = vmatpush1.msra.mxu0 0.0
    %737 = vmatprep.subr.mxu0 0.0
    %738 = vmatpush1.msra.mxu0 0.0
    %739 = vmatprep.subr.mxu0 0.0
    %740 = vmatpush1.msra.mxu0 0.0
    %741 = vmatprep.subr.mxu0 0.0
    %742 = vmatpush1.msra.mxu0 0.0
    %743 = vmatprep.subr.mxu0 0.0
    %744 = vmatpush1.msra.mxu0 0.0
    %745 = vmatprep.subr.mxu0 0.0
    %746 = vmatpush1.msra.mxu0 0.0
    %747 = vmatprep.subr.mxu0 0.0
    %748 = vmatpush1.msra.mxu0 0.0
    %749 = vmatprep.subr.mxu0 0.0
    %750 = vmatpush1.msra.mxu0 0.0
    %751 = vmatprep.subr.mxu0 0.0
    %752 = vmatpush1.msra.mxu0 0.0
    %753 = vmatprep.subr.mxu0 0.0
    %754 = vmatpush1.msra.mxu0 0.0
    %755 = vmatprep.subr.mxu0 0.0
    %756 = vmatpush1.msra.mxu0 0.0
    %757 = vmatprep.subr.mxu0 0.0
    %758 = vmatpush1.msra.mxu0 0.0
    %759 = vmatprep.subr.mxu0 0.0
    %760 = vmatpush1.msra.mxu0 0.0
    %761 = vmatprep.subr.mxu0 0.0
    %762 = vmatpush1.msra.mxu0 0.0
    %763 = vmatprep.subr.mxu0 0.0
    %764 = vmatpush1.msra.mxu0 0.0
    %765 = vmatprep.subr.mxu0 0.0
    %766 = vmatpush1.msra.mxu0 0.0
    %767 = vmatprep.subr.mxu0 0.0
    %768 = vmatpush1.msra.mxu0 0.0
    %769 = vmatprep.subr.mxu0 0.0
    %770 = vmatpush1.msra.mxu0 0.0
    %771 = vmatprep.mubr.f32.mxu0 0.0
    %772 = vmatmul.mubr.f32.gmra.mrb[0].mxu0 %v575
    %v773 = vpop.f32.mrb[0].mxu0
    %v774 = vadd.f32 %v706, %v773
    %v775 = vpop.f32.mrb[0].mxu0
    %776 = vmatprep.mubr.f32.mxu0 0.0
    %777 = vmatmul.mubr.f32.gmra.mrb[0].mxu0 %v578
    %v778 = vpop.f32.mrb[0].mxu0
    %v779 = vadd.f32 %v706, %v778
    %v780 = vpop.f32.mrb[0].mxu0
    %781 = vmatprep.mubr.f32.mxu0 0.0
    %782 = vmatmul.mubr.f32.gmra.mrb[0].mxu0 %v581
    %v783 = vpop.f32.mrb[0].mxu0
    %v784 = vadd.f32 %v706, %v783
    %v785 = vpop.f32.mrb[0].mxu0
    %786 = vmatprep.mubr.f32.mxu0 0.0
    %787 = vmatmul.mubr.f32.gmra.mrb[0].mxu0 %v584
    %v788 = vpop.f32.mrb[0].mxu0
    %v789 = vadd.f32 %v706, %v788
    %v790 = vpop.f32.mrb[0].mxu0
    %791 = vmatprep.mubr.f32.mxu0 0.0
    %792 = vmatmul.mubr.f32.gmra.mrb[0].mxu0 %v587
    %v793 = vpop.f32.mrb[0].mxu0
    %v794 = vadd.f32 %v706, %v793
    %v795 = vpop.f32.mrb[0].mxu0
    %796 = vmatprep.mubr.f32.mxu0 0.0
    %797 = vmatmul.mubr.f32.gmra.mrb[0].mxu0 %v590
    %v798 = vpop.f32.mrb[0].mxu0
    %v799 = vadd.f32 %v706, %v798
    %v800 = vpop.f32.mrb[0].mxu0
    %801 = vmatprep.mubr.f32.mxu0 0.0
    %802 = vmatmul.mubr.f32.gmra.mrb[0].mxu0 %v593
    %v803 = vpop.f32.mrb[0].mxu0
    %v804 = vadd.f32 %v706, %v803
    %v805 = vpop.f32.mrb[0].mxu0
    %806 = vmatprep.mubr.f32.mxu0 0.0
    %807 = vmatmul.mubr.f32.gmra.mrb[0].mxu0 %v596
    %v808 = vpop.f32.mrb[0].mxu0
    %v809 = vadd.f32 %v706, %v808
    %v810 = vpop.f32.mrb[0].mxu0
    %811 = vdwg.mxu0
    %v812 = vlaneseq
    %v813 = vshrl.u32 %v812, 7
    %v814 = vsub.s32 0, %v813
    %v815 = vrot.slane %v562, %v814
    %816 = vmatprep.subr.mxu0 0.0
    %817 = vmatpush1.msra.mxu0 %v540
    %818 = vmatprep.subr.mxu0 0.0
    %819 = vmatpush1.msra.mxu0 %v541
    %820 = vmatprep.subr.mxu0 0.0
    %821 = vmatpush1.msra.mxu0 %v542
    %822 = vmatprep.subr.mxu0 0.0
    %823 = vmatpush1.msra.mxu0 %v543
    %824 = vmatprep.subr.mxu0 0.0
    %825 = vmatpush1.msra.mxu0 0.0
    %826 = vmatprep.subr.mxu0 0.0
    %827 = vmatpush1.msra.mxu0 0.0
    %828 = vmatprep.subr.mxu0 0.0
    %829 = vmatpush1.msra.mxu0 0.0
    %830 = vmatprep.subr.mxu0 0.0
    %831 = vmatpush1.msra.mxu0 0.0
    %832 = vmatprep.subr.mxu0 0.0
    %833 = vmatpush1.msra.mxu0 0.0
    %834 = vmatprep.subr.mxu0 0.0
    %835 = vmatpush1.msra.mxu0 0.0
    %836 = vmatprep.subr.mxu0 0.0
    %837 = vmatpush1.msra.mxu0 0.0
    %838 = vmatprep.subr.mxu0 0.0
    %839 = vmatpush1.msra.mxu0 0.0
    %840 = vmatprep.subr.mxu0 0.0
    %841 = vmatpush1.msra.mxu0 0.0
    %842 = vmatprep.subr.mxu0 0.0
    %843 = vmatpush1.msra.mxu0 0.0
    %844 = vmatprep.subr.mxu0 0.0
    %845 = vmatpush1.msra.mxu0 0.0
    %846 = vmatprep.subr.mxu0 0.0
    %847 = vmatpush1.msra.mxu0 0.0
    %848 = vmatprep.subr.mxu0 0.0
    %849 = vmatpush1.msra.mxu0 0.0
    %850 = vmatprep.subr.mxu0 0.0
    %851 = vmatpush1.msra.mxu0 0.0
    %852 = vmatprep.subr.mxu0 0.0
    %853 = vmatpush1.msra.mxu0 0.0
    %854 = vmatprep.subr.mxu0 0.0
    %855 = vmatpush1.msra.mxu0 0.0
    %856 = vmatprep.subr.mxu0 0.0
    %857 = vmatpush1.msra.mxu0 0.0
    %858 = vmatprep.subr.mxu0 0.0
    %859 = vmatpush1.msra.mxu0 0.0
    %860 = vmatprep.subr.mxu0 0.0
    %861 = vmatpush1.msra.mxu0 0.0
    %862 = vmatprep.subr.mxu0 0.0
    %863 = vmatpush1.msra.mxu0 0.0
    %864 = vmatprep.subr.mxu0 0.0
    %865 = vmatpush1.msra.mxu0 0.0
    %866 = vmatprep.subr.mxu0 0.0
    %867 = vmatpush1.msra.mxu0 0.0
    %868 = vmatprep.subr.mxu0 0.0
    %869 = vmatpush1.msra.mxu0 0.0
    %870 = vmatprep.subr.mxu0 0.0
    %871 = vmatpush1.msra.mxu0 0.0
    %872 = vmatprep.subr.mxu0 0.0
    %873 = vmatpush1.msra.mxu0 0.0
    %874 = vmatprep.subr.mxu0 0.0
    %875 = vmatpush1.msra.mxu0 0.0
    %876 = vmatprep.subr.mxu0 0.0
    %877 = vmatpush1.msra.mxu0 0.0
    %878 = vmatprep.subr.mxu0 0.0
    %879 = vmatpush1.msra.mxu0 0.0
    %880 = vmatprep.mubr.f32.mxu0 0.0
    %881 = vmatmul.mubr.f32.gmra.mrb[0].mxu0 %v575
    %v882 = vpop.f32.mrb[0].mxu0
    %v883 = vadd.f32 %v815, %v882
    %v884 = vpop.f32.mrb[0].mxu0
    %885 = vmatprep.mubr.f32.mxu0 0.0
    %886 = vmatmul.mubr.f32.gmra.mrb[0].mxu0 %v578
    %v887 = vpop.f32.mrb[0].mxu0
    %v888 = vadd.f32 %v815, %v887
    %v889 = vpop.f32.mrb[0].mxu0
    %890 = vmatprep.mubr.f32.mxu0 0.0
    %891 = vmatmul.mubr.f32.gmra.mrb[0].mxu0 %v581
    %v892 = vpop.f32.mrb[0].mxu0
    %v893 = vadd.f32 %v815, %v892
    %v894 = vpop.f32.mrb[0].mxu0
    %895 = vmatprep.mubr.f32.mxu0 0.0
    %896 = vmatmul.mubr.f32.gmra.mrb[0].mxu0 %v584
    %v897 = vpop.f32.mrb[0].mxu0
    %v898 = vadd.f32 %v815, %v897
    %v899 = vpop.f32.mrb[0].mxu0
    %900 = vmatprep.mubr.f32.mxu0 0.0
    %901 = vmatmul.mubr.f32.gmra.mrb[0].mxu0 %v587
    %v902 = vpop.f32.mrb[0].mxu0
    %v903 = vadd.f32 %v815, %v902
    %v904 = vpop.f32.mrb[0].mxu0
    %905 = vmatprep.mubr.f32.mxu0 0.0
    %906 = vmatmul.mubr.f32.gmra.mrb[0].mxu0 %v590
    %v907 = vpop.f32.mrb[0].mxu0
    %v908 = vadd.f32 %v815, %v907
    %v909 = vpop.f32.mrb[0].mxu0
    %910 = vmatprep.mubr.f32.mxu0 0.0
    %911 = vmatmul.mubr.f32.gmra.mrb[0].mxu0 %v593
    %v912 = vpop.f32.mrb[0].mxu0
    %v913 = vadd.f32 %v815, %v912
    %v914 = vpop.f32.mrb[0].mxu0
    %915 = vmatprep.mubr.f32.mxu0 0.0
    %916 = vmatmul.mubr.f32.gmra.mrb[0].mxu0 %v596
    %v917 = vpop.f32.mrb[0].mxu0
    %v918 = vadd.f32 %v815, %v917
    %v919 = vpop.f32.mrb[0].mxu0
    %920 = vdwg.mxu0
    %v921 = vmul.f32 %v665, 0.25
    %v922 = vmul.f32 %v670, 0.25
    %v923 = vmul.f32 %v675, 0.25
    %v924 = vmul.f32 %v680, 0.25
    %v925 = vmul.f32 %v685, 0.25
    %v926 = vmul.f32 %v690, 0.25
    %v927 = vmul.f32 %v695, 0.25
    %v928 = vmul.f32 %v700, 0.25
    %vm929 = vcmask 130048
    %v931 = vsel %vm929, %v921, 0
    %v934 = vsel %vm929, %v922, 0
    %v937 = vsel %vm929, %v923, 0
    %v940 = vsel %vm929, %v924, 0
    %v943 = vsel %vm929, %v925, 0
    %v946 = vsel %vm929, %v926, 0
    %v949 = vsel %vm929, %v927, 0
    %v952 = vsel %vm929, %v928, 0
    %v955 = vsel %vm929, %v774, 0
    %v958 = vsel %vm929, %v779, 0
    %v961 = vsel %vm929, %v784, 0
    %v964 = vsel %vm929, %v789, 0
    %v967 = vsel %vm929, %v794, 0
    %v970 = vsel %vm929, %v799, 0
    %v973 = vsel %vm929, %v804, 0
    %v976 = vsel %vm929, %v809, 0
    %978 = vmatprep.subr.mxu0 0.0
    %979 = vmatpush1.xpose.msra.mxu0 %v955
    %980 = vmatprep.subr.mxu0 0.0
    %981 = vmatpush1.xpose.msra.mxu0 %v958
    %982 = vmatprep.subr.mxu0 0.0
    %983 = vmatpush1.xpose.msra.mxu0 %v961
    %984 = vmatprep.subr.mxu0 0.0
    %985 = vmatpush1.xpose.msra.mxu0 %v964
    %986 = vmatprep.subr.mxu0 0.0
    %987 = vmatpush1.xpose.msra.mxu0 %v967
    %988 = vmatprep.subr.mxu0 0.0
    %989 = vmatpush1.xpose.msra.mxu0 %v970
    %990 = vmatprep.subr.mxu0 0.0
    %991 = vmatpush1.xpose.msra.mxu0 %v973
    %992 = vmatprep.subr.mxu0 0.0
    %993 = vmatpush1.xpose.msra.mxu0 %v976
    %994 = vmatprep.subr.mxu0 0.0
    %995 = vmatpush1.xpose.msra.mxu0 0.0
    %996 = vmatprep.subr.mxu0 0.0
    %997 = vmatpush1.xpose.msra.mxu0 0.0
    %998 = vmatprep.subr.mxu0 0.0
    %999 = vmatpush1.xpose.msra.mxu0 0.0
    %1000 = vmatprep.subr.mxu0 0.0
    %1001 = vmatpush1.xpose.msra.mxu0 0.0
    %1002 = vmatprep.subr.mxu0 0.0
    %1003 = vmatpush1.xpose.msra.mxu0 0.0
    %1004 = vmatprep.subr.mxu0 0.0
    %1005 = vmatpush1.xpose.msra.mxu0 0.0
    %1006 = vmatprep.subr.mxu0 0.0
    %1007 = vmatpush1.xpose.msra.mxu0 0.0
    %1008 = vmatprep.subr.mxu0 0.0
    %1009 = vmatpush1.xpose.msra.mxu0 0.0
    %1010 = vmatprep.subr.mxu0 0.0
    %1011 = vmatpush1.xpose.msra.mxu0 0.0
    %1012 = vmatprep.subr.mxu0 0.0
    %1013 = vmatpush1.xpose.msra.mxu0 0.0
    %1014 = vmatprep.subr.mxu0 0.0
    %1015 = vmatpush1.xpose.msra.mxu0 0.0
    %1016 = vmatprep.subr.mxu0 0.0
    %1017 = vmatpush1.xpose.msra.mxu0 0.0
    %1018 = vmatprep.subr.mxu0 0.0
    %1019 = vmatpush1.xpose.msra.mxu0 0.0
    %1020 = vmatprep.subr.mxu0 0.0
    %1021 = vmatpush1.xpose.msra.mxu0 0.0
    %1022 = vmatprep.subr.mxu0 0.0
    %1023 = vmatpush1.xpose.msra.mxu0 0.0
    %1024 = vmatprep.subr.mxu0 0.0
    %1025 = vmatpush1.xpose.msra.mxu0 0.0
    %1026 = vmatprep.subr.mxu0 0.0
    %1027 = vmatpush1.xpose.msra.mxu0 0.0
    %1028 = vmatprep.subr.mxu0 0.0
    %1029 = vmatpush1.xpose.msra.mxu0 0.0
    %1030 = vmatprep.subr.mxu0 0.0
    %1031 = vmatpush1.xpose.msra.mxu0 0.0
    %1032 = vmatprep.subr.mxu0 0.0
    %1033 = vmatpush1.xpose.msra.mxu0 0.0
    %1034 = vmatprep.subr.mxu0 0.0
    %1035 = vmatpush1.xpose.msra.mxu0 0.0
    %1036 = vmatprep.subr.mxu0 0.0
    %1037 = vmatpush1.xpose.msra.mxu0 0.0
    %1038 = vmatprep.subr.mxu0 0.0
    %1039 = vmatpush1.xpose.msra.mxu0 0.0
    %1040 = vmatprep.subr.mxu0 0.0
    %1041 = vmatpush1.xpose.msra.mxu0 0.0
    %1042 = vmatprep.mubr.f32.mxu0 0.0
    %1043 = vmatmul.mubr.f32.gmra.mrb[0].mxu0 %v931
    %v1044 = vpop.f32.mrb[0].mxu0
    %v1045 = vadd.f32 0.0, %v1044
    %v1046 = vpop.f32.mrb[0].mxu0
    %1047 = vmatprep.mubr.f32.mxu0 0.0
    %1048 = vmatmul.mubr.f32.gmra.mrb[0].mxu0 %v934
    %v1049 = vpop.f32.mrb[0].mxu0
    %v1050 = vadd.f32 0.0, %v1049
    %v1051 = vpop.f32.mrb[0].mxu0
    %1052 = vmatprep.mubr.f32.mxu0 0.0
    %1053 = vmatmul.mubr.f32.gmra.mrb[0].mxu0 %v937
    %v1054 = vpop.f32.mrb[0].mxu0
    %v1055 = vadd.f32 0.0, %v1054
    %v1056 = vpop.f32.mrb[0].mxu0
    %1057 = vmatprep.mubr.f32.mxu0 0.0
    %1058 = vmatmul.mubr.f32.gmra.mrb[0].mxu0 %v940
    %v1059 = vpop.f32.mrb[0].mxu0
    %v1060 = vadd.f32 0.0, %v1059
    %v1061 = vpop.f32.mrb[0].mxu0
    %1062 = vmatprep.mubr.f32.mxu0 0.0
    %1063 = vmatmul.mubr.f32.gmra.mrb[0].mxu0 %v943
    %v1064 = vpop.f32.mrb[0].mxu0
    %v1065 = vadd.f32 0.0, %v1064
    %v1066 = vpop.f32.mrb[0].mxu0
    %1067 = vmatprep.mubr.f32.mxu0 0.0
    %1068 = vmatmul.mubr.f32.gmra.mrb[0].mxu0 %v946
    %v1069 = vpop.f32.mrb[0].mxu0
    %v1070 = vadd.f32 0.0, %v1069
    %v1071 = vpop.f32.mrb[0].mxu0
    %1072 = vmatprep.mubr.f32.mxu0 0.0
    %1073 = vmatmul.mubr.f32.gmra.mrb[0].mxu0 %v949
    %v1074 = vpop.f32.mrb[0].mxu0
    %v1075 = vadd.f32 0.0, %v1074
    %v1076 = vpop.f32.mrb[0].mxu0
    %1077 = vmatprep.mubr.f32.mxu0 0.0
    %1078 = vmatmul.mubr.f32.gmra.mrb[0].mxu0 %v952
    %v1079 = vpop.f32.mrb[0].mxu0
    %v1080 = vadd.f32 0.0, %v1079
    %v1081 = vpop.f32.mrb[0].mxu0
    %1082 = vdwg.mxu0
    %v1083 = vsel %vm524, %v1045, -1e+30
    %v1084 = vsel %vm525, %v1050, -1e+30
    %v1085 = vsel %vm526, %v1055, -1e+30
    %v1086 = vsel %vm527, %v1060, -1e+30
    %v1087 = vsel %vm528, %v1065, -1e+30
    %v1088 = vsel %vm529, %v1070, -1e+30
    %v1089 = vsel %vm530, %v1075, -1e+30
    %v1090 = vsel %vm531, %v1080, -1e+30
    %vm1091 = vcmask 523264
    %v1092 = vsel %vm1091, %v1083, -inf
    %1093 = vmax.xlane.f32.xlu0 %v1092
    %v1094 = vpop.xlane.xlu0 %1093
    %v1095 = vsel %vm1091, %v1084, -inf
    %1096 = vmax.xlane.f32.xlu0 %v1095
    %v1097 = vpop.xlane.xlu0 %1096
    %v1098 = vsel %vm1091, %v1085, -inf
    %1099 = vmax.xlane.f32.xlu0 %v1098
    %v1100 = vpop.xlane.xlu0 %1099
    %v1101 = vsel %vm1091, %v1086, -inf
    %1102 = vmax.xlane.f32.xlu0 %v1101
    %v1103 = vpop.xlane.xlu0 %1102
    %v1104 = vsel %vm1091, %v1087, -inf
    %1105 = vmax.xlane.f32.xlu0 %v1104
    %v1106 = vpop.xlane.xlu0 %1105
    %v1107 = vsel %vm1091, %v1088, -inf
    %1108 = vmax.xlane.f32.xlu0 %v1107
    %v1109 = vpop.xlane.xlu0 %1108
    %v1110 = vsel %vm1091, %v1089, -inf
    %1111 = vmax.xlane.f32.xlu0 %v1110
    %v1112 = vpop.xlane.xlu0 %1111
    %v1113 = vsel %vm1091, %v1090, -inf
    %1114 = vmax.xlane.f32.xlu0 %v1113
    %v1115 = vpop.xlane.xlu0 %1114
    %v1116 = vsub.f32 %v1083, %v1094
    %v1117 = vsub.f32 %v1084, %v1097
    %v1118 = vsub.f32 %v1085, %v1100
    %v1119 = vsub.f32 %v1086, %v1103
    %v1120 = vsub.f32 %v1087, %v1106
    %v1121 = vsub.f32 %v1088, %v1109
    %v1122 = vsub.f32 %v1089, %v1112
    %v1123 = vsub.f32 %v1090, %v1115
    %v1124 = vmul.f32 %v1116, 1.442695
    %v1125 = vpow.pop %v1124
    %v1126 = vmul.f32 %v1117, 1.442695
    %v1127 = vpow.pop %v1126
    %v1128 = vmul.f32 %v1118, 1.442695
    %v1129 = vpow.pop %v1128
    %v1130 = vmul.f32 %v1119, 1.442695
    %v1131 = vpow.pop %v1130
    %v1132 = vmul.f32 %v1120, 1.442695
    %v1133 = vpow.pop %v1132
    %v1134 = vmul.f32 %v1121, 1.442695
    %v1135 = vpow.pop %v1134
    %v1136 = vmul.f32 %v1122, 1.442695
    %v1137 = vpow.pop %v1136
    %v1138 = vmul.f32 %v1123, 1.442695
    %v1139 = vpow.pop %v1138
    %v1140 = vsel %vm1091, %v1125, 0.0
    %1141 = vadd.xlane.f32.xlu0 %v1140
    %v1142 = vpop.xlane.xlu0 %1141
    %v1143 = vsel %vm1091, %v1127, 0.0
    %1144 = vadd.xlane.f32.xlu0 %v1143
    %v1145 = vpop.xlane.xlu0 %1144
    %v1146 = vsel %vm1091, %v1129, 0.0
    %1147 = vadd.xlane.f32.xlu0 %v1146
    %v1148 = vpop.xlane.xlu0 %1147
    %v1149 = vsel %vm1091, %v1131, 0.0
    %1150 = vadd.xlane.f32.xlu0 %v1149
    %v1151 = vpop.xlane.xlu0 %1150
    %v1152 = vsel %vm1091, %v1133, 0.0
    %1153 = vadd.xlane.f32.xlu0 %v1152
    %v1154 = vpop.xlane.xlu0 %1153
    %v1155 = vsel %vm1091, %v1135, 0.0
    %1156 = vadd.xlane.f32.xlu0 %v1155
    %v1157 = vpop.xlane.xlu0 %1156
    %v1158 = vsel %vm1091, %v1137, 0.0
    %1159 = vadd.xlane.f32.xlu0 %v1158
    %v1160 = vpop.xlane.xlu0 %1159
    %v1161 = vsel %vm1091, %v1139, 0.0
    %1162 = vadd.xlane.f32.xlu0 %v1161
    %v1163 = vpop.xlane.xlu0 %1162
    %v1164 = vrcp.pop %v1142
    %v1165 = vmul.f32 %v1125, %v1164
    %v1166 = vrcp.pop %v1145
    %v1167 = vmul.f32 %v1127, %v1166
    %v1168 = vrcp.pop %v1148
    %v1169 = vmul.f32 %v1129, %v1168
    %v1170 = vrcp.pop %v1151
    %v1171 = vmul.f32 %v1131, %v1170
    %v1172 = vrcp.pop %v1154
    %v1173 = vmul.f32 %v1133, %v1172
    %v1174 = vrcp.pop %v1157
    %v1175 = vmul.f32 %v1135, %v1174
    %v1176 = vrcp.pop %v1160
    %v1177 = vmul.f32 %v1137, %v1176
    %v1178 = vrcp.pop %v1163
    %v1179 = vmul.f32 %v1139, %v1178
    %v1181 = vsel %vm1091, %v1165, 0
    %v1184 = vsel %vm1091, %v1167, 0
    %v1187 = vsel %vm1091, %v1169, 0
    %v1190 = vsel %vm1091, %v1171, 0
    %v1193 = vsel %vm1091, %v1173, 0
    %v1196 = vsel %vm1091, %v1175, 0
    %v1199 = vsel %vm1091, %v1177, 0
    %v1202 = vsel %vm1091, %v1179, 0
    %1204 = vmatprep.subr.mxu0 0.0
    %1205 = vmatpush1.msra.mxu0 %v883
    %1206 = vmatprep.subr.mxu0 0.0
    %1207 = vmatpush1.msra.mxu0 %v888
    %1208 = vmatprep.subr.mxu0 0.0
    %1209 = vmatpush1.msra.mxu0 %v893
    %1210 = vmatprep.subr.mxu0 0.0
    %1211 = vmatpush1.msra.mxu0 %v898
    %1212 = vmatprep.subr.mxu0 0.0
    %1213 = vmatpush1.msra.mxu0 %v903
    %1214 = vmatprep.subr.mxu0 0.0
    %1215 = vmatpush1.msra.mxu0 %v908
    %1216 = vmatprep.subr.mxu0 0.0
    %1217 = vmatpush1.msra.mxu0 %v913
    %1218 = vmatprep.subr.mxu0 0.0
    %1219 = vmatpush1.msra.mxu0 %v918
    %1220 = vmatprep.subr.mxu0 0.0
    %1221 = vmatpush1.msra.mxu0 0.0
    %1222 = vmatprep.subr.mxu0 0.0
    %1223 = vmatpush1.msra.mxu0 0.0
    %1224 = vmatprep.subr.mxu0 0.0
    %1225 = vmatpush1.msra.mxu0 0.0
    %1226 = vmatprep.subr.mxu0 0.0
    %1227 = vmatpush1.msra.mxu0 0.0
    %1228 = vmatprep.subr.mxu0 0.0
    %1229 = vmatpush1.msra.mxu0 0.0
    %1230 = vmatprep.subr.mxu0 0.0
    %1231 = vmatpush1.msra.mxu0 0.0
    %1232 = vmatprep.subr.mxu0 0.0
    %1233 = vmatpush1.msra.mxu0 0.0
    %1234 = vmatprep.subr.mxu0 0.0
    %1235 = vmatpush1.msra.mxu0 0.0
    %1236 = vmatprep.subr.mxu0 0.0
    %1237 = vmatpush1.msra.mxu0 0.0
    %1238 = vmatprep.subr.mxu0 0.0
    %1239 = vmatpush1.msra.mxu0 0.0
    %1240 = vmatprep.subr.mxu0 0.0
    %1241 = vmatpush1.msra.mxu0 0.0
    %1242 = vmatprep.subr.mxu0 0.0
    %1243 = vmatpush1.msra.mxu0 0.0
    %1244 = vmatprep.subr.mxu0 0.0
    %1245 = vmatpush1.msra.mxu0 0.0
    %1246 = vmatprep.subr.mxu0 0.0
    %1247 = vmatpush1.msra.mxu0 0.0
    %1248 = vmatprep.subr.mxu0 0.0
    %1249 = vmatpush1.msra.mxu0 0.0
    %1250 = vmatprep.subr.mxu0 0.0
    %1251 = vmatpush1.msra.mxu0 0.0
    %1252 = vmatprep.subr.mxu0 0.0
    %1253 = vmatpush1.msra.mxu0 0.0
    %1254 = vmatprep.subr.mxu0 0.0
    %1255 = vmatpush1.msra.mxu0 0.0
    %1256 = vmatprep.subr.mxu0 0.0
    %1257 = vmatpush1.msra.mxu0 0.0
    %1258 = vmatprep.subr.mxu0 0.0
    %1259 = vmatpush1.msra.mxu0 0.0
    %1260 = vmatprep.subr.mxu0 0.0
    %1261 = vmatpush1.msra.mxu0 0.0
    %1262 = vmatprep.subr.mxu0 0.0
    %1263 = vmatpush1.msra.mxu0 0.0
    %1264 = vmatprep.subr.mxu0 0.0
    %1265 = vmatpush1.msra.mxu0 0.0
    %1266 = vmatprep.subr.mxu0 0.0
    %1267 = vmatpush1.msra.mxu0 0.0
    %1268 = vmatprep.mubr.f32.mxu0 0.0
    %1269 = vmatmul.mubr.f32.gmra.mrb[0].mxu0 %v1181
    %v1270 = vpop.f32.mrb[0].mxu0
    %v1271 = vadd.f32 0.0, %v1270
    %v1272 = vpop.f32.mrb[0].mxu0
    %1273 = vmatprep.mubr.f32.mxu0 0.0
    %1274 = vmatmul.mubr.f32.gmra.mrb[0].mxu0 %v1184
    %v1275 = vpop.f32.mrb[0].mxu0
    %v1276 = vadd.f32 0.0, %v1275
    %v1277 = vpop.f32.mrb[0].mxu0
    %1278 = vmatprep.mubr.f32.mxu0 0.0
    %1279 = vmatmul.mubr.f32.gmra.mrb[0].mxu0 %v1187
    %v1280 = vpop.f32.mrb[0].mxu0
    %v1281 = vadd.f32 0.0, %v1280
    %v1282 = vpop.f32.mrb[0].mxu0
    %1283 = vmatprep.mubr.f32.mxu0 0.0
    %1284 = vmatmul.mubr.f32.gmra.mrb[0].mxu0 %v1190
    %v1285 = vpop.f32.mrb[0].mxu0
    %v1286 = vadd.f32 0.0, %v1285
    %v1287 = vpop.f32.mrb[0].mxu0
    %1288 = vmatprep.mubr.f32.mxu0 0.0
    %1289 = vmatmul.mubr.f32.gmra.mrb[0].mxu0 %v1193
    %v1290 = vpop.f32.mrb[0].mxu0
    %v1291 = vadd.f32 0.0, %v1290
    %v1292 = vpop.f32.mrb[0].mxu0
    %1293 = vmatprep.mubr.f32.mxu0 0.0
    %1294 = vmatmul.mubr.f32.gmra.mrb[0].mxu0 %v1196
    %v1295 = vpop.f32.mrb[0].mxu0
    %v1296 = vadd.f32 0.0, %v1295
    %v1297 = vpop.f32.mrb[0].mxu0
    %1298 = vmatprep.mubr.f32.mxu0 0.0
    %1299 = vmatmul.mubr.f32.gmra.mrb[0].mxu0 %v1199
    %v1300 = vpop.f32.mrb[0].mxu0
    %v1301 = vadd.f32 0.0, %v1300
    %v1302 = vpop.f32.mrb[0].mxu0
    %1303 = vmatprep.mubr.f32.mxu0 0.0
    %1304 = vmatmul.mubr.f32.gmra.mrb[0].mxu0 %v1202
    %v1305 = vpop.f32.mrb[0].mxu0
    %v1306 = vadd.f32 0.0, %v1305
    %v1307 = vpop.f32.mrb[0].mxu0
    %1308 = vdwg.mxu0
    %1309 = vrot.lane.b32.xlu0 %v921, 112
    %v1310 = vpop.permute.xlu0 %1309
    %1311 = vrot.lane.b32.xlu0 %v922, 112
    %v1312 = vpop.permute.xlu0 %1311
    %1313 = vrot.lane.b32.xlu0 %v923, 112
    %v1314 = vpop.permute.xlu0 %1313
    %1315 = vrot.lane.b32.xlu0 %v924, 112
    %v1316 = vpop.permute.xlu0 %1315
    %1317 = vrot.lane.b32.xlu0 %v925, 112
    %v1318 = vpop.permute.xlu0 %1317
    %1319 = vrot.lane.b32.xlu0 %v926, 112
    %v1320 = vpop.permute.xlu0 %1319
    %1321 = vrot.lane.b32.xlu0 %v927, 112
    %v1322 = vpop.permute.xlu0 %1321
    %1323 = vrot.lane.b32.xlu0 %v928, 112
    %v1324 = vpop.permute.xlu0 %1323
    %1325 = vrot.lane.b32.xlu0 %v774, 112
    %v1326 = vpop.permute.xlu0 %1325
    %1327 = vrot.lane.b32.xlu0 %v779, 112
    %v1328 = vpop.permute.xlu0 %1327
    %1329 = vrot.lane.b32.xlu0 %v784, 112
    %v1330 = vpop.permute.xlu0 %1329
    %1331 = vrot.lane.b32.xlu0 %v789, 112
    %v1332 = vpop.permute.xlu0 %1331
    %1333 = vrot.lane.b32.xlu0 %v794, 112
    %v1334 = vpop.permute.xlu0 %1333
    %1335 = vrot.lane.b32.xlu0 %v799, 112
    %v1336 = vpop.permute.xlu0 %1335
    %1337 = vrot.lane.b32.xlu0 %v804, 112
    %v1338 = vpop.permute.xlu0 %1337
    %1339 = vrot.lane.b32.xlu0 %v809, 112
    %v1340 = vpop.permute.xlu0 %1339
    %v1341 = vsel %vm929, %v1310, 0
    %v1343 = vsel %vm929, %v1312, 0
    %v1345 = vsel %vm929, %v1314, 0
    %v1347 = vsel %vm929, %v1316, 0
    %v1349 = vsel %vm929, %v1318, 0
    %v1351 = vsel %vm929, %v1320, 0
    %v1353 = vsel %vm929, %v1322, 0
    %v1355 = vsel %vm929, %v1324, 0
    %v1357 = vsel %vm929, %v1326, 0
    %v1359 = vsel %vm929, %v1328, 0
    %v1361 = vsel %vm929, %v1330, 0
    %v1363 = vsel %vm929, %v1332, 0
    %v1365 = vsel %vm929, %v1334, 0
    %v1367 = vsel %vm929, %v1336, 0
    %v1369 = vsel %vm929, %v1338, 0
    %v1371 = vsel %vm929, %v1340, 0
    %1373 = vmatprep.subr.mxu0 0.0
    %1374 = vmatpush1.xpose.msra.mxu0 %v1357
    %1375 = vmatprep.subr.mxu0 0.0
    %1376 = vmatpush1.xpose.msra.mxu0 %v1359
    %1377 = vmatprep.subr.mxu0 0.0
    %1378 = vmatpush1.xpose.msra.mxu0 %v1361
    %1379 = vmatprep.subr.mxu0 0.0
    %1380 = vmatpush1.xpose.msra.mxu0 %v1363
    %1381 = vmatprep.subr.mxu0 0.0
    %1382 = vmatpush1.xpose.msra.mxu0 %v1365
    %1383 = vmatprep.subr.mxu0 0.0
    %1384 = vmatpush1.xpose.msra.mxu0 %v1367
    %1385 = vmatprep.subr.mxu0 0.0
    %1386 = vmatpush1.xpose.msra.mxu0 %v1369
    %1387 = vmatprep.subr.mxu0 0.0
    %1388 = vmatpush1.xpose.msra.mxu0 %v1371
    %1389 = vmatprep.subr.mxu0 0.0
    %1390 = vmatpush1.xpose.msra.mxu0 0.0
    %1391 = vmatprep.subr.mxu0 0.0
    %1392 = vmatpush1.xpose.msra.mxu0 0.0
    %1393 = vmatprep.subr.mxu0 0.0
    %1394 = vmatpush1.xpose.msra.mxu0 0.0
    %1395 = vmatprep.subr.mxu0 0.0
    %1396 = vmatpush1.xpose.msra.mxu0 0.0
    %1397 = vmatprep.subr.mxu0 0.0
    %1398 = vmatpush1.xpose.msra.mxu0 0.0
    %1399 = vmatprep.subr.mxu0 0.0
    %1400 = vmatpush1.xpose.msra.mxu0 0.0
    %1401 = vmatprep.subr.mxu0 0.0
    %1402 = vmatpush1.xpose.msra.mxu0 0.0
    %1403 = vmatprep.subr.mxu0 0.0
    %1404 = vmatpush1.xpose.msra.mxu0 0.0
    %1405 = vmatprep.subr.mxu0 0.0
    %1406 = vmatpush1.xpose.msra.mxu0 0.0
    %1407 = vmatprep.subr.mxu0 0.0
    %1408 = vmatpush1.xpose.msra.mxu0 0.0
    %1409 = vmatprep.subr.mxu0 0.0
    %1410 = vmatpush1.xpose.msra.mxu0 0.0
    %1411 = vmatprep.subr.mxu0 0.0
    %1412 = vmatpush1.xpose.msra.mxu0 0.0
    %1413 = vmatprep.subr.mxu0 0.0
    %1414 = vmatpush1.xpose.msra.mxu0 0.0
    %1415 = vmatprep.subr.mxu0 0.0
    %1416 = vmatpush1.xpose.msra.mxu0 0.0
    %1417 = vmatprep.subr.mxu0 0.0
    %1418 = vmatpush1.xpose.msra.mxu0 0.0
    %1419 = vmatprep.subr.mxu0 0.0
    %1420 = vmatpush1.xpose.msra.mxu0 0.0
    %1421 = vmatprep.subr.mxu0 0.0
    %1422 = vmatpush1.xpose.msra.mxu0 0.0
    %1423 = vmatprep.subr.mxu0 0.0
    %1424 = vmatpush1.xpose.msra.mxu0 0.0
    %1425 = vmatprep.subr.mxu0 0.0
    %1426 = vmatpush1.xpose.msra.mxu0 0.0
    %1427 = vmatprep.subr.mxu0 0.0
    %1428 = vmatpush1.xpose.msra.mxu0 0.0
    %1429 = vmatprep.subr.mxu0 0.0
    %1430 = vmatpush1.xpose.msra.mxu0 0.0
    %1431 = vmatprep.subr.mxu0 0.0
    %1432 = vmatpush1.xpose.msra.mxu0 0.0
    %1433 = vmatprep.subr.mxu0 0.0
    %1434 = vmatpush1.xpose.msra.mxu0 0.0
    %1435 = vmatprep.subr.mxu0 0.0
    %1436 = vmatpush1.xpose.msra.mxu0 0.0
    %1437 = vmatprep.mubr.f32.mxu0 0.0
    %1438 = vmatmul.mubr.f32.gmra.mrb[0].mxu0 %v1341
    %v1439 = vpop.f32.mrb[0].mxu0
    %v1440 = vadd.f32 0.0, %v1439
    %v1441 = vpop.f32.mrb[0].mxu0
    %1442 = vmatprep.mubr.f32.mxu0 0.0
    %1443 = vmatmul.mubr.f32.gmra.mrb[0].mxu0 %v1343
    %v1444 = vpop.f32.mrb[0].mxu0
    %v1445 = vadd.f32 0.0, %v1444
    %v1446 = vpop.f32.mrb[0].mxu0
    %1447 = vmatprep.mubr.f32.mxu0 0.0
    %1448 = vmatmul.mubr.f32.gmra.mrb[0].mxu0 %v1345
    %v1449 = vpop.f32.mrb[0].mxu0
    %v1450 = vadd.f32 0.0, %v1449
    %v1451 = vpop.f32.mrb[0].mxu0
    %1452 = vmatprep.mubr.f32.mxu0 0.0
    %1453 = vmatmul.mubr.f32.gmra.mrb[0].mxu0 %v1347
    %v1454 = vpop.f32.mrb[0].mxu0
    %v1455 = vadd.f32 0.0, %v1454
    %v1456 = vpop.f32.mrb[0].mxu0
    %1457 = vmatprep.mubr.f32.mxu0 0.0
    %1458 = vmatmul.mubr.f32.gmra.mrb[0].mxu0 %v1349
    %v1459 = vpop.f32.mrb[0].mxu0
    %v1460 = vadd.f32 0.0, %v1459
    %v1461 = vpop.f32.mrb[0].mxu0
    %1462 = vmatprep.mubr.f32.mxu0 0.0
    %1463 = vmatmul.mubr.f32.gmra.mrb[0].mxu0 %v1351
    %v1464 = vpop.f32.mrb[0].mxu0
    %v1465 = vadd.f32 0.0, %v1464
    %v1466 = vpop.f32.mrb[0].mxu0
    %1467 = vmatprep.mubr.f32.mxu0 0.0
    %1468 = vmatmul.mubr.f32.gmra.mrb[0].mxu0 %v1353
    %v1469 = vpop.f32.mrb[0].mxu0
    %v1470 = vadd.f32 0.0, %v1469
    %v1471 = vpop.f32.mrb[0].mxu0
    %1472 = vmatprep.mubr.f32.mxu0 0.0
    %1473 = vmatmul.mubr.f32.gmra.mrb[0].mxu0 %v1355
    %v1474 = vpop.f32.mrb[0].mxu0
    %v1475 = vadd.f32 0.0, %v1474
    %v1476 = vpop.f32.mrb[0].mxu0
    %1477 = vdwg.mxu0
    %v1478 = vsel %vm524, %v1440, -1e+30
    %v1479 = vsel %vm525, %v1445, -1e+30
    %v1480 = vsel %vm526, %v1450, -1e+30
    %v1481 = vsel %vm527, %v1455, -1e+30
    %v1482 = vsel %vm528, %v1460, -1e+30
    %v1483 = vsel %vm529, %v1465, -1e+30
    %v1484 = vsel %vm530, %v1470, -1e+30
    %v1485 = vsel %vm531, %v1475, -1e+30
    %v1486 = vsel %vm1091, %v1478, -inf
    %1487 = vmax.xlane.f32.xlu0 %v1486
    %v1488 = vpop.xlane.xlu0 %1487
    %v1489 = vsel %vm1091, %v1479, -inf
    %1490 = vmax.xlane.f32.xlu0 %v1489
    %v1491 = vpop.xlane.xlu0 %1490
    %v1492 = vsel %vm1091, %v1480, -inf
    %1493 = vmax.xlane.f32.xlu0 %v1492
    %v1494 = vpop.xlane.xlu0 %1493
    %v1495 = vsel %vm1091, %v1481, -inf
    %1496 = vmax.xlane.f32.xlu0 %v1495
    %v1497 = vpop.xlane.xlu0 %1496
    %v1498 = vsel %vm1091, %v1482, -inf
    %1499 = vmax.xlane.f32.xlu0 %v1498
    %v1500 = vpop.xlane.xlu0 %1499
    %v1501 = vsel %vm1091, %v1483, -inf
    %1502 = vmax.xlane.f32.xlu0 %v1501
    %v1503 = vpop.xlane.xlu0 %1502
    %v1504 = vsel %vm1091, %v1484, -inf
    %1505 = vmax.xlane.f32.xlu0 %v1504
    %v1506 = vpop.xlane.xlu0 %1505
    %v1507 = vsel %vm1091, %v1485, -inf
    %1508 = vmax.xlane.f32.xlu0 %v1507
    %v1509 = vpop.xlane.xlu0 %1508
    %v1510 = vsub.f32 %v1478, %v1488
    %v1511 = vsub.f32 %v1479, %v1491
    %v1512 = vsub.f32 %v1480, %v1494
    %v1513 = vsub.f32 %v1481, %v1497
    %v1514 = vsub.f32 %v1482, %v1500
    %v1515 = vsub.f32 %v1483, %v1503
    %v1516 = vsub.f32 %v1484, %v1506
    %v1517 = vsub.f32 %v1485, %v1509
    %v1518 = vmul.f32 %v1510, 1.442695
    %v1519 = vpow.pop %v1518
    %v1520 = vmul.f32 %v1511, 1.442695
    %v1521 = vpow.pop %v1520
    %v1522 = vmul.f32 %v1512, 1.442695
    %v1523 = vpow.pop %v1522
    %v1524 = vmul.f32 %v1513, 1.442695
    %v1525 = vpow.pop %v1524
    %v1526 = vmul.f32 %v1514, 1.442695
    %v1527 = vpow.pop %v1526
    %v1528 = vmul.f32 %v1515, 1.442695
    %v1529 = vpow.pop %v1528
    %v1530 = vmul.f32 %v1516, 1.442695
    %v1531 = vpow.pop %v1530
    %v1532 = vmul.f32 %v1517, 1.442695
    %v1533 = vpow.pop %v1532
    %v1534 = vsel %vm1091, %v1519, 0.0
    %1535 = vadd.xlane.f32.xlu0 %v1534
    %v1536 = vpop.xlane.xlu0 %1535
    %v1537 = vsel %vm1091, %v1521, 0.0
    %1538 = vadd.xlane.f32.xlu0 %v1537
    %v1539 = vpop.xlane.xlu0 %1538
    %v1540 = vsel %vm1091, %v1523, 0.0
    %1541 = vadd.xlane.f32.xlu0 %v1540
    %v1542 = vpop.xlane.xlu0 %1541
    %v1543 = vsel %vm1091, %v1525, 0.0
    %1544 = vadd.xlane.f32.xlu0 %v1543
    %v1545 = vpop.xlane.xlu0 %1544
    %v1546 = vsel %vm1091, %v1527, 0.0
    %1547 = vadd.xlane.f32.xlu0 %v1546
    %v1548 = vpop.xlane.xlu0 %1547
    %v1549 = vsel %vm1091, %v1529, 0.0
    %1550 = vadd.xlane.f32.xlu0 %v1549
    %v1551 = vpop.xlane.xlu0 %1550
    %v1552 = vsel %vm1091, %v1531, 0.0
    %1553 = vadd.xlane.f32.xlu0 %v1552
    %v1554 = vpop.xlane.xlu0 %1553
    %v1555 = vsel %vm1091, %v1533, 0.0
    %1556 = vadd.xlane.f32.xlu0 %v1555
    %v1557 = vpop.xlane.xlu0 %1556
    %v1558 = vrcp.pop %v1536
    %v1559 = vmul.f32 %v1519, %v1558
    %v1560 = vrcp.pop %v1539
    %v1561 = vmul.f32 %v1521, %v1560
    %v1562 = vrcp.pop %v1542
    %v1563 = vmul.f32 %v1523, %v1562
    %v1564 = vrcp.pop %v1545
    %v1565 = vmul.f32 %v1525, %v1564
    %v1566 = vrcp.pop %v1548
    %v1567 = vmul.f32 %v1527, %v1566
    %v1568 = vrcp.pop %v1551
    %v1569 = vmul.f32 %v1529, %v1568
    %v1570 = vrcp.pop %v1554
    %v1571 = vmul.f32 %v1531, %v1570
    %v1572 = vrcp.pop %v1557
    %v1573 = vmul.f32 %v1533, %v1572
    %1582 = vrot.lane.b32.xlu0 %v883, 112
    %v1583 = vpop.permute.xlu0 %1582
    %1584 = vrot.lane.b32.xlu0 %v888, 112
    %v1585 = vpop.permute.xlu0 %1584
    %1586 = vrot.lane.b32.xlu0 %v893, 112
    %v1587 = vpop.permute.xlu0 %1586
    %1588 = vrot.lane.b32.xlu0 %v898, 112
    %v1589 = vpop.permute.xlu0 %1588
    %1590 = vrot.lane.b32.xlu0 %v903, 112
    %v1591 = vpop.permute.xlu0 %1590
    %1592 = vrot.lane.b32.xlu0 %v908, 112
    %v1593 = vpop.permute.xlu0 %1592
    %1594 = vrot.lane.b32.xlu0 %v913, 112
    %v1595 = vpop.permute.xlu0 %1594
    %1596 = vrot.lane.b32.xlu0 %v918, 112
    %v1597 = vpop.permute.xlu0 %1596
    %v1607 = vsel %vm1091, %v1559, 0
    %v1610 = vsel %vm1091, %v1561, 0
    %v1613 = vsel %vm1091, %v1563, 0
    %v1616 = vsel %vm1091, %v1565, 0
    %v1619 = vsel %vm1091, %v1567, 0
    %v1622 = vsel %vm1091, %v1569, 0
    %v1625 = vsel %vm1091, %v1571, 0
    %v1628 = vsel %vm1091, %v1573, 0
    %1630 = vmatprep.subr.mxu0 0.0
    %1631 = vmatpush1.msra.mxu0 %v1583
    %1632 = vmatprep.subr.mxu0 0.0
    %1633 = vmatpush1.msra.mxu0 %v1585
    %1634 = vmatprep.subr.mxu0 0.0
    %1635 = vmatpush1.msra.mxu0 %v1587
    %1636 = vmatprep.subr.mxu0 0.0
    %1637 = vmatpush1.msra.mxu0 %v1589
    %1638 = vmatprep.subr.mxu0 0.0
    %1639 = vmatpush1.msra.mxu0 %v1591
    %1640 = vmatprep.subr.mxu0 0.0
    %1641 = vmatpush1.msra.mxu0 %v1593
    %1642 = vmatprep.subr.mxu0 0.0
    %1643 = vmatpush1.msra.mxu0 %v1595
    %1644 = vmatprep.subr.mxu0 0.0
    %1645 = vmatpush1.msra.mxu0 %v1597
    %1646 = vmatprep.subr.mxu0 0.0
    %1647 = vmatpush1.msra.mxu0 0.0
    %1648 = vmatprep.subr.mxu0 0.0
    %1649 = vmatpush1.msra.mxu0 0.0
    %1650 = vmatprep.subr.mxu0 0.0
    %1651 = vmatpush1.msra.mxu0 0.0
    %1652 = vmatprep.subr.mxu0 0.0
    %1653 = vmatpush1.msra.mxu0 0.0
    %1654 = vmatprep.subr.mxu0 0.0
    %1655 = vmatpush1.msra.mxu0 0.0
    %1656 = vmatprep.subr.mxu0 0.0
    %1657 = vmatpush1.msra.mxu0 0.0
    %1658 = vmatprep.subr.mxu0 0.0
    %1659 = vmatpush1.msra.mxu0 0.0
    %1660 = vmatprep.subr.mxu0 0.0
    %1661 = vmatpush1.msra.mxu0 0.0
    %1662 = vmatprep.subr.mxu0 0.0
    %1663 = vmatpush1.msra.mxu0 0.0
    %1664 = vmatprep.subr.mxu0 0.0
    %1665 = vmatpush1.msra.mxu0 0.0
    %1666 = vmatprep.subr.mxu0 0.0
    %1667 = vmatpush1.msra.mxu0 0.0
    %1668 = vmatprep.subr.mxu0 0.0
    %1669 = vmatpush1.msra.mxu0 0.0
    %1670 = vmatprep.subr.mxu0 0.0
    %1671 = vmatpush1.msra.mxu0 0.0
    %1672 = vmatprep.subr.mxu0 0.0
    %1673 = vmatpush1.msra.mxu0 0.0
    %1674 = vmatprep.subr.mxu0 0.0
    %1675 = vmatpush1.msra.mxu0 0.0
    %1676 = vmatprep.subr.mxu0 0.0
    %1677 = vmatpush1.msra.mxu0 0.0
    %1678 = vmatprep.subr.mxu0 0.0
    %1679 = vmatpush1.msra.mxu0 0.0
    %1680 = vmatprep.subr.mxu0 0.0
    %1681 = vmatpush1.msra.mxu0 0.0
    %1682 = vmatprep.subr.mxu0 0.0
    %1683 = vmatpush1.msra.mxu0 0.0
    %1684 = vmatprep.subr.mxu0 0.0
    %1685 = vmatpush1.msra.mxu0 0.0
    %1686 = vmatprep.subr.mxu0 0.0
    %1687 = vmatpush1.msra.mxu0 0.0
    %1688 = vmatprep.subr.mxu0 0.0
    %1689 = vmatpush1.msra.mxu0 0.0
    %1690 = vmatprep.subr.mxu0 0.0
    %1691 = vmatpush1.msra.mxu0 0.0
    %1692 = vmatprep.subr.mxu0 0.0
    %1693 = vmatpush1.msra.mxu0 0.0
    %1694 = vmatprep.mubr.f32.mxu0 0.0
    %1695 = vmatmul.mubr.f32.gmra.mrb[0].mxu0 %v1607
    %v1696 = vpop.f32.mrb[0].mxu0
    %v1697 = vadd.f32 0.0, %v1696
    %v1698 = vpop.f32.mrb[0].mxu0
    %1699 = vmatprep.mubr.f32.mxu0 0.0
    %1700 = vmatmul.mubr.f32.gmra.mrb[0].mxu0 %v1610
    %v1701 = vpop.f32.mrb[0].mxu0
    %v1702 = vadd.f32 0.0, %v1701
    %v1703 = vpop.f32.mrb[0].mxu0
    %1704 = vmatprep.mubr.f32.mxu0 0.0
    %1705 = vmatmul.mubr.f32.gmra.mrb[0].mxu0 %v1613
    %v1706 = vpop.f32.mrb[0].mxu0
    %v1707 = vadd.f32 0.0, %v1706
    %v1708 = vpop.f32.mrb[0].mxu0
    %1709 = vmatprep.mubr.f32.mxu0 0.0
    %1710 = vmatmul.mubr.f32.gmra.mrb[0].mxu0 %v1616
    %v1711 = vpop.f32.mrb[0].mxu0
    %v1712 = vadd.f32 0.0, %v1711
    %v1713 = vpop.f32.mrb[0].mxu0
    %1714 = vmatprep.mubr.f32.mxu0 0.0
    %1715 = vmatmul.mubr.f32.gmra.mrb[0].mxu0 %v1619
    %v1716 = vpop.f32.mrb[0].mxu0
    %v1717 = vadd.f32 0.0, %v1716
    %v1718 = vpop.f32.mrb[0].mxu0
    %1719 = vmatprep.mubr.f32.mxu0 0.0
    %1720 = vmatmul.mubr.f32.gmra.mrb[0].mxu0 %v1622
    %v1721 = vpop.f32.mrb[0].mxu0
    %v1722 = vadd.f32 0.0, %v1721
    %v1723 = vpop.f32.mrb[0].mxu0
    %1724 = vmatprep.mubr.f32.mxu0 0.0
    %1725 = vmatmul.mubr.f32.gmra.mrb[0].mxu0 %v1625
    %v1726 = vpop.f32.mrb[0].mxu0
    %v1727 = vadd.f32 0.0, %v1726
    %v1728 = vpop.f32.mrb[0].mxu0
    %1729 = vmatprep.mubr.f32.mxu0 0.0
    %1730 = vmatmul.mubr.f32.gmra.mrb[0].mxu0 %v1628
    %v1731 = vpop.f32.mrb[0].mxu0
    %v1732 = vadd.f32 0.0, %v1731
    %v1733 = vpop.f32.mrb[0].mxu0
    %1734 = vdwg.mxu0
    %1743 = vrot.lane.b32.xlu0 %v1697, 16
    %v1744 = vpop.permute.xlu0 %1743
    %1745 = vrot.lane.b32.xlu0 %v1702, 16
    %v1746 = vpop.permute.xlu0 %1745
    %1747 = vrot.lane.b32.xlu0 %v1707, 16
    %v1748 = vpop.permute.xlu0 %1747
    %1749 = vrot.lane.b32.xlu0 %v1712, 16
    %v1750 = vpop.permute.xlu0 %1749
    %1751 = vrot.lane.b32.xlu0 %v1717, 16
    %v1752 = vpop.permute.xlu0 %1751
    %1753 = vrot.lane.b32.xlu0 %v1722, 16
    %v1754 = vpop.permute.xlu0 %1753
    %1755 = vrot.lane.b32.xlu0 %v1727, 16
    %v1756 = vpop.permute.xlu0 %1755
    %1757 = vrot.lane.b32.xlu0 %v1732, 16
    %v1758 = vpop.permute.xlu0 %1757
    %v1767 = vsel %vm929, %v1271, %v1744
    %v1768 = vsel %vm929, %v1276, %v1746
    %v1769 = vsel %vm929, %v1281, %v1748
    %v1770 = vsel %vm929, %v1286, %v1750
    %v1771 = vsel %vm929, %v1291, %v1752
    %v1772 = vsel %vm929, %v1296, %v1754
    %v1773 = vsel %vm929, %v1301, %v1756
    %v1774 = vsel %vm929, %v1306, %v1758
    %v1775 = vlaneseq
    %v1776 = vshrl.u32 %v1775, 7
    %v1777 = vsub.s32 0, %v1776
    %v1778 = vrot.slane %v563, %v1777
    %v1780 = vsel %vm385, %v1767, 0
    %v1783 = vsel %vm385, %v1768, 0
    %v1786 = vsel %vm385, %v1769, 0
    %v1789 = vsel %vm385, %v1770, 0
    %v1792 = vsel %vm385, %v1771, 0
    %v1795 = vsel %vm385, %v1772, 0
    %v1798 = vsel %vm385, %v1773, 0
    %v1801 = vsel %vm385, %v1774, 0
    %1803 = vmatprep.subr.mxu0 0.0
    %1804 = vmatpush1.msra.mxu0 %v544
    %1805 = vmatprep.subr.mxu0 0.0
    %1806 = vmatpush1.msra.mxu0 %v545
    %1807 = vmatprep.subr.mxu0 0.0
    %1808 = vmatpush1.msra.mxu0 %v546
    %1809 = vmatprep.subr.mxu0 0.0
    %1810 = vmatpush1.msra.mxu0 %v547
    %1811 = vmatprep.subr.mxu0 0.0
    %1812 = vmatpush1.msra.mxu0 0.0
    %1813 = vmatprep.subr.mxu0 0.0
    %1814 = vmatpush1.msra.mxu0 0.0
    %1815 = vmatprep.subr.mxu0 0.0
    %1816 = vmatpush1.msra.mxu0 0.0
    %1817 = vmatprep.subr.mxu0 0.0
    %1818 = vmatpush1.msra.mxu0 0.0
    %1819 = vmatprep.subr.mxu0 0.0
    %1820 = vmatpush1.msra.mxu0 0.0
    %1821 = vmatprep.subr.mxu0 0.0
    %1822 = vmatpush1.msra.mxu0 0.0
    %1823 = vmatprep.subr.mxu0 0.0
    %1824 = vmatpush1.msra.mxu0 0.0
    %1825 = vmatprep.subr.mxu0 0.0
    %1826 = vmatpush1.msra.mxu0 0.0
    %1827 = vmatprep.subr.mxu0 0.0
    %1828 = vmatpush1.msra.mxu0 0.0
    %1829 = vmatprep.subr.mxu0 0.0
    %1830 = vmatpush1.msra.mxu0 0.0
    %1831 = vmatprep.subr.mxu0 0.0
    %1832 = vmatpush1.msra.mxu0 0.0
    %1833 = vmatprep.subr.mxu0 0.0
    %1834 = vmatpush1.msra.mxu0 0.0
    %1835 = vmatprep.subr.mxu0 0.0
    %1836 = vmatpush1.msra.mxu0 0.0
    %1837 = vmatprep.subr.mxu0 0.0
    %1838 = vmatpush1.msra.mxu0 0.0
    %1839 = vmatprep.subr.mxu0 0.0
    %1840 = vmatpush1.msra.mxu0 0.0
    %1841 = vmatprep.subr.mxu0 0.0
    %1842 = vmatpush1.msra.mxu0 0.0
    %1843 = vmatprep.subr.mxu0 0.0
    %1844 = vmatpush1.msra.mxu0 0.0
    %1845 = vmatprep.subr.mxu0 0.0
    %1846 = vmatpush1.msra.mxu0 0.0
    %1847 = vmatprep.subr.mxu0 0.0
    %1848 = vmatpush1.msra.mxu0 0.0
    %1849 = vmatprep.subr.mxu0 0.0
    %1850 = vmatpush1.msra.mxu0 0.0
    %1851 = vmatprep.subr.mxu0 0.0
    %1852 = vmatpush1.msra.mxu0 0.0
    %1853 = vmatprep.subr.mxu0 0.0
    %1854 = vmatpush1.msra.mxu0 0.0
    %1855 = vmatprep.subr.mxu0 0.0
    %1856 = vmatpush1.msra.mxu0 0.0
    %1857 = vmatprep.subr.mxu0 0.0
    %1858 = vmatpush1.msra.mxu0 0.0
    %1859 = vmatprep.subr.mxu0 0.0
    %1860 = vmatpush1.msra.mxu0 0.0
    %1861 = vmatprep.subr.mxu0 0.0
    %1862 = vmatpush1.msra.mxu0 0.0
    %1863 = vmatprep.subr.mxu0 0.0
    %1864 = vmatpush1.msra.mxu0 0.0
    %1865 = vmatprep.subr.mxu0 0.0
    %1866 = vmatpush1.msra.mxu0 0.0
    %1867 = vmatprep.mubr.f32.mxu0 0.0
    %1868 = vmatmul.mubr.f32.gmra.mrb[0].mxu0 %v1780
    %v1869 = vpop.f32.mrb[0].mxu0
    %v1870 = vadd.f32 %v1778, %v1869
    %v1871 = vpop.f32.mrb[0].mxu0
    %1872 = vmatprep.mubr.f32.mxu0 0.0
    %1873 = vmatmul.mubr.f32.gmra.mrb[0].mxu0 %v1783
    %v1874 = vpop.f32.mrb[0].mxu0
    %v1875 = vadd.f32 %v1778, %v1874
    %v1876 = vpop.f32.mrb[0].mxu0
    %1877 = vmatprep.mubr.f32.mxu0 0.0
    %1878 = vmatmul.mubr.f32.gmra.mrb[0].mxu0 %v1786
    %v1879 = vpop.f32.mrb[0].mxu0
    %v1880 = vadd.f32 %v1778, %v1879
    %v1881 = vpop.f32.mrb[0].mxu0
    %1882 = vmatprep.mubr.f32.mxu0 0.0
    %1883 = vmatmul.mubr.f32.gmra.mrb[0].mxu0 %v1789
    %v1884 = vpop.f32.mrb[0].mxu0
    %v1885 = vadd.f32 %v1778, %v1884
    %v1886 = vpop.f32.mrb[0].mxu0
    %1887 = vmatprep.mubr.f32.mxu0 0.0
    %1888 = vmatmul.mubr.f32.gmra.mrb[0].mxu0 %v1792
    %v1889 = vpop.f32.mrb[0].mxu0
    %v1890 = vadd.f32 %v1778, %v1889
    %v1891 = vpop.f32.mrb[0].mxu0
    %1892 = vmatprep.mubr.f32.mxu0 0.0
    %1893 = vmatmul.mubr.f32.gmra.mrb[0].mxu0 %v1795
    %v1894 = vpop.f32.mrb[0].mxu0
    %v1895 = vadd.f32 %v1778, %v1894
    %v1896 = vpop.f32.mrb[0].mxu0
    %1897 = vmatprep.mubr.f32.mxu0 0.0
    %1898 = vmatmul.mubr.f32.gmra.mrb[0].mxu0 %v1798
    %v1899 = vpop.f32.mrb[0].mxu0
    %v1900 = vadd.f32 %v1778, %v1899
    %v1901 = vpop.f32.mrb[0].mxu0
    %1902 = vmatprep.mubr.f32.mxu0 0.0
    %1903 = vmatmul.mubr.f32.gmra.mrb[0].mxu0 %v1801
    %v1904 = vpop.f32.mrb[0].mxu0
    %v1905 = vadd.f32 %v1778, %v1904
    %v1906 = vpop.f32.mrb[0].mxu0
    %1907 = vdwg.mxu0
    %v1908 = vadd.f32 %v1870, %v507
    %v1909 = vadd.f32 %v1875, %v508
    %v1910 = vadd.f32 %v1880, %v509
    %v1911 = vadd.f32 %v1885, %v510
    %v1912 = vadd.f32 %v1890, %v511
    %v1913 = vadd.f32 %v1895, %v512
    %v1914 = vadd.f32 %v1900, %v513
    %v1915 = vadd.f32 %v1905, %v514
    %v1916 = vsel %vm385, %v1908, 0.0
    %1917 = vadd.xlane.f32.xlu0 %v1916
    %v1918 = vpop.xlane.xlu0 %1917
    %v1919 = vsel %vm385, %v1909, 0.0
    %1920 = vadd.xlane.f32.xlu0 %v1919
    %v1921 = vpop.xlane.xlu0 %1920
    %v1922 = vsel %vm385, %v1910, 0.0
    %1923 = vadd.xlane.f32.xlu0 %v1922
    %v1924 = vpop.xlane.xlu0 %1923
    %v1925 = vsel %vm385, %v1911, 0.0
    %1926 = vadd.xlane.f32.xlu0 %v1925
    %v1927 = vpop.xlane.xlu0 %1926
    %v1928 = vsel %vm385, %v1912, 0.0
    %1929 = vadd.xlane.f32.xlu0 %v1928
    %v1930 = vpop.xlane.xlu0 %1929
    %v1931 = vsel %vm385, %v1913, 0.0
    %1932 = vadd.xlane.f32.xlu0 %v1931
    %v1933 = vpop.xlane.xlu0 %1932
    %v1934 = vsel %vm385, %v1914, 0.0
    %1935 = vadd.xlane.f32.xlu0 %v1934
    %v1936 = vpop.xlane.xlu0 %1935
    %v1937 = vsel %vm385, %v1915, 0.0
    %1938 = vadd.xlane.f32.xlu0 %v1937
    %v1939 = vpop.xlane.xlu0 %1938
    %v1940 = vmul.f32 %v1918, %v410
    %v1941 = vmul.f32 %v1921, %v410
    %v1942 = vmul.f32 %v1924, %v410
    %v1943 = vmul.f32 %v1927, %v410
    %v1944 = vmul.f32 %v1930, %v410
    %v1945 = vmul.f32 %v1933, %v410
    %v1946 = vmul.f32 %v1936, %v410
    %v1947 = vmul.f32 %v1939, %v410
    %v1948 = vsub.f32 %v1908, %v1940
    %v1949 = vsub.f32 %v1909, %v1941
    %v1950 = vsub.f32 %v1910, %v1942
    %v1951 = vsub.f32 %v1911, %v1943
    %v1952 = vsub.f32 %v1912, %v1944
    %v1953 = vsub.f32 %v1913, %v1945
    %v1954 = vsub.f32 %v1914, %v1946
    %v1955 = vsub.f32 %v1915, %v1947
    %v1956 = vmul.f32 %v1948, %v1948
    %v1957 = vmul.f32 %v1949, %v1949
    %v1958 = vmul.f32 %v1950, %v1950
    %v1959 = vmul.f32 %v1951, %v1951
    %v1960 = vmul.f32 %v1952, %v1952
    %v1961 = vmul.f32 %v1953, %v1953
    %v1962 = vmul.f32 %v1954, %v1954
    %v1963 = vmul.f32 %v1955, %v1955
    %v1964 = vsel %vm385, %v1956, 0.0
    %1965 = vadd.xlane.f32.xlu0 %v1964
    %v1966 = vpop.xlane.xlu0 %1965
    %v1967 = vsel %vm385, %v1957, 0.0
    %1968 = vadd.xlane.f32.xlu0 %v1967
    %v1969 = vpop.xlane.xlu0 %1968
    %v1970 = vsel %vm385, %v1958, 0.0
    %1971 = vadd.xlane.f32.xlu0 %v1970
    %v1972 = vpop.xlane.xlu0 %1971
    %v1973 = vsel %vm385, %v1959, 0.0
    %1974 = vadd.xlane.f32.xlu0 %v1973
    %v1975 = vpop.xlane.xlu0 %1974
    %v1976 = vsel %vm385, %v1960, 0.0
    %1977 = vadd.xlane.f32.xlu0 %v1976
    %v1978 = vpop.xlane.xlu0 %1977
    %v1979 = vsel %vm385, %v1961, 0.0
    %1980 = vadd.xlane.f32.xlu0 %v1979
    %v1981 = vpop.xlane.xlu0 %1980
    %v1982 = vsel %vm385, %v1962, 0.0
    %1983 = vadd.xlane.f32.xlu0 %v1982
    %v1984 = vpop.xlane.xlu0 %1983
    %v1985 = vsel %vm385, %v1963, 0.0
    %1986 = vadd.xlane.f32.xlu0 %v1985
    %v1987 = vpop.xlane.xlu0 %1986
    %v1988 = vmul.f32 %v1966, %v410
    %v1989 = vmul.f32 %v1969, %v410
    %v1990 = vmul.f32 %v1972, %v410
    %v1991 = vmul.f32 %v1975, %v410
    %v1992 = vmul.f32 %v1978, %v410
    %v1993 = vmul.f32 %v1981, %v410
    %v1994 = vmul.f32 %v1984, %v410
    %v1995 = vmul.f32 %v1987, %v410
    %v1996 = vadd.f32 %v1988, 1e-12
    %v1997 = vadd.f32 %v1989, 1e-12
    %v1998 = vadd.f32 %v1990, 1e-12
    %v1999 = vadd.f32 %v1991, 1e-12
    %v2000 = vadd.f32 %v1992, 1e-12
    %v2001 = vadd.f32 %v1993, 1e-12
    %v2002 = vadd.f32 %v1994, 1e-12
    %v2003 = vadd.f32 %v1995, 1e-12
    %v2004 = vrsqrt.pop %v1996
    %v2005 = vrsqrt.pop %v1997
    %v2006 = vrsqrt.pop %v1998
    %v2007 = vrsqrt.pop %v1999
    %v2008 = vrsqrt.pop %v2000
    %v2009 = vrsqrt.pop %v2001
    %v2010 = vrsqrt.pop %v2002
    %v2011 = vrsqrt.pop %v2003
    %v2012 = vmul.f32 %v1948, %v2004
    %v2013 = vmul.f32 %v1949, %v2005
    %v2014 = vmul.f32 %v1950, %v2006
    %v2015 = vmul.f32 %v1951, %v2007
    %v2016 = vmul.f32 %v1952, %v2008
    %v2017 = vmul.f32 %v1953, %v2009
    %v2018 = vmul.f32 %v1954, %v2010
    %v2019 = vmul.f32 %v1955, %v2011
    %v2020 = vlaneseq
    %v2021 = vshrl.u32 %v2020, 7
    %v2022 = vsub.s32 0, %v2021
    %v2023 = vrot.slane %v566, %v2022
    %v2024 = vmul.f32 %v2012, %v2023
    %v2025 = vmul.f32 %v2013, %v2023
    %v2026 = vmul.f32 %v2014, %v2023
    %v2027 = vmul.f32 %v2015, %v2023
    %v2028 = vmul.f32 %v2016, %v2023
    %v2029 = vmul.f32 %v2017, %v2023
    %v2030 = vmul.f32 %v2018, %v2023
    %v2031 = vmul.f32 %v2019, %v2023
    %v2032 = vlaneseq
    %v2033 = vshrl.u32 %v2032, 7
    %v2034 = vsub.s32 0, %v2033
    %v2035 = vrot.slane %v567, %v2034
    %v2036 = vadd.f32 %v2024, %v2035
    %v2037 = vadd.f32 %v2025, %v2035
    %v2038 = vadd.f32 %v2026, %v2035
    %v2039 = vadd.f32 %v2027, %v2035
    %v2040 = vadd.f32 %v2028, %v2035
    %v2041 = vadd.f32 %v2029, %v2035
    %v2042 = vadd.f32 %v2030, %v2035
    %v2043 = vadd.f32 %v2031, %v2035
    %v2044 = vlaneseq
    %v2045 = vshrl.u32 %v2044, 7
    %v2046 = vsub.s32 0, %v2045
    %v2047 = vrot.slane %v564, %v2046
    %v2049 = vsel %vm385, %v2036, 0
    %v2052 = vsel %vm385, %v2037, 0
    %v2055 = vsel %vm385, %v2038, 0
    %v2058 = vsel %vm385, %v2039, 0
    %v2061 = vsel %vm385, %v2040, 0
    %v2064 = vsel %vm385, %v2041, 0
    %v2067 = vsel %vm385, %v2042, 0
    %v2070 = vsel %vm385, %v2043, 0
    %2072 = vmatprep.subr.mxu0 0.0
    %2073 = vmatpush1.msra.mxu0 %v548
    %2074 = vmatprep.subr.mxu0 0.0
    %2075 = vmatpush1.msra.mxu0 %v549
    %2076 = vmatprep.subr.mxu0 0.0
    %2077 = vmatpush1.msra.mxu0 %v550
    %2078 = vmatprep.subr.mxu0 0.0
    %2079 = vmatpush1.msra.mxu0 %v551
    %2080 = vmatprep.subr.mxu0 0.0
    %2081 = vmatpush1.msra.mxu0 0.0
    %2082 = vmatprep.subr.mxu0 0.0
    %2083 = vmatpush1.msra.mxu0 0.0
    %2084 = vmatprep.subr.mxu0 0.0
    %2085 = vmatpush1.msra.mxu0 0.0
    %2086 = vmatprep.subr.mxu0 0.0
    %2087 = vmatpush1.msra.mxu0 0.0
    %2088 = vmatprep.subr.mxu0 0.0
    %2089 = vmatpush1.msra.mxu0 0.0
    %2090 = vmatprep.subr.mxu0 0.0
    %2091 = vmatpush1.msra.mxu0 0.0
    %2092 = vmatprep.subr.mxu0 0.0
    %2093 = vmatpush1.msra.mxu0 0.0
    %2094 = vmatprep.subr.mxu0 0.0
    %2095 = vmatpush1.msra.mxu0 0.0
    %2096 = vmatprep.subr.mxu0 0.0
    %2097 = vmatpush1.msra.mxu0 0.0
    %2098 = vmatprep.subr.mxu0 0.0
    %2099 = vmatpush1.msra.mxu0 0.0
    %2100 = vmatprep.subr.mxu0 0.0
    %2101 = vmatpush1.msra.mxu0 0.0
    %2102 = vmatprep.subr.mxu0 0.0
    %2103 = vmatpush1.msra.mxu0 0.0
    %2104 = vmatprep.subr.mxu0 0.0
    %2105 = vmatpush1.msra.mxu0 0.0
    %2106 = vmatprep.subr.mxu0 0.0
    %2107 = vmatpush1.msra.mxu0 0.0
    %2108 = vmatprep.subr.mxu0 0.0
    %2109 = vmatpush1.msra.mxu0 0.0
    %2110 = vmatprep.subr.mxu0 0.0
    %2111 = vmatpush1.msra.mxu0 0.0
    %2112 = vmatprep.subr.mxu0 0.0
    %2113 = vmatpush1.msra.mxu0 0.0
    %2114 = vmatprep.subr.mxu0 0.0
    %2115 = vmatpush1.msra.mxu0 0.0
    %2116 = vmatprep.subr.mxu0 0.0
    %2117 = vmatpush1.msra.mxu0 0.0
    %2118 = vmatprep.subr.mxu0 0.0
    %2119 = vmatpush1.msra.mxu0 0.0
    %2120 = vmatprep.subr.mxu0 0.0
    %2121 = vmatpush1.msra.mxu0 0.0
    %2122 = vmatprep.subr.mxu0 0.0
    %2123 = vmatpush1.msra.mxu0 0.0
    %2124 = vmatprep.subr.mxu0 0.0
    %2125 = vmatpush1.msra.mxu0 0.0
    %2126 = vmatprep.subr.mxu0 0.0
    %2127 = vmatpush1.msra.mxu0 0.0
    %2128 = vmatprep.subr.mxu0 0.0
    %2129 = vmatpush1.msra.mxu0 0.0
    %2130 = vmatprep.subr.mxu0 0.0
    %2131 = vmatpush1.msra.mxu0 0.0
    %2132 = vmatprep.subr.mxu0 0.0
    %2133 = vmatpush1.msra.mxu0 0.0
    %2134 = vmatprep.subr.mxu0 0.0
    %2135 = vmatpush1.msra.mxu0 0.0
    %2136 = vmatprep.mubr.f32.mxu0 0.0
    %2137 = vmatmul.mubr.f32.gmra.mrb[0].mxu0 %v2049
    %v2138 = vpop.f32.mrb[0].mxu0
    %v2139 = vadd.f32 %v2047, %v2138
    %v2140 = vpop.f32.mrb[0].mxu0
    %2141 = vmatprep.mubr.f32.mxu0 0.0
    %2142 = vmatmul.mubr.f32.gmra.mrb[0].mxu0 %v2052
    %v2143 = vpop.f32.mrb[0].mxu0
    %v2144 = vadd.f32 %v2047, %v2143
    %v2145 = vpop.f32.mrb[0].mxu0
    %2146 = vmatprep.mubr.f32.mxu0 0.0
    %2147 = vmatmul.mubr.f32.gmra.mrb[0].mxu0 %v2055
    %v2148 = vpop.f32.mrb[0].mxu0
    %v2149 = vadd.f32 %v2047, %v2148
    %v2150 = vpop.f32.mrb[0].mxu0
    %2151 = vmatprep.mubr.f32.mxu0 0.0
    %2152 = vmatmul.mubr.f32.gmra.mrb[0].mxu0 %v2058
    %v2153 = vpop.f32.mrb[0].mxu0
    %v2154 = vadd.f32 %v2047, %v2153
    %v2155 = vpop.f32.mrb[0].mxu0
    %2156 = vmatprep.mubr.f32.mxu0 0.0
    %2157 = vmatmul.mubr.f32.gmra.mrb[0].mxu0 %v2061
    %v2158 = vpop.f32.mrb[0].mxu0
    %v2159 = vadd.f32 %v2047, %v2158
    %v2160 = vpop.f32.mrb[0].mxu0
    %2161 = vmatprep.mubr.f32.mxu0 0.0
    %2162 = vmatmul.mubr.f32.gmra.mrb[0].mxu0 %v2064
    %v2163 = vpop.f32.mrb[0].mxu0
    %v2164 = vadd.f32 %v2047, %v2163
    %v2165 = vpop.f32.mrb[0].mxu0
    %2166 = vmatprep.mubr.f32.mxu0 0.0
    %2167 = vmatmul.mubr.f32.gmra.mrb[0].mxu0 %v2067
    %v2168 = vpop.f32.mrb[0].mxu0
    %v2169 = vadd.f32 %v2047, %v2168
    %v2170 = vpop.f32.mrb[0].mxu0
    %2171 = vmatprep.mubr.f32.mxu0 0.0
    %2172 = vmatmul.mubr.f32.gmra.mrb[0].mxu0 %v2070
    %v2173 = vpop.f32.mrb[0].mxu0
    %v2174 = vadd.f32 %v2047, %v2173
    %v2175 = vpop.f32.mrb[0].mxu0
    %2176 = vdwg.mxu0
    %v2177 = vmul.f32 %v2139, %v2139
    %v2178 = vmul.f32 %v2144, %v2144
    %v2179 = vmul.f32 %v2149, %v2149
    %v2180 = vmul.f32 %v2154, %v2154
    %v2181 = vmul.f32 %v2159, %v2159
    %v2182 = vmul.f32 %v2164, %v2164
    %v2183 = vmul.f32 %v2169, %v2169
    %v2184 = vmul.f32 %v2174, %v2174
    %v2185 = vmul.f32 %v2139, %v2177
    %v2186 = vmul.f32 %v2144, %v2178
    %v2187 = vmul.f32 %v2149, %v2179
    %v2188 = vmul.f32 %v2154, %v2180
    %v2189 = vmul.f32 %v2159, %v2181
    %v2190 = vmul.f32 %v2164, %v2182
    %v2191 = vmul.f32 %v2169, %v2183
    %v2192 = vmul.f32 %v2174, %v2184
    %v2193 = vmul.f32 %v2185, 0.044715
    %v2194 = vmul.f32 %v2186, 0.044715
    %v2195 = vmul.f32 %v2187, 0.044715
    %v2196 = vmul.f32 %v2188, 0.044715
    %v2197 = vmul.f32 %v2189, 0.044715
    %v2198 = vmul.f32 %v2190, 0.044715
    %v2199 = vmul.f32 %v2191, 0.044715
    %v2200 = vmul.f32 %v2192, 0.044715
    %v2201 = vadd.f32 %v2139, %v2193
    %v2202 = vadd.f32 %v2144, %v2194
    %v2203 = vadd.f32 %v2149, %v2195
    %v2204 = vadd.f32 %v2154, %v2196
    %v2205 = vadd.f32 %v2159, %v2197
    %v2206 = vadd.f32 %v2164, %v2198
    %v2207 = vadd.f32 %v2169, %v2199
    %v2208 = vadd.f32 %v2174, %v2200
    %v2209 = vmul.f32 %v2201, 0.7978846
    %v2210 = vmul.f32 %v2202, 0.7978846
    %v2211 = vmul.f32 %v2203, 0.7978846
    %v2212 = vmul.f32 %v2204, 0.7978846
    %v2213 = vmul.f32 %v2205, 0.7978846
    %v2214 = vmul.f32 %v2206, 0.7978846
    %v2215 = vmul.f32 %v2207, 0.7978846
    %v2216 = vmul.f32 %v2208, 0.7978846
    %v2217 = vtanh.pop %v2209
    %v2218 = vtanh.pop %v2210
    %v2219 = vtanh.pop %v2211
    %v2220 = vtanh.pop %v2212
    %v2221 = vtanh.pop %v2213
    %v2222 = vtanh.pop %v2214
    %v2223 = vtanh.pop %v2215
    %v2224 = vtanh.pop %v2216
    %v2225 = vadd.f32 %v2217, 1.0
    %v2226 = vadd.f32 %v2218, 1.0
    %v2227 = vadd.f32 %v2219, 1.0
    %v2228 = vadd.f32 %v2220, 1.0
    %v2229 = vadd.f32 %v2221, 1.0
    %v2230 = vadd.f32 %v2222, 1.0
    %v2231 = vadd.f32 %v2223, 1.0
    %v2232 = vadd.f32 %v2224, 1.0
    %v2233 = vmul.f32 %v2225, 0.5
    %v2234 = vmul.f32 %v2226, 0.5
    %v2235 = vmul.f32 %v2227, 0.5
    %v2236 = vmul.f32 %v2228, 0.5
    %v2237 = vmul.f32 %v2229, 0.5
    %v2238 = vmul.f32 %v2230, 0.5
    %v2239 = vmul.f32 %v2231, 0.5
    %v2240 = vmul.f32 %v2232, 0.5
    %v2241 = vmul.f32 %v2139, %v2233
    %v2242 = vmul.f32 %v2144, %v2234
    %v2243 = vmul.f32 %v2149, %v2235
    %v2244 = vmul.f32 %v2154, %v2236
    %v2245 = vmul.f32 %v2159, %v2237
    %v2246 = vmul.f32 %v2164, %v2238
    %v2247 = vmul.f32 %v2169, %v2239
    %v2248 = vmul.f32 %v2174, %v2240
    %v2249 = vlaneseq
    %v2250 = vshrl.u32 %v2249, 7
    %v2251 = vsub.s32 0, %v2250
    %v2252 = vrot.slane %v565, %v2251
    %v2254 = vsel %vm1091, %v2241, 0
    %v2257 = vsel %vm1091, %v2242, 0
    %v2260 = vsel %vm1091, %v2243, 0
    %v2263 = vsel %vm1091, %v2244, 0
    %v2266 = vsel %vm1091, %v2245, 0
    %v2269 = vsel %vm1091, %v2246, 0
    %v2272 = vsel %vm1091, %v2247, 0
    %v2275 = vsel %vm1091, %v2248, 0
    %2277 = vmatprep.subr.mxu0 0.0
    %2278 = vmatpush1.msra.mxu0 %v552
    %2279 = vmatprep.subr.mxu0 0.0
    %2280 = vmatpush1.msra.mxu0 %v553
    %2281 = vmatprep.subr.mxu0 0.0
    %2282 = vmatpush1.msra.mxu0 %v554
    %2283 = vmatprep.subr.mxu0 0.0
    %2284 = vmatpush1.msra.mxu0 %v555
    %2285 = vmatprep.subr.mxu0 0.0
    %2286 = vmatpush1.msra.mxu0 %v556
    %2287 = vmatprep.subr.mxu0 0.0
    %2288 = vmatpush1.msra.mxu0 %v557
    %2289 = vmatprep.subr.mxu0 0.0
    %2290 = vmatpush1.msra.mxu0 %v558
    %2291 = vmatprep.subr.mxu0 0.0
    %2292 = vmatpush1.msra.mxu0 %v559
    %2293 = vmatprep.subr.mxu0 0.0
    %2294 = vmatpush1.msra.mxu0 0.0
    %2295 = vmatprep.subr.mxu0 0.0
    %2296 = vmatpush1.msra.mxu0 0.0
    %2297 = vmatprep.subr.mxu0 0.0
    %2298 = vmatpush1.msra.mxu0 0.0
    %2299 = vmatprep.subr.mxu0 0.0
    %2300 = vmatpush1.msra.mxu0 0.0
    %2301 = vmatprep.subr.mxu0 0.0
    %2302 = vmatpush1.msra.mxu0 0.0
    %2303 = vmatprep.subr.mxu0 0.0
    %2304 = vmatpush1.msra.mxu0 0.0
    %2305 = vmatprep.subr.mxu0 0.0
    %2306 = vmatpush1.msra.mxu0 0.0
    %2307 = vmatprep.subr.mxu0 0.0
    %2308 = vmatpush1.msra.mxu0 0.0
    %2309 = vmatprep.subr.mxu0 0.0
    %2310 = vmatpush1.msra.mxu0 0.0
    %2311 = vmatprep.subr.mxu0 0.0
    %2312 = vmatpush1.msra.mxu0 0.0
    %2313 = vmatprep.subr.mxu0 0.0
    %2314 = vmatpush1.msra.mxu0 0.0
    %2315 = vmatprep.subr.mxu0 0.0
    %2316 = vmatpush1.msra.mxu0 0.0
    %2317 = vmatprep.subr.mxu0 0.0
    %2318 = vmatpush1.msra.mxu0 0.0
    %2319 = vmatprep.subr.mxu0 0.0
    %2320 = vmatpush1.msra.mxu0 0.0
    %2321 = vmatprep.subr.mxu0 0.0
    %2322 = vmatpush1.msra.mxu0 0.0
    %2323 = vmatprep.subr.mxu0 0.0
    %2324 = vmatpush1.msra.mxu0 0.0
    %2325 = vmatprep.subr.mxu0 0.0
    %2326 = vmatpush1.msra.mxu0 0.0
    %2327 = vmatprep.subr.mxu0 0.0
    %2328 = vmatpush1.msra.mxu0 0.0
    %2329 = vmatprep.subr.mxu0 0.0
    %2330 = vmatpush1.msra.mxu0 0.0
    %2331 = vmatprep.subr.mxu0 0.0
    %2332 = vmatpush1.msra.mxu0 0.0
    %2333 = vmatprep.subr.mxu0 0.0
    %2334 = vmatpush1.msra.mxu0 0.0
    %2335 = vmatprep.subr.mxu0 0.0
    %2336 = vmatpush1.msra.mxu0 0.0
    %2337 = vmatprep.subr.mxu0 0.0
    %2338 = vmatpush1.msra.mxu0 0.0
    %2339 = vmatprep.subr.mxu0 0.0
    %2340 = vmatpush1.msra.mxu0 0.0
    %2341 = vmatprep.mubr.f32.mxu0 0.0
    %2342 = vmatmul.mubr.f32.gmra.mrb[0].mxu0 %v2254
    %v2343 = vpop.f32.mrb[0].mxu0
    %v2344 = vadd.f32 %v2252, %v2343
    %v2345 = vpop.f32.mrb[0].mxu0
    %2346 = vmatprep.mubr.f32.mxu0 0.0
    %2347 = vmatmul.mubr.f32.gmra.mrb[0].mxu0 %v2257
    %v2348 = vpop.f32.mrb[0].mxu0
    %v2349 = vadd.f32 %v2252, %v2348
    %v2350 = vpop.f32.mrb[0].mxu0
    %2351 = vmatprep.mubr.f32.mxu0 0.0
    %2352 = vmatmul.mubr.f32.gmra.mrb[0].mxu0 %v2260
    %v2353 = vpop.f32.mrb[0].mxu0
    %v2354 = vadd.f32 %v2252, %v2353
    %v2355 = vpop.f32.mrb[0].mxu0
    %2356 = vmatprep.mubr.f32.mxu0 0.0
    %2357 = vmatmul.mubr.f32.gmra.mrb[0].mxu0 %v2263
    %v2358 = vpop.f32.mrb[0].mxu0
    %v2359 = vadd.f32 %v2252, %v2358
    %v2360 = vpop.f32.mrb[0].mxu0
    %2361 = vmatprep.mubr.f32.mxu0 0.0
    %2362 = vmatmul.mubr.f32.gmra.mrb[0].mxu0 %v2266
    %v2363 = vpop.f32.mrb[0].mxu0
    %v2364 = vadd.f32 %v2252, %v2363
    %v2365 = vpop.f32.mrb[0].mxu0
    %2366 = vmatprep.mubr.f32.mxu0 0.0
    %2367 = vmatmul.mubr.f32.gmra.mrb[0].mxu0 %v2269
    %v2368 = vpop.f32.mrb[0].mxu0
    %v2369 = vadd.f32 %v2252, %v2368
    %v2370 = vpop.f32.mrb[0].mxu0
    %2371 = vmatprep.mubr.f32.mxu0 0.0
    %2372 = vmatmul.mubr.f32.gmra.mrb[0].mxu0 %v2272
    %v2373 = vpop.f32.mrb[0].mxu0
    %v2374 = vadd.f32 %v2252, %v2373
    %v2375 = vpop.f32.mrb[0].mxu0
    %2376 = vmatprep.mubr.f32.mxu0 0.0
    %2377 = vmatmul.mubr.f32.gmra.mrb[0].mxu0 %v2275
    %v2378 = vpop.f32.mrb[0].mxu0
    %v2379 = vadd.f32 %v2252, %v2378
    %v2380 = vpop.f32.mrb[0].mxu0
    %2381 = vdwg.mxu0
    %v2382 = vadd.f32 %v2344, %v2036
    %v2383 = vadd.f32 %v2349, %v2037
    %v2384 = vadd.f32 %v2354, %v2038
    %v2385 = vadd.f32 %v2359, %v2039
    %v2386 = vadd.f32 %v2364, %v2040
    %v2387 = vadd.f32 %v2369, %v2041
    %v2388 = vadd.f32 %v2374, %v2042
    %v2389 = vadd.f32 %v2379, %v2043
    %v2390 = vsel %vm385, %v2382, 0.0
    %2391 = vadd.xlane.f32.xlu0 %v2390
    %v2392 = vpop.xlane.xlu0 %2391
    %v2393 = vsel %vm385, %v2383, 0.0
    %2394 = vadd.xlane.f32.xlu0 %v2393
    %v2395 = vpop.xlane.xlu0 %2394
    %v2396 = vsel %vm385, %v2384, 0.0
    %2397 = vadd.xlane.f32.xlu0 %v2396
    %v2398 = vpop.xlane.xlu0 %2397
    %v2399 = vsel %vm385, %v2385, 0.0
    %2400 = vadd.xlane.f32.xlu0 %v2399
    %v2401 = vpop.xlane.xlu0 %2400
    %v2402 = vsel %vm385, %v2386, 0.0
    %2403 = vadd.xlane.f32.xlu0 %v2402
    %v2404 = vpop.xlane.xlu0 %2403
    %v2405 = vsel %vm385, %v2387, 0.0
    %2406 = vadd.xlane.f32.xlu0 %v2405
    %v2407 = vpop.xlane.xlu0 %2406
    %v2408 = vsel %vm385, %v2388, 0.0
    %2409 = vadd.xlane.f32.xlu0 %v2408
    %v2410 = vpop.xlane.xlu0 %2409
    %v2411 = vsel %vm385, %v2389, 0.0
    %2412 = vadd.xlane.f32.xlu0 %v2411
    %v2413 = vpop.xlane.xlu0 %2412
    %v2414 = vmul.f32 %v2392, %v410
    %v2415 = vmul.f32 %v2395, %v410
    %v2416 = vmul.f32 %v2398, %v410
    %v2417 = vmul.f32 %v2401, %v410
    %v2418 = vmul.f32 %v2404, %v410
    %v2419 = vmul.f32 %v2407, %v410
    %v2420 = vmul.f32 %v2410, %v410
    %v2421 = vmul.f32 %v2413, %v410
    %v2422 = vsub.f32 %v2382, %v2414
    %v2423 = vsub.f32 %v2383, %v2415
    %v2424 = vsub.f32 %v2384, %v2416
    %v2425 = vsub.f32 %v2385, %v2417
    %v2426 = vsub.f32 %v2386, %v2418
    %v2427 = vsub.f32 %v2387, %v2419
    %v2428 = vsub.f32 %v2388, %v2420
    %v2429 = vsub.f32 %v2389, %v2421
    %v2430 = vmul.f32 %v2422, %v2422
    %v2431 = vmul.f32 %v2423, %v2423
    %v2432 = vmul.f32 %v2424, %v2424
    %v2433 = vmul.f32 %v2425, %v2425
    %v2434 = vmul.f32 %v2426, %v2426
    %v2435 = vmul.f32 %v2427, %v2427
    %v2436 = vmul.f32 %v2428, %v2428
    %v2437 = vmul.f32 %v2429, %v2429
    %v2438 = vsel %vm385, %v2430, 0.0
    %2439 = vadd.xlane.f32.xlu0 %v2438
    %v2440 = vpop.xlane.xlu0 %2439
    %v2441 = vsel %vm385, %v2431, 0.0
    %2442 = vadd.xlane.f32.xlu0 %v2441
    %v2443 = vpop.xlane.xlu0 %2442
    %v2444 = vsel %vm385, %v2432, 0.0
    %2445 = vadd.xlane.f32.xlu0 %v2444
    %v2446 = vpop.xlane.xlu0 %2445
    %v2447 = vsel %vm385, %v2433, 0.0
    %2448 = vadd.xlane.f32.xlu0 %v2447
    %v2449 = vpop.xlane.xlu0 %2448
    %v2450 = vsel %vm385, %v2434, 0.0
    %2451 = vadd.xlane.f32.xlu0 %v2450
    %v2452 = vpop.xlane.xlu0 %2451
    %v2453 = vsel %vm385, %v2435, 0.0
    %2454 = vadd.xlane.f32.xlu0 %v2453
    %v2455 = vpop.xlane.xlu0 %2454
    %v2456 = vsel %vm385, %v2436, 0.0
    %2457 = vadd.xlane.f32.xlu0 %v2456
    %v2458 = vpop.xlane.xlu0 %2457
    %v2459 = vsel %vm385, %v2437, 0.0
    %2460 = vadd.xlane.f32.xlu0 %v2459
    %v2461 = vpop.xlane.xlu0 %2460
    %v2462 = vmul.f32 %v2440, %v410
    %v2463 = vmul.f32 %v2443, %v410
    %v2464 = vmul.f32 %v2446, %v410
    %v2465 = vmul.f32 %v2449, %v410
    %v2466 = vmul.f32 %v2452, %v410
    %v2467 = vmul.f32 %v2455, %v410
    %v2468 = vmul.f32 %v2458, %v410
    %v2469 = vmul.f32 %v2461, %v410
    %v2470 = vadd.f32 %v2462, 1e-12
    %v2471 = vadd.f32 %v2463, 1e-12
    %v2472 = vadd.f32 %v2464, 1e-12
    %v2473 = vadd.f32 %v2465, 1e-12
    %v2474 = vadd.f32 %v2466, 1e-12
    %v2475 = vadd.f32 %v2467, 1e-12
    %v2476 = vadd.f32 %v2468, 1e-12
    %v2477 = vadd.f32 %v2469, 1e-12
    %v2478 = vrsqrt.pop %v2470
    %v2479 = vrsqrt.pop %v2471
    %v2480 = vrsqrt.pop %v2472
    %v2481 = vrsqrt.pop %v2473
    %v2482 = vrsqrt.pop %v2474
    %v2483 = vrsqrt.pop %v2475
    %v2484 = vrsqrt.pop %v2476
    %v2485 = vrsqrt.pop %v2477
    %v2486 = vmul.f32 %v2422, %v2478
    %v2487 = vmul.f32 %v2423, %v2479
    %v2488 = vmul.f32 %v2424, %v2480
    %v2489 = vmul.f32 %v2425, %v2481
    %v2490 = vmul.f32 %v2426, %v2482
    %v2491 = vmul.f32 %v2427, %v2483
    %v2492 = vmul.f32 %v2428, %v2484
    %v2493 = vmul.f32 %v2429, %v2485
    %v2494 = vlaneseq
    %v2495 = vshrl.u32 %v2494, 7
    %v2496 = vsub.s32 0, %v2495
    %v2497 = vrot.slane %v568, %v2496
    %v2498 = vmul.f32 %v2486, %v2497
    %v2499 = vmul.f32 %v2487, %v2497
    %v2500 = vmul.f32 %v2488, %v2497
    %v2501 = vmul.f32 %v2489, %v2497
    %v2502 = vmul.f32 %v2490, %v2497
    %v2503 = vmul.f32 %v2491, %v2497
    %v2504 = vmul.f32 %v2492, %v2497
    %v2505 = vmul.f32 %v2493, %v2497
    %v2506 = vlaneseq
    %v2507 = vshrl.u32 %v2506, 7
    %v2508 = vsub.s32 0, %v2507
    %v2509 = vrot.slane %v569, %v2508
    %v2510 = vadd.f32 %v2498, %v2509
    %v2511 = vadd.f32 %v2499, %v2509
    %v2512 = vadd.f32 %v2500, %v2509
    %v2513 = vadd.f32 %v2501, %v2509
    %v2514 = vadd.f32 %v2502, %v2509
    %v2515 = vadd.f32 %v2503, %v2509
    %v2516 = vadd.f32 %v2504, %v2509
    %v2517 = vadd.f32 %v2505, %v2509
    %v2518 = vld [vmem:[#allocation2 + $0xf0] sm:$0xff]
    %v2519 = vld [vmem:[#allocation2 + $0xf8] sm:$0xff]
    %v2520 = vld [vmem:[#allocation2 + $0x100] sm:$0xff]
    %v2521 = vld [vmem:[#allocation2 + $0x108] sm:$0xff]
    %v2522 = vld [vmem:[#allocation2 + $0x110] sm:$0xff]
    %v2523 = vld [vmem:[#allocation2 + $0x118] sm:$0xff]
    %v2524 = vld [vmem:[#allocation2 + $0x120] sm:$0xff]
    %v2525 = vld [vmem:[#allocation2 + $0x128] sm:$0xff]
    %v2526 = vld [vmem:[#allocation2 + $0x130] sm:$0xff]
    %v2527 = vld [vmem:[#allocation2 + $0x138] sm:$0xff]
    %v2528 = vld [vmem:[#allocation2 + $0x140] sm:$0xff]
    %v2529 = vld [vmem:[#allocation2 + $0x148] sm:$0xff]
    %v2530 = vld [vmem:[#allocation2 + $0x150] sm:$0xff]
    %v2531 = vld [vmem:[#allocation2 + $0x158] sm:$0xff]
    %v2532 = vld [vmem:[#allocation2 + $0x160] sm:$0xff]
    %v2533 = vld [vmem:[#allocation2 + $0x168] sm:$0xff]
    %v2534 = vld [vmem:[#allocation2 + $0x170] sm:$0xff]
    %v2535 = vld [vmem:[#allocation2 + $0x178] sm:$0xff]
    %v2536 = vld [vmem:[#allocation2 + $0x180] sm:$0xff]
    %v2537 = vld [vmem:[#allocation2 + $0x188] sm:$0xff]
    %v2538 = vld [vmem:[#allocation2 + $0x190] sm:$0xff]
    %v2539 = vld [vmem:[#allocation2 + $0x198] sm:$0xff]
    %v2540 = vld [vmem:[#allocation2 + $0x1a0] sm:$0xff]
    %v2541 = vld [vmem:[#allocation2 + $0x1a8] sm:$0xff]
    %v2542 = vld [vmem:[#allocation2 + $0x1b0] sm:$0xff]
    %v2543 = vld [vmem:[#allocation2 + $0x1b8] sm:$0xff]
    %v2544 = vld [vmem:[#allocation2 + $0x1c0] sm:$0xff]
    %v2545 = vld [vmem:[#allocation2 + $0x1c8] sm:$0xff]
    %v2546 = vld [vmem:[#allocation2 + $0x1d0] sm:$0x1]
    %v2547 = vld [vmem:[#allocation2 + $0x1d1] sm:$0x1]
    %v2548 = vld [vmem:[#allocation2 + $0x1d2] sm:$0x1]
    %v2549 = vld [vmem:[#allocation2 + $0x1d3] sm:$0x1]
    %v2550 = vld [vmem:[#allocation2 + $0x1d4] sm:$0x1]
    %v2551 = vld [vmem:[#allocation2 + $0x1d5] sm:$0x1]
    %v2552 = vld [vmem:[#allocation2 + $0x1d6] sm:$0x1]
    %v2553 = vld [vmem:[#allocation2 + $0x1d7] sm:$0x1]
    %v2554 = vld [vmem:[#allocation2 + $0x1d8] sm:$0x1]
    %v2555 = vld [vmem:[#allocation2 + $0x1d9] sm:$0x1]
    %v2556 = vlaneseq
    %v2557 = vshrl.u32 %v2556, 7
    %v2558 = vsub.s32 0, %v2557
    %v2559 = vrot.slane %v2546, %v2558
    %v2561 = vsel %vm385, %v2510, 0
    %v2564 = vsel %vm385, %v2511, 0
    %v2567 = vsel %vm385, %v2512, 0
    %v2570 = vsel %vm385, %v2513, 0
    %v2573 = vsel %vm385, %v2514, 0
    %v2576 = vsel %vm385, %v2515, 0
    %v2579 = vsel %vm385, %v2516, 0
    %v2582 = vsel %vm385, %v2517, 0
    %2584 = vmatprep.subr.mxu0 0.0
    %2585 = vmatpush1.msra.mxu0 %v2518
    %2586 = vmatprep.subr.mxu0 0.0
    %2587 = vmatpush1.msra.mxu0 %v2519
    %2588 = vmatprep.subr.mxu0 0.0
    %2589 = vmatpush1.msra.mxu0 %v2520
    %2590 = vmatprep.subr.mxu0 0.0
    %2591 = vmatpush1.msra.mxu0 %v2521
    %2592 = vmatprep.subr.mxu0 0.0
    %2593 = vmatpush1.msra.mxu0 0.0
    %2594 = vmatprep.subr.mxu0 0.0
    %2595 = vmatpush1.msra.mxu0 0.0
    %2596 = vmatprep.subr.mxu0 0.0
    %2597 = vmatpush1.msra.mxu0 0.0
    %2598 = vmatprep.subr.mxu0 0.0
    %2599 = vmatpush1.msra.mxu0 0.0
    %2600 = vmatprep.subr.mxu0 0.0
    %2601 = vmatpush1.msra.mxu0 0.0
    %2602 = vmatprep.subr.mxu0 0.0
    %2603 = vmatpush1.msra.mxu0 0.0
    %2604 = vmatprep.subr.mxu0 0.0
    %2605 = vmatpush1.msra.mxu0 0.0
    %2606 = vmatprep.subr.mxu0 0.0
    %2607 = vmatpush1.msra.mxu0 0.0
    %2608 = vmatprep.subr.mxu0 0.0
    %2609 = vmatpush1.msra.mxu0 0.0
    %2610 = vmatprep.subr.mxu0 0.0
    %2611 = vmatpush1.msra.mxu0 0.0
    %2612 = vmatprep.subr.mxu0 0.0
    %2613 = vmatpush1.msra.mxu0 0.0
    %2614 = vmatprep.subr.mxu0 0.0
    %2615 = vmatpush1.msra.mxu0 0.0
    %2616 = vmatprep.subr.mxu0 0.0
    %2617 = vmatpush1.msra.mxu0 0.0
    %2618 = vmatprep.subr.mxu0 0.0
    %2619 = vmatpush1.msra.mxu0 0.0
    %2620 = vmatprep.subr.mxu0 0.0
    %2621 = vmatpush1.msra.mxu0 0.0
    %2622 = vmatprep.subr.mxu0 0.0
    %2623 = vmatpush1.msra.mxu0 0.0
    %2624 = vmatprep.subr.mxu0 0.0
    %2625 = vmatpush1.msra.mxu0 0.0
    %2626 = vmatprep.subr.mxu0 0.0
    %2627 = vmatpush1.msra.mxu0 0.0
    %2628 = vmatprep.subr.mxu0 0.0
    %2629 = vmatpush1.msra.mxu0 0.0
    %2630 = vmatprep.subr.mxu0 0.0
    %2631 = vmatpush1.msra.mxu0 0.0
    %2632 = vmatprep.subr.mxu0 0.0
    %2633 = vmatpush1.msra.mxu0 0.0
    %2634 = vmatprep.subr.mxu0 0.0
    %2635 = vmatpush1.msra.mxu0 0.0
    %2636 = vmatprep.subr.mxu0 0.0
    %2637 = vmatpush1.msra.mxu0 0.0
    %2638 = vmatprep.subr.mxu0 0.0
    %2639 = vmatpush1.msra.mxu0 0.0
    %2640 = vmatprep.subr.mxu0 0.0
    %2641 = vmatpush1.msra.mxu0 0.0
    %2642 = vmatprep.subr.mxu0 0.0
    %2643 = vmatpush1.msra.mxu0 0.0
    %2644 = vmatprep.subr.mxu0 0.0
    %2645 = vmatpush1.msra.mxu0 0.0
    %2646 = vmatprep.subr.mxu0 0.0
    %2647 = vmatpush1.msra.mxu0 0.0
    %2648 = vmatprep.mubr.f32.mxu0 0.0
    %2649 = vmatmul.mubr.f32.gmra.mrb[0].mxu0 %v2561
    %v2650 = vpop.f32.mrb[0].mxu0
    %v2651 = vadd.f32 %v2559, %v2650
    %v2652 = vpop.f32.mrb[0].mxu0
    %2653 = vmatprep.mubr.f32.mxu0 0.0
    %2654 = vmatmul.mubr.f32.gmra.mrb[0].mxu0 %v2564
    %v2655 = vpop.f32.mrb[0].mxu0
    %v2656 = vadd.f32 %v2559, %v2655
    %v2657 = vpop.f32.mrb[0].mxu0
    %2658 = vmatprep.mubr.f32.mxu0 0.0
    %2659 = vmatmul.mubr.f32.gmra.mrb[0].mxu0 %v2567
    %v2660 = vpop.f32.mrb[0].mxu0
    %v2661 = vadd.f32 %v2559, %v2660
    %v2662 = vpop.f32.mrb[0].mxu0
    %2663 = vmatprep.mubr.f32.mxu0 0.0
    %2664 = vmatmul.mubr.f32.gmra.mrb[0].mxu0 %v2570
    %v2665 = vpop.f32.mrb[0].mxu0
    %v2666 = vadd.f32 %v2559, %v2665
    %v2667 = vpop.f32.mrb[0].mxu0
    %2668 = vmatprep.mubr.f32.mxu0 0.0
    %2669 = vmatmul.mubr.f32.gmra.mrb[0].mxu0 %v2573
    %v2670 = vpop.f32.mrb[0].mxu0
    %v2671 = vadd.f32 %v2559, %v2670
    %v2672 = vpop.f32.mrb[0].mxu0
    %2673 = vmatprep.mubr.f32.mxu0 0.0
    %2674 = vmatmul.mubr.f32.gmra.mrb[0].mxu0 %v2576
    %v2675 = vpop.f32.mrb[0].mxu0
    %v2676 = vadd.f32 %v2559, %v2675
    %v2677 = vpop.f32.mrb[0].mxu0
    %2678 = vmatprep.mubr.f32.mxu0 0.0
    %2679 = vmatmul.mubr.f32.gmra.mrb[0].mxu0 %v2579
    %v2680 = vpop.f32.mrb[0].mxu0
    %v2681 = vadd.f32 %v2559, %v2680
    %v2682 = vpop.f32.mrb[0].mxu0
    %2683 = vmatprep.mubr.f32.mxu0 0.0
    %2684 = vmatmul.mubr.f32.gmra.mrb[0].mxu0 %v2582
    %v2685 = vpop.f32.mrb[0].mxu0
    %v2686 = vadd.f32 %v2559, %v2685
    %v2687 = vpop.f32.mrb[0].mxu0
    %2688 = vdwg.mxu0
    %v2689 = vlaneseq
    %v2690 = vshrl.u32 %v2689, 7
    %v2691 = vsub.s32 0, %v2690
    %v2692 = vrot.slane %v2547, %v2691
    %2693 = vmatprep.subr.mxu0 0.0
    %2694 = vmatpush1.msra.mxu0 %v2522
    %2695 = vmatprep.subr.mxu0 0.0
    %2696 = vmatpush1.msra.mxu0 %v2523
    %2697 = vmatprep.subr.mxu0 0.0
    %2698 = vmatpush1.msra.mxu0 %v2524
    %2699 = vmatprep.subr.mxu0 0.0
    %2700 = vmatpush1.msra.mxu0 %v2525
    %2701 = vmatprep.subr.mxu0 0.0
    %2702 = vmatpush1.msra.mxu0 0.0
    %2703 = vmatprep.subr.mxu0 0.0
    %2704 = vmatpush1.msra.mxu0 0.0
    %2705 = vmatprep.subr.mxu0 0.0
    %2706 = vmatpush1.msra.mxu0 0.0
    %2707 = vmatprep.subr.mxu0 0.0
    %2708 = vmatpush1.msra.mxu0 0.0
    %2709 = vmatprep.subr.mxu0 0.0
    %2710 = vmatpush1.msra.mxu0 0.0
    %2711 = vmatprep.subr.mxu0 0.0
    %2712 = vmatpush1.msra.mxu0 0.0
    %2713 = vmatprep.subr.mxu0 0.0
    %2714 = vmatpush1.msra.mxu0 0.0
    %2715 = vmatprep.subr.mxu0 0.0
    %2716 = vmatpush1.msra.mxu0 0.0
    %2717 = vmatprep.subr.mxu0 0.0
    %2718 = vmatpush1.msra.mxu0 0.0
    %2719 = vmatprep.subr.mxu0 0.0
    %2720 = vmatpush1.msra.mxu0 0.0
    %2721 = vmatprep.subr.mxu0 0.0
    %2722 = vmatpush1.msra.mxu0 0.0
    %2723 = vmatprep.subr.mxu0 0.0
    %2724 = vmatpush1.msra.mxu0 0.0
    %2725 = vmatprep.subr.mxu0 0.0
    %2726 = vmatpush1.msra.mxu0 0.0
    %2727 = vmatprep.subr.mxu0 0.0
    %2728 = vmatpush1.msra.mxu0 0.0
    %2729 = vmatprep.subr.mxu0 0.0
    %2730 = vmatpush1.msra.mxu0 0.0
    %2731 = vmatprep.subr.mxu0 0.0
    %2732 = vmatpush1.msra.mxu0 0.0
    %2733 = vmatprep.subr.mxu0 0.0
    %2734 = vmatpush1.msra.mxu0 0.0
    %2735 = vmatprep.subr.mxu0 0.0
    %2736 = vmatpush1.msra.mxu0 0.0
    %2737 = vmatprep.subr.mxu0 0.0
    %2738 = vmatpush1.msra.mxu0 0.0
    %2739 = vmatprep.subr.mxu0 0.0
    %2740 = vmatpush1.msra.mxu0 0.0
    %2741 = vmatprep.subr.mxu0 0.0
    %2742 = vmatpush1.msra.mxu0 0.0
    %2743 = vmatprep.subr.mxu0 0.0
    %2744 = vmatpush1.msra.mxu0 0.0
    %2745 = vmatprep.subr.mxu0 0.0
    %2746 = vmatpush1.msra.mxu0 0.0
    %2747 = vmatprep.subr.mxu0 0.0
    %2748 = vmatpush1.msra.mxu0 0.0
    %2749 = vmatprep.subr.mxu0 0.0
    %2750 = vmatpush1.msra.mxu0 0.0
    %2751 = vmatprep.subr.mxu0 0.0
    %2752 = vmatpush1.msra.mxu0 0.0
    %2753 = vmatprep.subr.mxu0 0.0
    %2754 = vmatpush1.msra.mxu0 0.0
    %2755 = vmatprep.subr.mxu0 0.0
    %2756 = vmatpush1.msra.mxu0 0.0
    %2757 = vmatprep.mubr.f32.mxu0 0.0
    %2758 = vmatmul.mubr.f32.gmra.mrb[0].mxu0 %v2561
    %v2759 = vpop.f32.mrb[0].mxu0
    %v2760 = vadd.f32 %v2692, %v2759
    %v2761 = vpop.f32.mrb[0].mxu0
    %2762 = vmatprep.mubr.f32.mxu0 0.0
    %2763 = vmatmul.mubr.f32.gmra.mrb[0].mxu0 %v2564
    %v2764 = vpop.f32.mrb[0].mxu0
    %v2765 = vadd.f32 %v2692, %v2764
    %v2766 = vpop.f32.mrb[0].mxu0
    %2767 = vmatprep.mubr.f32.mxu0 0.0
    %2768 = vmatmul.mubr.f32.gmra.mrb[0].mxu0 %v2567
    %v2769 = vpop.f32.mrb[0].mxu0
    %v2770 = vadd.f32 %v2692, %v2769
    %v2771 = vpop.f32.mrb[0].mxu0
    %2772 = vmatprep.mubr.f32.mxu0 0.0
    %2773 = vmatmul.mubr.f32.gmra.mrb[0].mxu0 %v2570
    %v2774 = vpop.f32.mrb[0].mxu0
    %v2775 = vadd.f32 %v2692, %v2774
    %v2776 = vpop.f32.mrb[0].mxu0
    %2777 = vmatprep.mubr.f32.mxu0 0.0
    %2778 = vmatmul.mubr.f32.gmra.mrb[0].mxu0 %v2573
    %v2779 = vpop.f32.mrb[0].mxu0
    %v2780 = vadd.f32 %v2692, %v2779
    %v2781 = vpop.f32.mrb[0].mxu0
    %2782 = vmatprep.mubr.f32.mxu0 0.0
    %2783 = vmatmul.mubr.f32.gmra.mrb[0].mxu0 %v2576
    %v2784 = vpop.f32.mrb[0].mxu0
    %v2785 = vadd.f32 %v2692, %v2784
    %v2786 = vpop.f32.mrb[0].mxu0
    %2787 = vmatprep.mubr.f32.mxu0 0.0
    %2788 = vmatmul.mubr.f32.gmra.mrb[0].mxu0 %v2579
    %v2789 = vpop.f32.mrb[0].mxu0
    %v2790 = vadd.f32 %v2692, %v2789
    %v2791 = vpop.f32.mrb[0].mxu0
    %2792 = vmatprep.mubr.f32.mxu0 0.0
    %2793 = vmatmul.mubr.f32.gmra.mrb[0].mxu0 %v2582
    %v2794 = vpop.f32.mrb[0].mxu0
    %v2795 = vadd.f32 %v2692, %v2794
    %v2796 = vpop.f32.mrb[0].mxu0
    %2797 = vdwg.mxu0
    %v2798 = vlaneseq
    %v2799 = vshrl.u32 %v2798, 7
    %v2800 = vsub.s32 0, %v2799
    %v2801 = vrot.slane %v2548, %v2800
    %2802 = vmatprep.subr.mxu0 0.0
    %2803 = vmatpush1.msra.mxu0 %v2526
    %2804 = vmatprep.subr.mxu0 0.0
    %2805 = vmatpush1.msra.mxu0 %v2527
    %2806 = vmatprep.subr.mxu0 0.0
    %2807 = vmatpush1.msra.mxu0 %v2528
    %2808 = vmatprep.subr.mxu0 0.0
    %2809 = vmatpush1.msra.mxu0 %v2529
    %2810 = vmatprep.subr.mxu0 0.0
    %2811 = vmatpush1.msra.mxu0 0.0
    %2812 = vmatprep.subr.mxu0 0.0
    %2813 = vmatpush1.msra.mxu0 0.0
    %2814 = vmatprep.subr.mxu0 0.0
    %2815 = vmatpush1.msra.mxu0 0.0
    %2816 = vmatprep.subr.mxu0 0.0
    %2817 = vmatpush1.msra.mxu0 0.0
    %2818 = vmatprep.subr.mxu0 0.0
    %2819 = vmatpush1.msra.mxu0 0.0
    %2820 = vmatprep.subr.mxu0 0.0
    %2821 = vmatpush1.msra.mxu0 0.0
    %2822 = vmatprep.subr.mxu0 0.0
    %2823 = vmatpush1.msra.mxu0 0.0
    %2824 = vmatprep.subr.mxu0 0.0
    %2825 = vmatpush1.msra.mxu0 0.0
    %2826 = vmatprep.subr.mxu0 0.0
    %2827 = vmatpush1.msra.mxu0 0.0
    %2828 = vmatprep.subr.mxu0 0.0
    %2829 = vmatpush1.msra.mxu0 0.0
    %2830 = vmatprep.subr.mxu0 0.0
    %2831 = vmatpush1.msra.mxu0 0.0
    %2832 = vmatprep.subr.mxu0 0.0
    %2833 = vmatpush1.msra.mxu0 0.0
    %2834 = vmatprep.subr.mxu0 0.0
    %2835 = vmatpush1.msra.mxu0 0.0
    %2836 = vmatprep.subr.mxu0 0.0
    %2837 = vmatpush1.msra.mxu0 0.0
    %2838 = vmatprep.subr.mxu0 0.0
    %2839 = vmatpush1.msra.mxu0 0.0
    %2840 = vmatprep.subr.mxu0 0.0
    %2841 = vmatpush1.msra.mxu0 0.0
    %2842 = vmatprep.subr.mxu0 0.0
    %2843 = vmatpush1.msra.mxu0 0.0
    %2844 = vmatprep.subr.mxu0 0.0
    %2845 = vmatpush1.msra.mxu0 0.0
    %2846 = vmatprep.subr.mxu0 0.0
    %2847 = vmatpush1.msra.mxu0 0.0
    %2848 = vmatprep.subr.mxu0 0.0
    %2849 = vmatpush1.msra.mxu0 0.0
    %2850 = vmatprep.subr.mxu0 0.0
    %2851 = vmatpush1.msra.mxu0 0.0
    %2852 = vmatprep.subr.mxu0 0.0
    %2853 = vmatpush1.msra.mxu0 0.0
    %2854 = vmatprep.subr.mxu0 0.0
    %2855 = vmatpush1.msra.mxu0 0.0
    %2856 = vmatprep.subr.mxu0 0.0
    %2857 = vmatpush1.msra.mxu0 0.0
    %2858 = vmatprep.subr.mxu0 0.0
    %2859 = vmatpush1.msra.mxu0 0.0
    %2860 = vmatprep.subr.mxu0 0.0
    %2861 = vmatpush1.msra.mxu0 0.0
    %2862 = vmatprep.subr.mxu0 0.0
    %2863 = vmatpush1.msra.mxu0 0.0
    %2864 = vmatprep.subr.mxu0 0.0
    %2865 = vmatpush1.msra.mxu0 0.0
    %2866 = vmatprep.mubr.f32.mxu0 0.0
    %2867 = vmatmul.mubr.f32.gmra.mrb[0].mxu0 %v2561
    %v2868 = vpop.f32.mrb[0].mxu0
    %v2869 = vadd.f32 %v2801, %v2868
    %v2870 = vpop.f32.mrb[0].mxu0
    %2871 = vmatprep.mubr.f32.mxu0 0.0
    %2872 = vmatmul.mubr.f32.gmra.mrb[0].mxu0 %v2564
    %v2873 = vpop.f32.mrb[0].mxu0
    %v2874 = vadd.f32 %v2801, %v2873
    %v2875 = vpop.f32.mrb[0].mxu0
    %2876 = vmatprep.mubr.f32.mxu0 0.0
    %2877 = vmatmul.mubr.f32.gmra.mrb[0].mxu0 %v2567
    %v2878 = vpop.f32.mrb[0].mxu0
    %v2879 = vadd.f32 %v2801, %v2878
    %v2880 = vpop.f32.mrb[0].mxu0
    %2881 = vmatprep.mubr.f32.mxu0 0.0
    %2882 = vmatmul.mubr.f32.gmra.mrb[0].mxu0 %v2570
    %v2883 = vpop.f32.mrb[0].mxu0
    %v2884 = vadd.f32 %v2801, %v2883
    %v2885 = vpop.f32.mrb[0].mxu0
    %2886 = vmatprep.mubr.f32.mxu0 0.0
    %2887 = vmatmul.mubr.f32.gmra.mrb[0].mxu0 %v2573
    %v2888 = vpop.f32.mrb[0].mxu0
    %v2889 = vadd.f32 %v2801, %v2888
    %v2890 = vpop.f32.mrb[0].mxu0
    %2891 = vmatprep.mubr.f32.mxu0 0.0
    %2892 = vmatmul.mubr.f32.gmra.mrb[0].mxu0 %v2576
    %v2893 = vpop.f32.mrb[0].mxu0
    %v2894 = vadd.f32 %v2801, %v2893
    %v2895 = vpop.f32.mrb[0].mxu0
    %2896 = vmatprep.mubr.f32.mxu0 0.0
    %2897 = vmatmul.mubr.f32.gmra.mrb[0].mxu0 %v2579
    %v2898 = vpop.f32.mrb[0].mxu0
    %v2899 = vadd.f32 %v2801, %v2898
    %v2900 = vpop.f32.mrb[0].mxu0
    %2901 = vmatprep.mubr.f32.mxu0 0.0
    %2902 = vmatmul.mubr.f32.gmra.mrb[0].mxu0 %v2582
    %v2903 = vpop.f32.mrb[0].mxu0
    %v2904 = vadd.f32 %v2801, %v2903
    %v2905 = vpop.f32.mrb[0].mxu0
    %2906 = vdwg.mxu0
    %v2907 = vmul.f32 %v2651, 0.25
    %v2908 = vmul.f32 %v2656, 0.25
    %v2909 = vmul.f32 %v2661, 0.25
    %v2910 = vmul.f32 %v2666, 0.25
    %v2911 = vmul.f32 %v2671, 0.25
    %v2912 = vmul.f32 %v2676, 0.25
    %v2913 = vmul.f32 %v2681, 0.25
    %v2914 = vmul.f32 %v2686, 0.25
    %v2916 = vsel %vm929, %v2907, 0
    %v2919 = vsel %vm929, %v2908, 0
    %v2922 = vsel %vm929, %v2909, 0
    %v2925 = vsel %vm929, %v2910, 0
    %v2928 = vsel %vm929, %v2911, 0
    %v2931 = vsel %vm929, %v2912, 0
    %v2934 = vsel %vm929, %v2913, 0
    %v2937 = vsel %vm929, %v2914, 0
    %v2940 = vsel %vm929, %v2760, 0
    %v2943 = vsel %vm929, %v2765, 0
    %v2946 = vsel %vm929, %v2770, 0
    %v2949 = vsel %vm929, %v2775, 0
    %v2952 = vsel %vm929, %v2780, 0
    %v2955 = vsel %vm929, %v2785, 0
    %v2958 = vsel %vm929, %v2790, 0
    %v2961 = vsel %vm929, %v2795, 0
    %2963 = vmatprep.subr.mxu0 0.0
    %2964 = vmatpush1.xpose.msra.mxu0 %v2940
    %2965 = vmatprep.subr.mxu0 0.0
    %2966 = vmatpush1.xpose.msra.mxu0 %v2943
    %2967 = vmatprep.subr.mxu0 0.0
    %2968 = vmatpush1.xpose.msra.mxu0 %v2946
    %2969 = vmatprep.subr.mxu0 0.0
    %2970 = vmatpush1.xpose.msra.mxu0 %v2949
    %2971 = vmatprep.subr.mxu0 0.0
    %2972 = vmatpush1.xpose.msra.mxu0 %v2952
    %2973 = vmatprep.subr.mxu0 0.0
    %2974 = vmatpush1.xpose.msra.mxu0 %v2955
    %2975 = vmatprep.subr.mxu0 0.0
    %2976 = vmatpush1.xpose.msra.mxu0 %v2958
    %2977 = vmatprep.subr.mxu0 0.0
    %2978 = vmatpush1.xpose.msra.mxu0 %v2961
    %2979 = vmatprep.subr.mxu0 0.0
    %2980 = vmatpush1.xpose.msra.mxu0 0.0
    %2981 = vmatprep.subr.mxu0 0.0
    %2982 = vmatpush1.xpose.msra.mxu0 0.0
    %2983 = vmatprep.subr.mxu0 0.0
    %2984 = vmatpush1.xpose.msra.mxu0 0.0
    %2985 = vmatprep.subr.mxu0 0.0
    %2986 = vmatpush1.xpose.msra.mxu0 0.0
    %2987 = vmatprep.subr.mxu0 0.0
    %2988 = vmatpush1.xpose.msra.mxu0 0.0
    %2989 = vmatprep.subr.mxu0 0.0
    %2990 = vmatpush1.xpose.msra.mxu0 0.0
    %2991 = vmatprep.subr.mxu0 0.0
    %2992 = vmatpush1.xpose.msra.mxu0 0.0
    %2993 = vmatprep.subr.mxu0 0.0
    %2994 = vmatpush1.xpose.msra.mxu0 0.0
    %2995 = vmatprep.subr.mxu0 0.0
    %2996 = vmatpush1.xpose.msra.mxu0 0.0
    %2997 = vmatprep.subr.mxu0 0.0
    %2998 = vmatpush1.xpose.msra.mxu0 0.0
    %2999 = vmatprep.subr.mxu0 0.0
    %3000 = vmatpush1.xpose.msra.mxu0 0.0
    %3001 = vmatprep.subr.mxu0 0.0
    %3002 = vmatpush1.xpose.msra.mxu0 0.0
    %3003 = vmatprep.subr.mxu0 0.0
    %3004 = vmatpush1.xpose.msra.mxu0 0.0
    %3005 = vmatprep.subr.mxu0 0.0
    %3006 = vmatpush1.xpose.msra.mxu0 0.0
    %3007 = vmatprep.subr.mxu0 0.0
    %3008 = vmatpush1.xpose.msra.mxu0 0.0
    %3009 = vmatprep.subr.mxu0 0.0
    %3010 = vmatpush1.xpose.msra.mxu0 0.0
    %3011 = vmatprep.subr.mxu0 0.0
    %3012 = vmatpush1.xpose.msra.mxu0 0.0
    %3013 = vmatprep.subr.mxu0 0.0
    %3014 = vmatpush1.xpose.msra.mxu0 0.0
    %3015 = vmatprep.subr.mxu0 0.0
    %3016 = vmatpush1.xpose.msra.mxu0 0.0
    %3017 = vmatprep.subr.mxu0 0.0
    %3018 = vmatpush1.xpose.msra.mxu0 0.0
    %3019 = vmatprep.subr.mxu0 0.0
    %3020 = vmatpush1.xpose.msra.mxu0 0.0
    %3021 = vmatprep.subr.mxu0 0.0
    %3022 = vmatpush1.xpose.msra.mxu0 0.0
    %3023 = vmatprep.subr.mxu0 0.0
    %3024 = vmatpush1.xpose.msra.mxu0 0.0
    %3025 = vmatprep.subr.mxu0 0.0
    %3026 = vmatpush1.xpose.msra.mxu0 0.0
    %3027 = vmatprep.mubr.f32.mxu0 0.0
    %3028 = vmatmul.mubr.f32.gmra.mrb[0].mxu0 %v2916
    %v3029 = vpop.f32.mrb[0].mxu0
    %v3030 = vadd.f32 0.0, %v3029
    %v3031 = vpop.f32.mrb[0].mxu0
    %3032 = vmatprep.mubr.f32.mxu0 0.0
    %3033 = vmatmul.mubr.f32.gmra.mrb[0].mxu0 %v2919
    %v3034 = vpop.f32.mrb[0].mxu0
    %v3035 = vadd.f32 0.0, %v3034
    %v3036 = vpop.f32.mrb[0].mxu0
    %3037 = vmatprep.mubr.f32.mxu0 0.0
    %3038 = vmatmul.mubr.f32.gmra.mrb[0].mxu0 %v2922
    %v3039 = vpop.f32.mrb[0].mxu0
    %v3040 = vadd.f32 0.0, %v3039
    %v3041 = vpop.f32.mrb[0].mxu0
    %3042 = vmatprep.mubr.f32.mxu0 0.0
    %3043 = vmatmul.mubr.f32.gmra.mrb[0].mxu0 %v2925
    %v3044 = vpop.f32.mrb[0].mxu0
    %v3045 = vadd.f32 0.0, %v3044
    %v3046 = vpop.f32.mrb[0].mxu0
    %3047 = vmatprep.mubr.f32.mxu0 0.0
    %3048 = vmatmul.mubr.f32.gmra.mrb[0].mxu0 %v2928
    %v3049 = vpop.f32.mrb[0].mxu0
    %v3050 = vadd.f32 0.0, %v3049
    %v3051 = vpop.f32.mrb[0].mxu0
    %3052 = vmatprep.mubr.f32.mxu0 0.0
    %3053 = vmatmul.mubr.f32.gmra.mrb[0].mxu0 %v2931
    %v3054 = vpop.f32.mrb[0].mxu0
    %v3055 = vadd.f32 0.0, %v3054
    %v3056 = vpop.f32.mrb[0].mxu0
    %3057 = vmatprep.mubr.f32.mxu0 0.0
    %3058 = vmatmul.mubr.f32.gmra.mrb[0].mxu0 %v2934
    %v3059 = vpop.f32.mrb[0].mxu0
    %v3060 = vadd.f32 0.0, %v3059
    %v3061 = vpop.f32.mrb[0].mxu0
    %3062 = vmatprep.mubr.f32.mxu0 0.0
    %3063 = vmatmul.mubr.f32.gmra.mrb[0].mxu0 %v2937
    %v3064 = vpop.f32.mrb[0].mxu0
    %v3065 = vadd.f32 0.0, %v3064
    %v3066 = vpop.f32.mrb[0].mxu0
    %3067 = vdwg.mxu0
    %v3068 = vsel %vm524, %v3030, -1e+30
    %v3069 = vsel %vm525, %v3035, -1e+30
    %v3070 = vsel %vm526, %v3040, -1e+30
    %v3071 = vsel %vm527, %v3045, -1e+30
    %v3072 = vsel %vm528, %v3050, -1e+30
    %v3073 = vsel %vm529, %v3055, -1e+30
    %v3074 = vsel %vm530, %v3060, -1e+30
    %v3075 = vsel %vm531, %v3065, -1e+30
    %v3076 = vsel %vm1091, %v3068, -inf
    %3077 = vmax.xlane.f32.xlu0 %v3076
    %v3078 = vpop.xlane.xlu0 %3077
    %v3079 = vsel %vm1091, %v3069, -inf
    %3080 = vmax.xlane.f32.xlu0 %v3079
    %v3081 = vpop.xlane.xlu0 %3080
    %v3082 = vsel %vm1091, %v3070, -inf
    %3083 = vmax.xlane.f32.xlu0 %v3082
    %v3084 = vpop.xlane.xlu0 %3083
    %v3085 = vsel %vm1091, %v3071, -inf
    %3086 = vmax.xlane.f32.xlu0 %v3085
    %v3087 = vpop.xlane.xlu0 %3086
    %v3088 = vsel %vm1091, %v3072, -inf
    %3089 = vmax.xlane.f32.xlu0 %v3088
    %v3090 = vpop.xlane.xlu0 %3089
    %v3091 = vsel %vm1091, %v3073, -inf
    %3092 = vmax.xlane.f32.xlu0 %v3091
    %v3093 = vpop.xlane.xlu0 %3092
    %v3094 = vsel %vm1091, %v3074, -inf
    %3095 = vmax.xlane.f32.xlu0 %v3094
    %v3096 = vpop.xlane.xlu0 %3095
    %v3097 = vsel %vm1091, %v3075, -inf
    %3098 = vmax.xlane.f32.xlu0 %v3097
    %v3099 = vpop.xlane.xlu0 %3098
    %v3100 = vsub.f32 %v3068, %v3078
    %v3101 = vsub.f32 %v3069, %v3081
    %v3102 = vsub.f32 %v3070, %v3084
    %v3103 = vsub.f32 %v3071, %v3087
    %v3104 = vsub.f32 %v3072, %v3090
    %v3105 = vsub.f32 %v3073, %v3093
    %v3106 = vsub.f32 %v3074, %v3096
    %v3107 = vsub.f32 %v3075, %v3099
    %v3108 = vmul.f32 %v3100, 1.442695
    %v3109 = vpow.pop %v3108
    %v3110 = vmul.f32 %v3101, 1.442695
    %v3111 = vpow.pop %v3110
    %v3112 = vmul.f32 %v3102, 1.442695
    %v3113 = vpow.pop %v3112
    %v3114 = vmul.f32 %v3103, 1.442695
    %v3115 = vpow.pop %v3114
    %v3116 = vmul.f32 %v3104, 1.442695
    %v3117 = vpow.pop %v3116
    %v3118 = vmul.f32 %v3105, 1.442695
    %v3119 = vpow.pop %v3118
    %v3120 = vmul.f32 %v3106, 1.442695
    %v3121 = vpow.pop %v3120
    %v3122 = vmul.f32 %v3107, 1.442695
    %v3123 = vpow.pop %v3122
    %v3124 = vsel %vm1091, %v3109, 0.0
    %3125 = vadd.xlane.f32.xlu0 %v3124
    %v3126 = vpop.xlane.xlu0 %3125
    %v3127 = vsel %vm1091, %v3111, 0.0
    %3128 = vadd.xlane.f32.xlu0 %v3127
    %v3129 = vpop.xlane.xlu0 %3128
    %v3130 = vsel %vm1091, %v3113, 0.0
    %3131 = vadd.xlane.f32.xlu0 %v3130
    %v3132 = vpop.xlane.xlu0 %3131
    %v3133 = vsel %vm1091, %v3115, 0.0
    %3134 = vadd.xlane.f32.xlu0 %v3133
    %v3135 = vpop.xlane.xlu0 %3134
    %v3136 = vsel %vm1091, %v3117, 0.0
    %3137 = vadd.xlane.f32.xlu0 %v3136
    %v3138 = vpop.xlane.xlu0 %3137
    %v3139 = vsel %vm1091, %v3119, 0.0
    %3140 = vadd.xlane.f32.xlu0 %v3139
    %v3141 = vpop.xlane.xlu0 %3140
    %v3142 = vsel %vm1091, %v3121, 0.0
    %3143 = vadd.xlane.f32.xlu0 %v3142
    %v3144 = vpop.xlane.xlu0 %3143
    %v3145 = vsel %vm1091, %v3123, 0.0
    %3146 = vadd.xlane.f32.xlu0 %v3145
    %v3147 = vpop.xlane.xlu0 %3146
    %v3148 = vrcp.pop %v3126
    %v3149 = vmul.f32 %v3109, %v3148
    %v3150 = vrcp.pop %v3129
    %v3151 = vmul.f32 %v3111, %v3150
    %v3152 = vrcp.pop %v3132
    %v3153 = vmul.f32 %v3113, %v3152
    %v3154 = vrcp.pop %v3135
    %v3155 = vmul.f32 %v3115, %v3154
    %v3156 = vrcp.pop %v3138
    %v3157 = vmul.f32 %v3117, %v3156
    %v3158 = vrcp.pop %v3141
    %v3159 = vmul.f32 %v3119, %v3158
    %v3160 = vrcp.pop %v3144
    %v3161 = vmul.f32 %v3121, %v3160
    %v3162 = vrcp.pop %v3147
    %v3163 = vmul.f32 %v3123, %v3162
    %v3165 = vsel %vm1091, %v3149, 0
    %v3168 = vsel %vm1091, %v3151, 0
    %v3171 = vsel %vm1091, %v3153, 0
    %v3174 = vsel %vm1091, %v3155, 0
    %v3177 = vsel %vm1091, %v3157, 0
    %v3180 = vsel %vm1091, %v3159, 0
    %v3183 = vsel %vm1091, %v3161, 0
    %v3186 = vsel %vm1091, %v3163, 0
    %3188 = vmatprep.subr.mxu0 0.0
    %3189 = vmatpush1.msra.mxu0 %v2869
    %3190 = vmatprep.subr.mxu0 0.0
    %3191 = vmatpush1.msra.mxu0 %v2874
    %3192 = vmatprep.subr.mxu0 0.0
    %3193 = vmatpush1.msra.mxu0 %v2879
    %3194 = vmatprep.subr.mxu0 0.0
    %3195 = vmatpush1.msra.mxu0 %v2884
    %3196 = vmatprep.subr.mxu0 0.0
    %3197 = vmatpush1.msra.mxu0 %v2889
    %3198 = vmatprep.subr.mxu0 0.0
    %3199 = vmatpush1.msra.mxu0 %v2894
    %3200 = vmatprep.subr.mxu0 0.0
    %3201 = vmatpush1.msra.mxu0 %v2899
    %3202 = vmatprep.subr.mxu0 0.0
    %3203 = vmatpush1.msra.mxu0 %v2904
    %3204 = vmatprep.subr.mxu0 0.0
    %3205 = vmatpush1.msra.mxu0 0.0
    %3206 = vmatprep.subr.mxu0 0.0
    %3207 = vmatpush1.msra.mxu0 0.0
    %3208 = vmatprep.subr.mxu0 0.0
    %3209 = vmatpush1.msra.mxu0 0.0
    %3210 = vmatprep.subr.mxu0 0.0
    %3211 = vmatpush1.msra.mxu0 0.0
    %3212 = vmatprep.subr.mxu0 0.0
    %3213 = vmatpush1.msra.mxu0 0.0
    %3214 = vmatprep.subr.mxu0 0.0
    %3215 = vmatpush1.msra.mxu0 0.0
    %3216 = vmatprep.subr.mxu0 0.0
    %3217 = vmatpush1.msra.mxu0 0.0
    %3218 = vmatprep.subr.mxu0 0.0
    %3219 = vmatpush1.msra.mxu0 0.0
    %3220 = vmatprep.subr.mxu0 0.0
    %3221 = vmatpush1.msra.mxu0 0.0
    %3222 = vmatprep.subr.mxu0 0.0
    %3223 = vmatpush1.msra.mxu0 0.0
    %3224 = vmatprep.subr.mxu0 0.0
    %3225 = vmatpush1.msra.mxu0 0.0
    %3226 = vmatprep.subr.mxu0 0.0
    %3227 = vmatpush1.msra.mxu0 0.0
    %3228 = vmatprep.subr.mxu0 0.0
    %3229 = vmatpush1.msra.mxu0 0.0
    %3230 = vmatprep.subr.mxu0 0.0
    %3231 = vmatpush1.msra.mxu0 0.0
    %3232 = vmatprep.subr.mxu0 0.0
    %3233 = vmatpush1.msra.mxu0 0.0
    %3234 = vmatprep.subr.mxu0 0.0
    %3235 = vmatpush1.msra.mxu0 0.0
    %3236 = vmatprep.subr.mxu0 0.0
    %3237 = vmatpush1.msra.mxu0 0.0
    %3238 = vmatprep.subr.mxu0 0.0
    %3239 = vmatpush1.msra.mxu0 0.0
    %3240 = vmatprep.subr.mxu0 0.0
    %3241 = vmatpush1.msra.mxu0 0.0
    %3242 = vmatprep.subr.mxu0 0.0
    %3243 = vmatpush1.msra.mxu0 0.0
    %3244 = vmatprep.subr.mxu0 0.0
    %3245 = vmatpush1.msra.mxu0 0.0
    %3246 = vmatprep.subr.mxu0 0.0
    %3247 = vmatpush1.msra.mxu0 0.0
    %3248 = vmatprep.subr.mxu0 0.0
    %3249 = vmatpush1.msra.mxu0 0.0
    %3250 = vmatprep.subr.mxu0 0.0
    %3251 = vmatpush1.msra.mxu0 0.0
    %3252 = vmatprep.mubr.f32.mxu0 0.0
    %3253 = vmatmul.mubr.f32.gmra.mrb[0].mxu0 %v3165
    %v3254 = vpop.f32.mrb[0].mxu0
    %v3255 = vadd.f32 0.0, %v3254
    %v3256 = vpop.f32.mrb[0].mxu0
    %3257 = vmatprep.mubr.f32.mxu0 0.0
    %3258 = vmatmul.mubr.f32.gmra.mrb[0].mxu0 %v3168
    %v3259 = vpop.f32.mrb[0].mxu0
    %v3260 = vadd.f32 0.0, %v3259
    %v3261 = vpop.f32.mrb[0].mxu0
    %3262 = vmatprep.mubr.f32.mxu0 0.0
    %3263 = vmatmul.mubr.f32.gmra.mrb[0].mxu0 %v3171
    %v3264 = vpop.f32.mrb[0].mxu0
    %v3265 = vadd.f32 0.0, %v3264
    %v3266 = vpop.f32.mrb[0].mxu0
    %3267 = vmatprep.mubr.f32.mxu0 0.0
    %3268 = vmatmul.mubr.f32.gmra.mrb[0].mxu0 %v3174
    %v3269 = vpop.f32.mrb[0].mxu0
    %v3270 = vadd.f32 0.0, %v3269
    %v3271 = vpop.f32.mrb[0].mxu0
    %3272 = vmatprep.mubr.f32.mxu0 0.0
    %3273 = vmatmul.mubr.f32.gmra.mrb[0].mxu0 %v3177
    %v3274 = vpop.f32.mrb[0].mxu0
    %v3275 = vadd.f32 0.0, %v3274
    %v3276 = vpop.f32.mrb[0].mxu0
    %3277 = vmatprep.mubr.f32.mxu0 0.0
    %3278 = vmatmul.mubr.f32.gmra.mrb[0].mxu0 %v3180
    %v3279 = vpop.f32.mrb[0].mxu0
    %v3280 = vadd.f32 0.0, %v3279
    %v3281 = vpop.f32.mrb[0].mxu0
    %3282 = vmatprep.mubr.f32.mxu0 0.0
    %3283 = vmatmul.mubr.f32.gmra.mrb[0].mxu0 %v3183
    %v3284 = vpop.f32.mrb[0].mxu0
    %v3285 = vadd.f32 0.0, %v3284
    %v3286 = vpop.f32.mrb[0].mxu0
    %3287 = vmatprep.mubr.f32.mxu0 0.0
    %3288 = vmatmul.mubr.f32.gmra.mrb[0].mxu0 %v3186
    %v3289 = vpop.f32.mrb[0].mxu0
    %v3290 = vadd.f32 0.0, %v3289
    %v3291 = vpop.f32.mrb[0].mxu0
    %3292 = vdwg.mxu0
    %3293 = vrot.lane.b32.xlu0 %v2907, 112
    %v3294 = vpop.permute.xlu0 %3293
    %3295 = vrot.lane.b32.xlu0 %v2908, 112
    %v3296 = vpop.permute.xlu0 %3295
    %3297 = vrot.lane.b32.xlu0 %v2909, 112
    %v3298 = vpop.permute.xlu0 %3297
    %3299 = vrot.lane.b32.xlu0 %v2910, 112
    %v3300 = vpop.permute.xlu0 %3299
    %3301 = vrot.lane.b32.xlu0 %v2911, 112
    %v3302 = vpop.permute.xlu0 %3301
    %3303 = vrot.lane.b32.xlu0 %v2912, 112
    %v3304 = vpop.permute.xlu0 %3303
    %3305 = vrot.lane.b32.xlu0 %v2913, 112
    %v3306 = vpop.permute.xlu0 %3305
    %3307 = vrot.lane.b32.xlu0 %v2914, 112
    %v3308 = vpop.permute.xlu0 %3307
    %3309 = vrot.lane.b32.xlu0 %v2760, 112
    %v3310 = vpop.permute.xlu0 %3309
    %3311 = vrot.lane.b32.xlu0 %v2765, 112
    %v3312 = vpop.permute.xlu0 %3311
    %3313 = vrot.lane.b32.xlu0 %v2770, 112
    %v3314 = vpop.permute.xlu0 %3313
    %3315 = vrot.lane.b32.xlu0 %v2775, 112
    %v3316 = vpop.permute.xlu0 %3315
    %3317 = vrot.lane.b32.xlu0 %v2780, 112
    %v3318 = vpop.permute.xlu0 %3317
    %3319 = vrot.lane.b32.xlu0 %v2785, 112
    %v3320 = vpop.permute.xlu0 %3319
    %3321 = vrot.lane.b32.xlu0 %v2790, 112
    %v3322 = vpop.permute.xlu0 %3321
    %3323 = vrot.lane.b32.xlu0 %v2795, 112
    %v3324 = vpop.permute.xlu0 %3323
    %v3325 = vsel %vm929, %v3294, 0
    %v3327 = vsel %vm929, %v3296, 0
    %v3329 = vsel %vm929, %v3298, 0
    %v3331 = vsel %vm929, %v3300, 0
    %v3333 = vsel %vm929, %v3302, 0
    %v3335 = vsel %vm929, %v3304, 0
    %v3337 = vsel %vm929, %v3306, 0
    %v3339 = vsel %vm929, %v3308, 0
    %v3341 = vsel %vm929, %v3310, 0
    %v3343 = vsel %vm929, %v3312, 0
    %v3345 = vsel %vm929, %v3314, 0
    %v3347 = vsel %vm929, %v3316, 0
    %v3349 = vsel %vm929, %v3318, 0
    %v3351 = vsel %vm929, %v3320, 0
    %v3353 = vsel %vm929, %v3322, 0
    %v3355 = vsel %vm929, %v3324, 0
    %3357 = vmatprep.subr.mxu0 0.0
    %3358 = vmatpush1.xpose.msra.mxu0 %v3341
    %3359 = vmatprep.subr.mxu0 0.0
    %3360 = vmatpush1.xpose.msra.mxu0 %v3343
    %3361 = vmatprep.subr.mxu0 0.0
    %3362 = vmatpush1.xpose.msra.mxu0 %v3345
    %3363 = vmatprep.subr.mxu0 0.0
    %3364 = vmatpush1.xpose.msra.mxu0 %v3347
    %3365 = vmatprep.subr.mxu0 0.0
    %3366 = vmatpush1.xpose.msra.mxu0 %v3349
    %3367 = vmatprep.subr.mxu0 0.0
    %3368 = vmatpush1.xpose.msra.mxu0 %v3351
    %3369 = vmatprep.subr.mxu0 0.0
    %3370 = vmatpush1.xpose.msra.mxu0 %v3353
    %3371 = vmatprep.subr.mxu0 0.0
    %3372 = vmatpush1.xpose.msra.mxu0 %v3355
    %3373 = vmatprep.subr.mxu0 0.0
    %3374 = vmatpush1.xpose.msra.mxu0 0.0
    %3375 = vmatprep.subr.mxu0 0.0
    %3376 = vmatpush1.xpose.msra.mxu0 0.0
    %3377 = vmatprep.subr.mxu0 0.0
    %3378 = vmatpush1.xpose.msra.mxu0 0.0
    %3379 = vmatprep.subr.mxu0 0.0
    %3380 = vmatpush1.xpose.msra.mxu0 0.0
    %3381 = vmatprep.subr.mxu0 0.0
    %3382 = vmatpush1.xpose.msra.mxu0 0.0
    %3383 = vmatprep.subr.mxu0 0.0
    %3384 = vmatpush1.xpose.msra.mxu0 0.0
    %3385 = vmatprep.subr.mxu0 0.0
    %3386 = vmatpush1.xpose.msra.mxu0 0.0
    %3387 = vmatprep.subr.mxu0 0.0
    %3388 = vmatpush1.xpose.msra.mxu0 0.0
    %3389 = vmatprep.subr.mxu0 0.0
    %3390 = vmatpush1.xpose.msra.mxu0 0.0
    %3391 = vmatprep.subr.mxu0 0.0
    %3392 = vmatpush1.xpose.msra.mxu0 0.0
    %3393 = vmatprep.subr.mxu0 0.0
    %3394 = vmatpush1.xpose.msra.mxu0 0.0
    %3395 = vmatprep.subr.mxu0 0.0
    %3396 = vmatpush1.xpose.msra.mxu0 0.0
    %3397 = vmatprep.subr.mxu0 0.0
    %3398 = vmatpush1.xpose.msra.mxu0 0.0
    %3399 = vmatprep.subr.mxu0 0.0
    %3400 = vmatpush1.xpose.msra.mxu0 0.0
    %3401 = vmatprep.subr.mxu0 0.0
    %3402 = vmatpush1.xpose.msra.mxu0 0.0
    %3403 = vmatprep.subr.mxu0 0.0
    %3404 = vmatpush1.xpose.msra.mxu0 0.0
    %3405 = vmatprep.subr.mxu0 0.0
    %3406 = vmatpush1.xpose.msra.mxu0 0.0
    %3407 = vmatprep.subr.mxu0 0.0
    %3408 = vmatpush1.xpose.msra.mxu0 0.0
    %3409 = vmatprep.subr.mxu0 0.0
    %3410 = vmatpush1.xpose.msra.mxu0 0.0
    %3411 = vmatprep.subr.mxu0 0.0
    %3412 = vmatpush1.xpose.msra.mxu0 0.0
    %3413 = vmatprep.subr.mxu0 0.0
    %3414 = vmatpush1.xpose.msra.mxu0 0.0
    %3415 = vmatprep.subr.mxu0 0.0
    %3416 = vmatpush1.xpose.msra.mxu0 0.0
    %3417 = vmatprep.subr.mxu0 0.0
    %3418 = vmatpush1.xpose.msra.mxu0 0.0
    %3419 = vmatprep.subr.mxu0 0.0
    %3420 = vmatpush1.xpose.msra.mxu0 0.0
    %3421 = vmatprep.mubr.f32.mxu0 0.0
    %3422 = vmatmul.mubr.f32.gmra.mrb[0].mxu0 %v3325
    %v3423 = vpop.f32.mrb[0].mxu0
    %v3424 = vadd.f32 0.0, %v3423
    %v3425 = vpop.f32.mrb[0].mxu0
    %3426 = vmatprep.mubr.f32.mxu0 0.0
    %3427 = vmatmul.mubr.f32.gmra.mrb[0].mxu0 %v3327
    %v3428 = vpop.f32.mrb[0].mxu0
    %v3429 = vadd.f32 0.0, %v3428
    %v3430 = vpop.f32.mrb[0].mxu0
    %3431 = vmatprep.mubr.f32.mxu0 0.0
    %3432 = vmatmul.mubr.f32.gmra.mrb[0].mxu0 %v3329
    %v3433 = vpop.f32.mrb[0].mxu0
    %v3434 = vadd.f32 0.0, %v3433
    %v3435 = vpop.f32.mrb[0].mxu0
    %3436 = vmatprep.mubr.f32.mxu0 0.0
    %3437 = vmatmul.mubr.f32.gmra.mrb[0].mxu0 %v3331
    %v3438 = vpop.f32.mrb[0].mxu0
    %v3439 = vadd.f32 0.0, %v3438
    %v3440 = vpop.f32.mrb[0].mxu0
    %3441 = vmatprep.mubr.f32.mxu0 0.0
    %3442 = vmatmul.mubr.f32.gmra.mrb[0].mxu0 %v3333
    %v3443 = vpop.f32.mrb[0].mxu0
    %v3444 = vadd.f32 0.0, %v3443
    %v3445 = vpop.f32.mrb[0].mxu0
    %3446 = vmatprep.mubr.f32.mxu0 0.0
    %3447 = vmatmul.mubr.f32.gmra.mrb[0].mxu0 %v3335
    %v3448 = vpop.f32.mrb[0].mxu0
    %v3449 = vadd.f32 0.0, %v3448
    %v3450 = vpop.f32.mrb[0].mxu0
    %3451 = vmatprep.mubr.f32.mxu0 0.0
    %3452 = vmatmul.mubr.f32.gmra.mrb[0].mxu0 %v3337
    %v3453 = vpop.f32.mrb[0].mxu0
    %v3454 = vadd.f32 0.0, %v3453
    %v3455 = vpop.f32.mrb[0].mxu0
    %3456 = vmatprep.mubr.f32.mxu0 0.0
    %3457 = vmatmul.mubr.f32.gmra.mrb[0].mxu0 %v3339
    %v3458 = vpop.f32.mrb[0].mxu0
    %v3459 = vadd.f32 0.0, %v3458
    %v3460 = vpop.f32.mrb[0].mxu0
    %3461 = vdwg.mxu0
    %v3462 = vsel %vm524, %v3424, -1e+30
    %v3463 = vsel %vm525, %v3429, -1e+30
    %v3464 = vsel %vm526, %v3434, -1e+30
    %v3465 = vsel %vm527, %v3439, -1e+30
    %v3466 = vsel %vm528, %v3444, -1e+30
    %v3467 = vsel %vm529, %v3449, -1e+30
    %v3468 = vsel %vm530, %v3454, -1e+30
    %v3469 = vsel %vm531, %v3459, -1e+30
    %v3470 = vsel %vm1091, %v3462, -inf
    %3471 = vmax.xlane.f32.xlu0 %v3470
    %v3472 = vpop.xlane.xlu0 %3471
    %v3473 = vsel %vm1091, %v3463, -inf
    %3474 = vmax.xlane.f32.xlu0 %v3473
    %v3475 = vpop.xlane.xlu0 %3474
    %v3476 = vsel %vm1091, %v3464, -inf
    %3477 = vmax.xlane.f32.xlu0 %v3476
    %v3478 = vpop.xlane.xlu0 %3477
    %v3479 = vsel %vm1091, %v3465, -inf
    %3480 = vmax.xlane.f32.xlu0 %v3479
    %v3481 = vpop.xlane.xlu0 %3480
    %v3482 = vsel %vm1091, %v3466, -inf
    %3483 = vmax.xlane.f32.xlu0 %v3482
    %v3484 = vpop.xlane.xlu0 %3483
    %v3485 = vsel %vm1091, %v3467, -inf
    %3486 = vmax.xlane.f32.xlu0 %v3485
    %v3487 = vpop.xlane.xlu0 %3486
    %v3488 = vsel %vm1091, %v3468, -inf
    %3489 = vmax.xlane.f32.xlu0 %v3488
    %v3490 = vpop.xlane.xlu0 %3489
    %v3491 = vsel %vm1091, %v3469, -inf
    %3492 = vmax.xlane.f32.xlu0 %v3491
    %v3493 = vpop.xlane.xlu0 %3492
    %v3494 = vsub.f32 %v3462, %v3472
    %v3495 = vsub.f32 %v3463, %v3475
    %v3496 = vsub.f32 %v3464, %v3478
    %v3497 = vsub.f32 %v3465, %v3481
    %v3498 = vsub.f32 %v3466, %v3484
    %v3499 = vsub.f32 %v3467, %v3487
    %v3500 = vsub.f32 %v3468, %v3490
    %v3501 = vsub.f32 %v3469, %v3493
    %v3502 = vmul.f32 %v3494, 1.442695
    %v3503 = vpow.pop %v3502
    %v3504 = vmul.f32 %v3495, 1.442695
    %v3505 = vpow.pop %v3504
    %v3506 = vmul.f32 %v3496, 1.442695
    %v3507 = vpow.pop %v3506
    %v3508 = vmul.f32 %v3497, 1.442695
    %v3509 = vpow.pop %v3508
    %v3510 = vmul.f32 %v3498, 1.442695
    %v3511 = vpow.pop %v3510
    %v3512 = vmul.f32 %v3499, 1.442695
    %v3513 = vpow.pop %v3512
    %v3514 = vmul.f32 %v3500, 1.442695
    %v3515 = vpow.pop %v3514
    %v3516 = vmul.f32 %v3501, 1.442695
    %v3517 = vpow.pop %v3516
    %v3518 = vsel %vm1091, %v3503, 0.0
    %3519 = vadd.xlane.f32.xlu0 %v3518
    %v3520 = vpop.xlane.xlu0 %3519
    %v3521 = vsel %vm1091, %v3505, 0.0
    %3522 = vadd.xlane.f32.xlu0 %v3521
    %v3523 = vpop.xlane.xlu0 %3522
    %v3524 = vsel %vm1091, %v3507, 0.0
    %3525 = vadd.xlane.f32.xlu0 %v3524
    %v3526 = vpop.xlane.xlu0 %3525
    %v3527 = vsel %vm1091, %v3509, 0.0
    %3528 = vadd.xlane.f32.xlu0 %v3527
    %v3529 = vpop.xlane.xlu0 %3528
    %v3530 = vsel %vm1091, %v3511, 0.0
    %3531 = vadd.xlane.f32.xlu0 %v3530
    %v3532 = vpop.xlane.xlu0 %3531
    %v3533 = vsel %vm1091, %v3513, 0.0
    %3534 = vadd.xlane.f32.xlu0 %v3533
    %v3535 = vpop.xlane.xlu0 %3534
    %v3536 = vsel %vm1091, %v3515, 0.0
    %3537 = vadd.xlane.f32.xlu0 %v3536
    %v3538 = vpop.xlane.xlu0 %3537
    %v3539 = vsel %vm1091, %v3517, 0.0
    %3540 = vadd.xlane.f32.xlu0 %v3539
    %v3541 = vpop.xlane.xlu0 %3540
    %v3542 = vrcp.pop %v3520
    %v3543 = vmul.f32 %v3503, %v3542
    %v3544 = vrcp.pop %v3523
    %v3545 = vmul.f32 %v3505, %v3544
    %v3546 = vrcp.pop %v3526
    %v3547 = vmul.f32 %v3507, %v3546
    %v3548 = vrcp.pop %v3529
    %v3549 = vmul.f32 %v3509, %v3548
    %v3550 = vrcp.pop %v3532
    %v3551 = vmul.f32 %v3511, %v3550
    %v3552 = vrcp.pop %v3535
    %v3553 = vmul.f32 %v3513, %v3552
    %v3554 = vrcp.pop %v3538
    %v3555 = vmul.f32 %v3515, %v3554
    %v3556 = vrcp.pop %v3541
    %v3557 = vmul.f32 %v3517, %v3556
    %3566 = vrot.lane.b32.xlu0 %v2869, 112
    %v3567 = vpop.permute.xlu0 %3566
    %3568 = vrot.lane.b32.xlu0 %v2874, 112
    %v3569 = vpop.permute.xlu0 %3568
    %3570 = vrot.lane.b32.xlu0 %v2879, 112
    %v3571 = vpop.permute.xlu0 %3570
    %3572 = vrot.lane.b32.xlu0 %v2884, 112
    %v3573 = vpop.permute.xlu0 %3572
    %3574 = vrot.lane.b32.xlu0 %v2889, 112
    %v3575 = vpop.permute.xlu0 %3574
    %3576 = vrot.lane.b32.xlu0 %v2894, 112
    %v3577 = vpop.permute.xlu0 %3576
    %3578 = vrot.lane.b32.xlu0 %v2899, 112
    %v3579 = vpop.permute.xlu0 %3578
    %3580 = vrot.lane.b32.xlu0 %v2904, 112
    %v3581 = vpop.permute.xlu0 %3580
    %v3591 = vsel %vm1091, %v3543, 0
    %v3594 = vsel %vm1091, %v3545, 0
    %v3597 = vsel %vm1091, %v3547, 0
    %v3600 = vsel %vm1091, %v3549, 0
    %v3603 = vsel %vm1091, %v3551, 0
    %v3606 = vsel %vm1091, %v3553, 0
    %v3609 = vsel %vm1091, %v3555, 0
    %v3612 = vsel %vm1091, %v3557, 0
    %3614 = vmatprep.subr.mxu0 0.0
    %3615 = vmatpush1.msra.mxu0 %v3567
    %3616 = vmatprep.subr.mxu0 0.0
    %3617 = vmatpush1.msra.mxu0 %v3569
    %3618 = vmatprep.subr.mxu0 0.0
    %3619 = vmatpush1.msra.mxu0 %v3571
    %3620 = vmatprep.subr.mxu0 0.0
    %3621 = vmatpush1.msra.mxu0 %v3573
    %3622 = vmatprep.subr.mxu0 0.0
    %3623 = vmatpush1.msra.mxu0 %v3575
    %3624 = vmatprep.subr.mxu0 0.0
    %3625 = vmatpush1.msra.mxu0 %v3577
    %3626 = vmatprep.subr.mxu0 0.0
    %3627 = vmatpush1.msra.mxu0 %v3579
    %3628 = vmatprep.subr.mxu0 0.0
    %3629 = vmatpush1.msra.mxu0 %v3581
    %3630 = vmatprep.subr.mxu0 0.0
    %3631 = vmatpush1.msra.mxu0 0.0
    %3632 = vmatprep.subr.mxu0 0.0
    %3633 = vmatpush1.msra.mxu0 0.0
    %3634 = vmatprep.subr.mxu0 0.0
    %3635 = vmatpush1.msra.mxu0 0.0
    %3636 = vmatprep.subr.mxu0 0.0
    %3637 = vmatpush1.msra.mxu0 0.0
    %3638 = vmatprep.subr.mxu0 0.0
    %3639 = vmatpush1.msra.mxu0 0.0
    %3640 = vmatprep.subr.mxu0 0.0
    %3641 = vmatpush1.msra.mxu0 0.0
    %3642 = vmatprep.subr.mxu0 0.0
    %3643 = vmatpush1.msra.mxu0 0.0
    %3644 = vmatprep.subr.mxu0 0.0
    %3645 = vmatpush1.msra.mxu0 0.0
    %3646 = vmatprep.subr.mxu0 0.0
    %3647 = vmatpush1.msra.mxu0 0.0
    %3648 = vmatprep.subr.mxu0 0.0
    %3649 = vmatpush1.msra.mxu0 0.0
    %3650 = vmatprep.subr.mxu0 0.0
    %3651 = vmatpush1.msra.mxu0 0.0
    %3652 = vmatprep.subr.mxu0 0.0
    %3653 = vmatpush1.msra.mxu0 0.0
    %3654 = vmatprep.subr.mxu0 0.0
    %3655 = vmatpush1.msra.mxu0 0.0
    %3656 = vmatprep.subr.mxu0 0.0
    %3657 = vmatpush1.msra.mxu0 0.0
    %3658 = vmatprep.subr.mxu0 0.0
    %3659 = vmatpush1.msra.mxu0 0.0
    %3660 = vmatprep.subr.mxu0 0.0
    %3661 = vmatpush1.msra.mxu0 0.0
    %3662 = vmatprep.subr.mxu0 0.0
    %3663 = vmatpush1.msra.mxu0 0.0
    %3664 = vmatprep.subr.mxu0 0.0
    %3665 = vmatpush1.msra.mxu0 0.0
    %3666 = vmatprep.subr.mxu0 0.0
    %3667 = vmatpush1.msra.mxu0 0.0
    %3668 = vmatprep.subr.mxu0 0.0
    %3669 = vmatpush1.msra.mxu0 0.0
    %3670 = vmatprep.subr.mxu0 0.0
    %3671 = vmatpush1.msra.mxu0 0.0
    %3672 = vmatprep.subr.mxu0 0.0
    %3673 = vmatpush1.msra.mxu0 0.0
    %3674 = vmatprep.subr.mxu0 0.0
    %3675 = vmatpush1.msra.mxu0 0.0
    %3676 = vmatprep.subr.mxu0 0.0
    %3677 = vmatpush1.msra.mxu0 0.0
    %3678 = vmatprep.mubr.f32.mxu0 0.0
    %3679 = vmatmul.mubr.f32.gmra.mrb[0].mxu0 %v3591
    %v3680 = vpop.f32.mrb[0].mxu0
    %v3681 = vadd.f32 0.0, %v3680
    %v3682 = vpop.f32.mrb[0].mxu0
    %3683 = vmatprep.mubr.f32.mxu0 0.0
    %3684 = vmatmul.mubr.f32.gmra.mrb[0].mxu0 %v3594
    %v3685 = vpop.f32.mrb[0].mxu0
    %v3686 = vadd.f32 0.0, %v3685
    %v3687 = vpop.f32.mrb[0].mxu0
    %3688 = vmatprep.mubr.f32.mxu0 0.0
    %3689 = vmatmul.mubr.f32.gmra.mrb[0].mxu0 %v3597
    %v3690 = vpop.f32.mrb[0].mxu0
    %v3691 = vadd.f32 0.0, %v3690
    %v3692 = vpop.f32.mrb[0].mxu0
    %3693 = vmatprep.mubr.f32.mxu0 0.0
    %3694 = vmatmul.mubr.f32.gmra.mrb[0].mxu0 %v3600
    %v3695 = vpop.f32.mrb[0].mxu0
    %v3696 = vadd.f32 0.0, %v3695
    %v3697 = vpop.f32.mrb[0].mxu0
    %3698 = vmatprep.mubr.f32.mxu0 0.0
    %3699 = vmatmul.mubr.f32.gmra.mrb[0].mxu0 %v3603
    %v3700 = vpop.f32.mrb[0].mxu0
    %v3701 = vadd.f32 0.0, %v3700
    %v3702 = vpop.f32.mrb[0].mxu0
    %3703 = vmatprep.mubr.f32.mxu0 0.0
    %3704 = vmatmul.mubr.f32.gmra.mrb[0].mxu0 %v3606
    %v3705 = vpop.f32.mrb[0].mxu0
    %v3706 = vadd.f32 0.0, %v3705
    %v3707 = vpop.f32.mrb[0].mxu0
    %3708 = vmatprep.mubr.f32.mxu0 0.0
    %3709 = vmatmul.mubr.f32.gmra.mrb[0].mxu0 %v3609
    %v3710 = vpop.f32.mrb[0].mxu0
    %v3711 = vadd.f32 0.0, %v3710
    %v3712 = vpop.f32.mrb[0].mxu0
    %3713 = vmatprep.mubr.f32.mxu0 0.0
    %3714 = vmatmul.mubr.f32.gmra.mrb[0].mxu0 %v3612
    %v3715 = vpop.f32.mrb[0].mxu0
    %v3716 = vadd.f32 0.0, %v3715
    %v3717 = vpop.f32.mrb[0].mxu0
    %3718 = vdwg.mxu0
    %3727 = vrot.lane.b32.xlu0 %v3681, 16
    %v3728 = vpop.permute.xlu0 %3727
    %3729 = vrot.lane.b32.xlu0 %v3686, 16
    %v3730 = vpop.permute.xlu0 %3729
    %3731 = vrot.lane.b32.xlu0 %v3691, 16
    %v3732 = vpop.permute.xlu0 %3731
    %3733 = vrot.lane.b32.xlu0 %v3696, 16
    %v3734 = vpop.permute.xlu0 %3733
    %3735 = vrot.lane.b32.xlu0 %v3701, 16
    %v3736 = vpop.permute.xlu0 %3735
    %3737 = vrot.lane.b32.xlu0 %v3706, 16
    %v3738 = vpop.permute.xlu0 %3737
    %3739 = vrot.lane.b32.xlu0 %v3711, 16
    %v3740 = vpop.permute.xlu0 %3739
    %3741 = vrot.lane.b32.xlu0 %v3716, 16
    %v3742 = vpop.permute.xlu0 %3741
    %v3751 = vsel %vm929, %v3255, %v3728
    %v3752 = vsel %vm929, %v3260, %v3730
    %v3753 = vsel %vm929, %v3265, %v3732
    %v3754 = vsel %vm929, %v3270, %v3734
    %v3755 = vsel %vm929, %v3275, %v3736
    %v3756 = vsel %vm929, %v3280, %v3738
    %v3757 = vsel %vm929, %v3285, %v3740
    %v3758 = vsel %vm929, %v3290, %v3742
    %v3759 = vlaneseq
    %v3760 = vshrl.u32 %v3759, 7
    %v3761 = vsub.s32 0, %v3760
    %v3762 = vrot.slane %v2549, %v3761
    %v3764 = vsel %vm385, %v3751, 0
    %v3767 = vsel %vm385, %v3752, 0
    %v3770 = vsel %vm385, %v3753, 0
    %v3773 = vsel %vm385, %v3754, 0
    %v3776 = vsel %vm385, %v3755, 0
    %v3779 = vsel %vm385, %v3756, 0
    %v3782 = vsel %vm385, %v3757, 0
    %v3785 = vsel %vm385, %v3758, 0
    %3787 = vmatprep.subr.mxu0 0.0
    %3788 = vmatpush1.msra.mxu0 %v2530
    %3789 = vmatprep.subr.mxu0 0.0
    %3790 = vmatpush1.msra.mxu0 %v2531
    %3791 = vmatprep.subr.mxu0 0.0
    %3792 = vmatpush1.msra.mxu0 %v2532
    %3793 = vmatprep.subr.mxu0 0.0
    %3794 = vmatpush1.msra.mxu0 %v2533
    %3795 = vmatprep.subr.mxu0 0.0
    %3796 = vmatpush1.msra.mxu0 0.0
    %3797 = vmatprep.subr.mxu0 0.0
    %3798 = vmatpush1.msra.mxu0 0.0
    %3799 = vmatprep.subr.mxu0 0.0
    %3800 = vmatpush1.msra.mxu0 0.0
    %3801 = vmatprep.subr.mxu0 0.0
    %3802 = vmatpush1.msra.mxu0 0.0
    %3803 = vmatprep.subr.mxu0 0.0
    %3804 = vmatpush1.msra.mxu0 0.0
    %3805 = vmatprep.subr.mxu0 0.0
    %3806 = vmatpush1.msra.mxu0 0.0
    %3807 = vmatprep.subr.mxu0 0.0
    %3808 = vmatpush1.msra.mxu0 0.0
    %3809 = vmatprep.subr.mxu0 0.0
    %3810 = vmatpush1.msra.mxu0 0.0
    %3811 = vmatprep.subr.mxu0 0.0
    %3812 = vmatpush1.msra.mxu0 0.0
    %3813 = vmatprep.subr.mxu0 0.0
    %3814 = vmatpush1.msra.mxu0 0.0
    %3815 = vmatprep.subr.mxu0 0.0
    %3816 = vmatpush1.msra.mxu0 0.0
    %3817 = vmatprep.subr.mxu0 0.0
    %3818 = vmatpush1.msra.mxu0 0.0
    %3819 = vmatprep.subr.mxu0 0.0
    %3820 = vmatpush1.msra.mxu0 0.0
    %3821 = vmatprep.subr.mxu0 0.0
    %3822 = vmatpush1.msra.mxu0 0.0
    %3823 = vmatprep.subr.mxu0 0.0
    %3824 = vmatpush1.msra.mxu0 0.0
    %3825 = vmatprep.subr.mxu0 0.0
    %3826 = vmatpush1.msra.mxu0 0.0
    %3827 = vmatprep.subr.mxu0 0.0
    %3828 = vmatpush1.msra.mxu0 0.0
    %3829 = vmatprep.subr.mxu0 0.0
    %3830 = vmatpush1.msra.mxu0 0.0
    %3831 = vmatprep.subr.mxu0 0.0
    %3832 = vmatpush1.msra.mxu0 0.0
    %3833 = vmatprep.subr.mxu0 0.0
    %3834 = vmatpush1.msra.mxu0 0.0
    %3835 = vmatprep.subr.mxu0 0.0
    %3836 = vmatpush1.msra.mxu0 0.0
    %3837 = vmatprep.subr.mxu0 0.0
    %3838 = vmatpush1.msra.mxu0 0.0
    %3839 = vmatprep.subr.mxu0 0.0
    %3840 = vmatpush1.msra.mxu0 0.0
    %3841 = vmatprep.subr.mxu0 0.0
    %3842 = vmatpush1.msra.mxu0 0.0
    %3843 = vmatprep.subr.mxu0 0.0
    %3844 = vmatpush1.msra.mxu0 0.0
    %3845 = vmatprep.subr.mxu0 0.0
    %3846 = vmatpush1.msra.mxu0 0.0
    %3847 = vmatprep.subr.mxu0 0.0
    %3848 = vmatpush1.msra.mxu0 0.0
    %3849 = vmatprep.subr.mxu0 0.0
    %3850 = vmatpush1.msra.mxu0 0.0
    %3851 = vmatprep.mubr.f32.mxu0 0.0
    %3852 = vmatmul.mubr.f32.gmra.mrb[0].mxu0 %v3764
    %v3853 = vpop.f32.mrb[0].mxu0
    %v3854 = vadd.f32 %v3762, %v3853
    %v3855 = vpop.f32.mrb[0].mxu0
    %3856 = vmatprep.mubr.f32.mxu0 0.0
    %3857 = vmatmul.mubr.f32.gmra.mrb[0].mxu0 %v3767
    %v3858 = vpop.f32.mrb[0].mxu0
    %v3859 = vadd.f32 %v3762, %v3858
    %v3860 = vpop.f32.mrb[0].mxu0
    %3861 = vmatprep.mubr.f32.mxu0 0.0
    %3862 = vmatmul.mubr.f32.gmra.mrb[0].mxu0 %v3770
    %v3863 = vpop.f32.mrb[0].mxu0
    %v3864 = vadd.f32 %v3762, %v3863
    %v3865 = vpop.f32.mrb[0].mxu0
    %3866 = vmatprep.mubr.f32.mxu0 0.0
    %3867 = vmatmul.mubr.f32.gmra.mrb[0].mxu0 %v3773
    %v3868 = vpop.f32.mrb[0].mxu0
    %v3869 = vadd.f32 %v3762, %v3868
    %v3870 = vpop.f32.mrb[0].mxu0
    %3871 = vmatprep.mubr.f32.mxu0 0.0
    %3872 = vmatmul.mubr.f32.gmra.mrb[0].mxu0 %v3776
    %v3873 = vpop.f32.mrb[0].mxu0
    %v3874 = vadd.f32 %v3762, %v3873
    %v3875 = vpop.f32.mrb[0].mxu0
    %3876 = vmatprep.mubr.f32.mxu0 0.0
    %3877 = vmatmul.mubr.f32.gmra.mrb[0].mxu0 %v3779
    %v3878 = vpop.f32.mrb[0].mxu0
    %v3879 = vadd.f32 %v3762, %v3878
    %v3880 = vpop.f32.mrb[0].mxu0
    %3881 = vmatprep.mubr.f32.mxu0 0.0
    %3882 = vmatmul.mubr.f32.gmra.mrb[0].mxu0 %v3782
    %v3883 = vpop.f32.mrb[0].mxu0
    %v3884 = vadd.f32 %v3762, %v3883
    %v3885 = vpop.f32.mrb[0].mxu0
    %3886 = vmatprep.mubr.f32.mxu0 0.0
    %3887 = vmatmul.mubr.f32.gmra.mrb[0].mxu0 %v3785
    %v3888 = vpop.f32.mrb[0].mxu0
    %v3889 = vadd.f32 %v3762, %v3888
    %v3890 = vpop.f32.mrb[0].mxu0
    %3891 = vdwg.mxu0
    %v3892 = vadd.f32 %v3854, %v2510
    %v3893 = vadd.f32 %v3859, %v2511
    %v3894 = vadd.f32 %v3864, %v2512
    %v3895 = vadd.f32 %v3869, %v2513
    %v3896 = vadd.f32 %v3874, %v2514
    %v3897 = vadd.f32 %v3879, %v2515
    %v3898 = vadd.f32 %v3884, %v2516
    %v3899 = vadd.f32 %v3889, %v2517
    %v3900 = vsel %vm385, %v3892, 0.0
    %3901 = vadd.xlane.f32.xlu0 %v3900
    %v3902 = vpop.xlane.xlu0 %3901
    %v3903 = vsel %vm385, %v3893, 0.0
    %3904 = vadd.xlane.f32.xlu0 %v3903
    %v3905 = vpop.xlane.xlu0 %3904
    %v3906 = vsel %vm385, %v3894, 0.0
    %3907 = vadd.xlane.f32.xlu0 %v3906
    %v3908 = vpop.xlane.xlu0 %3907
    %v3909 = vsel %vm385, %v3895, 0.0
    %3910 = vadd.xlane.f32.xlu0 %v3909
    %v3911 = vpop.xlane.xlu0 %3910
    %v3912 = vsel %vm385, %v3896, 0.0
    %3913 = vadd.xlane.f32.xlu0 %v3912
    %v3914 = vpop.xlane.xlu0 %3913
    %v3915 = vsel %vm385, %v3897, 0.0
    %3916 = vadd.xlane.f32.xlu0 %v3915
    %v3917 = vpop.xlane.xlu0 %3916
    %v3918 = vsel %vm385, %v3898, 0.0
    %3919 = vadd.xlane.f32.xlu0 %v3918
    %v3920 = vpop.xlane.xlu0 %3919
    %v3921 = vsel %vm385, %v3899, 0.0
    %3922 = vadd.xlane.f32.xlu0 %v3921
    %v3923 = vpop.xlane.xlu0 %3922
    %v3924 = vmul.f32 %v3902, %v410
    %v3925 = vmul.f32 %v3905, %v410
    %v3926 = vmul.f32 %v3908, %v410
    %v3927 = vmul.f32 %v3911, %v410
    %v3928 = vmul.f32 %v3914, %v410
    %v3929 = vmul.f32 %v3917, %v410
    %v3930 = vmul.f32 %v3920, %v410
    %v3931 = vmul.f32 %v3923, %v410
    %v3932 = vsub.f32 %v3892, %v3924
    %v3933 = vsub.f32 %v3893, %v3925
    %v3934 = vsub.f32 %v3894, %v3926
    %v3935 = vsub.f32 %v3895, %v3927
    %v3936 = vsub.f32 %v3896, %v3928
    %v3937 = vsub.f32 %v3897, %v3929
    %v3938 = vsub.f32 %v3898, %v3930
    %v3939 = vsub.f32 %v3899, %v3931
    %v3940 = vmul.f32 %v3932, %v3932
    %v3941 = vmul.f32 %v3933, %v3933
    %v3942 = vmul.f32 %v3934, %v3934
    %v3943 = vmul.f32 %v3935, %v3935
    %v3944 = vmul.f32 %v3936, %v3936
    %v3945 = vmul.f32 %v3937, %v3937
    %v3946 = vmul.f32 %v3938, %v3938
    %v3947 = vmul.f32 %v3939, %v3939
    %v3948 = vsel %vm385, %v3940, 0.0
    %3949 = vadd.xlane.f32.xlu0 %v3948
    %v3950 = vpop.xlane.xlu0 %3949
    %v3951 = vsel %vm385, %v3941, 0.0
    %3952 = vadd.xlane.f32.xlu0 %v3951
    %v3953 = vpop.xlane.xlu0 %3952
    %v3954 = vsel %vm385, %v3942, 0.0
    %3955 = vadd.xlane.f32.xlu0 %v3954
    %v3956 = vpop.xlane.xlu0 %3955
    %v3957 = vsel %vm385, %v3943, 0.0
    %3958 = vadd.xlane.f32.xlu0 %v3957
    %v3959 = vpop.xlane.xlu0 %3958
    %v3960 = vsel %vm385, %v3944, 0.0
    %3961 = vadd.xlane.f32.xlu0 %v3960
    %v3962 = vpop.xlane.xlu0 %3961
    %v3963 = vsel %vm385, %v3945, 0.0
    %3964 = vadd.xlane.f32.xlu0 %v3963
    %v3965 = vpop.xlane.xlu0 %3964
    %v3966 = vsel %vm385, %v3946, 0.0
    %3967 = vadd.xlane.f32.xlu0 %v3966
    %v3968 = vpop.xlane.xlu0 %3967
    %v3969 = vsel %vm385, %v3947, 0.0
    %3970 = vadd.xlane.f32.xlu0 %v3969
    %v3971 = vpop.xlane.xlu0 %3970
    %v3972 = vmul.f32 %v3950, %v410
    %v3973 = vmul.f32 %v3953, %v410
    %v3974 = vmul.f32 %v3956, %v410
    %v3975 = vmul.f32 %v3959, %v410
    %v3976 = vmul.f32 %v3962, %v410
    %v3977 = vmul.f32 %v3965, %v410
    %v3978 = vmul.f32 %v3968, %v410
    %v3979 = vmul.f32 %v3971, %v410
    %v3980 = vadd.f32 %v3972, 1e-12
    %v3981 = vadd.f32 %v3973, 1e-12
    %v3982 = vadd.f32 %v3974, 1e-12
    %v3983 = vadd.f32 %v3975, 1e-12
    %v3984 = vadd.f32 %v3976, 1e-12
    %v3985 = vadd.f32 %v3977, 1e-12
    %v3986 = vadd.f32 %v3978, 1e-12
    %v3987 = vadd.f32 %v3979, 1e-12
    %v3988 = vrsqrt.pop %v3980
    %v3989 = vrsqrt.pop %v3981
    %v3990 = vrsqrt.pop %v3982
    %v3991 = vrsqrt.pop %v3983
    %v3992 = vrsqrt.pop %v3984
    %v3993 = vrsqrt.pop %v3985
    %v3994 = vrsqrt.pop %v3986
    %v3995 = vrsqrt.pop %v3987
    %v3996 = vmul.f32 %v3932, %v3988
    %v3997 = vmul.f32 %v3933, %v3989
    %v3998 = vmul.f32 %v3934, %v3990
    %v3999 = vmul.f32 %v3935, %v3991
    %v4000 = vmul.f32 %v3936, %v3992
    %v4001 = vmul.f32 %v3937, %v3993
    %v4002 = vmul.f32 %v3938, %v3994
    %v4003 = vmul.f32 %v3939, %v3995
    %v4004 = vlaneseq
    %v4005 = vshrl.u32 %v4004, 7
    %v4006 = vsub.s32 0, %v4005
    %v4007 = vrot.slane %v2552, %v4006
    %v4008 = vmul.f32 %v3996, %v4007
    %v4009 = vmul.f32 %v3997, %v4007
    %v4010 = vmul.f32 %v3998, %v4007
    %v4011 = vmul.f32 %v3999, %v4007
    %v4012 = vmul.f32 %v4000, %v4007
    %v4013 = vmul.f32 %v4001, %v4007
    %v4014 = vmul.f32 %v4002, %v4007
    %v4015 = vmul.f32 %v4003, %v4007
    %v4016 = vlaneseq
    %v4017 = vshrl.u32 %v4016, 7
    %v4018 = vsub.s32 0, %v4017
    %v4019 = vrot.slane %v2553, %v4018
    %v4020 = vadd.f32 %v4008, %v4019
    %v4021 = vadd.f32 %v4009, %v4019
    %v4022 = vadd.f32 %v4010, %v4019
    %v4023 = vadd.f32 %v4011, %v4019
    %v4024 = vadd.f32 %v4012, %v4019
    %v4025 = vadd.f32 %v4013, %v4019
    %v4026 = vadd.f32 %v4014, %v4019
    %v4027 = vadd.f32 %v4015, %v4019
    %v4028 = vlaneseq
    %v4029 = vshrl.u32 %v4028, 7
    %v4030 = vsub.s32 0, %v4029
    %v4031 = vrot.slane %v2550, %v4030
    %v4033 = vsel %vm385, %v4020, 0
    %v4036 = vsel %vm385, %v4021, 0
    %v4039 = vsel %vm385, %v4022, 0
    %v4042 = vsel %vm385, %v4023, 0
    %v4045 = vsel %vm385, %v4024, 0
    %v4048 = vsel %vm385, %v4025, 0
    %v4051 = vsel %vm385, %v4026, 0
    %v4054 = vsel %vm385, %v4027, 0
    %4056 = vmatprep.subr.mxu0 0.0
    %4057 = vmatpush1.msra.mxu0 %v2534
    %4058 = vmatprep.subr.mxu0 0.0
    %4059 = vmatpush1.msra.mxu0 %v2535
    %4060 = vmatprep.subr.mxu0 0.0
    %4061 = vmatpush1.msra.mxu0 %v2536
    %4062 = vmatprep.subr.mxu0 0.0
    %4063 = vmatpush1.msra.mxu0 %v2537
    %4064 = vmatprep.subr.mxu0 0.0
    %4065 = vmatpush1.msra.mxu0 0.0
    %4066 = vmatprep.subr.mxu0 0.0
    %4067 = vmatpush1.msra.mxu0 0.0
    %4068 = vmatprep.subr.mxu0 0.0
    %4069 = vmatpush1.msra.mxu0 0.0
    %4070 = vmatprep.subr.mxu0 0.0
    %4071 = vmatpush1.msra.mxu0 0.0
    %4072 = vmatprep.subr.mxu0 0.0
    %4073 = vmatpush1.msra.mxu0 0.0
    %4074 = vmatprep.subr.mxu0 0.0
    %4075 = vmatpush1.msra.mxu0 0.0
    %4076 = vmatprep.subr.mxu0 0.0
    %4077 = vmatpush1.msra.mxu0 0.0
    %4078 = vmatprep.subr.mxu0 0.0
    %4079 = vmatpush1.msra.mxu0 0.0
    %4080 = vmatprep.subr.mxu0 0.0
    %4081 = vmatpush1.msra.mxu0 0.0
    %4082 = vmatprep.subr.mxu0 0.0
    %4083 = vmatpush1.msra.mxu0 0.0
    %4084 = vmatprep.subr.mxu0 0.0
    %4085 = vmatpush1.msra.mxu0 0.0
    %4086 = vmatprep.subr.mxu0 0.0
    %4087 = vmatpush1.msra.mxu0 0.0
    %4088 = vmatprep.subr.mxu0 0.0
    %4089 = vmatpush1.msra.mxu0 0.0
    %4090 = vmatprep.subr.mxu0 0.0
    %4091 = vmatpush1.msra.mxu0 0.0
    %4092 = vmatprep.subr.mxu0 0.0
    %4093 = vmatpush1.msra.mxu0 0.0
    %4094 = vmatprep.subr.mxu0 0.0
    %4095 = vmatpush1.msra.mxu0 0.0
    %4096 = vmatprep.subr.mxu0 0.0
    %4097 = vmatpush1.msra.mxu0 0.0
    %4098 = vmatprep.subr.mxu0 0.0
    %4099 = vmatpush1.msra.mxu0 0.0
    %4100 = vmatprep.subr.mxu0 0.0
    %4101 = vmatpush1.msra.mxu0 0.0
    %4102 = vmatprep.subr.mxu0 0.0
    %4103 = vmatpush1.msra.mxu0 0.0
    %4104 = vmatprep.subr.mxu0 0.0
    %4105 = vmatpush1.msra.mxu0 0.0
    %4106 = vmatprep.subr.mxu0 0.0
    %4107 = vmatpush1.msra.mxu0 0.0
    %4108 = vmatprep.subr.mxu0 0.0
    %4109 = vmatpush1.msra.mxu0 0.0
    %4110 = vmatprep.subr.mxu0 0.0
    %4111 = vmatpush1.msra.mxu0 0.0
    %4112 = vmatprep.subr.mxu0 0.0
    %4113 = vmatpush1.msra.mxu0 0.0
    %4114 = vmatprep.subr.mxu0 0.0
    %4115 = vmatpush1.msra.mxu0 0.0
    %4116 = vmatprep.subr.mxu0 0.0
    %4117 = vmatpush1.msra.mxu0 0.0
    %4118 = vmatprep.subr.mxu0 0.0
    %4119 = vmatpush1.msra.mxu0 0.0
    %4120 = vmatprep.mubr.f32.mxu0 0.0
    %4121 = vmatmul.mubr.f32.gmra.mrb[0].mxu0 %v4033
    %v4122 = vpop.f32.mrb[0].mxu0
    %v4123 = vadd.f32 %v4031, %v4122
    %v4124 = vpop.f32.mrb[0].mxu0
    %4125 = vmatprep.mubr.f32.mxu0 0.0
    %4126 = vmatmul.mubr.f32.gmra.mrb[0].mxu0 %v4036
    %v4127 = vpop.f32.mrb[0].mxu0
    %v4128 = vadd.f32 %v4031, %v4127
    %v4129 = vpop.f32.mrb[0].mxu0
    %4130 = vmatprep.mubr.f32.mxu0 0.0
    %4131 = vmatmul.mubr.f32.gmra.mrb[0].mxu0 %v4039
    %v4132 = vpop.f32.mrb[0].mxu0
    %v4133 = vadd.f32 %v4031, %v4132
    %v4134 = vpop.f32.mrb[0].mxu0
    %4135 = vmatprep.mubr.f32.mxu0 0.0
    %4136 = vmatmul.mubr.f32.gmra.mrb[0].mxu0 %v4042
    %v4137 = vpop.f32.mrb[0].mxu0
    %v4138 = vadd.f32 %v4031, %v4137
    %v4139 = vpop.f32.mrb[0].mxu0
    %4140 = vmatprep.mubr.f32.mxu0 0.0
    %4141 = vmatmul.mubr.f32.gmra.mrb[0].mxu0 %v4045
    %v4142 = vpop.f32.mrb[0].mxu0
    %v4143 = vadd.f32 %v4031, %v4142
    %v4144 = vpop.f32.mrb[0].mxu0
    %4145 = vmatprep.mubr.f32.mxu0 0.0
    %4146 = vmatmul.mubr.f32.gmra.mrb[0].mxu0 %v4048
    %v4147 = vpop.f32.mrb[0].mxu0
    %v4148 = vadd.f32 %v4031, %v4147
    %v4149 = vpop.f32.mrb[0].mxu0
    %4150 = vmatprep.mubr.f32.mxu0 0.0
    %4151 = vmatmul.mubr.f32.gmra.mrb[0].mxu0 %v4051
    %v4152 = vpop.f32.mrb[0].mxu0
    %v4153 = vadd.f32 %v4031, %v4152
    %v4154 = vpop.f32.mrb[0].mxu0
    %4155 = vmatprep.mubr.f32.mxu0 0.0
    %4156 = vmatmul.mubr.f32.gmra.mrb[0].mxu0 %v4054
    %v4157 = vpop.f32.mrb[0].mxu0
    %v4158 = vadd.f32 %v4031, %v4157
    %v4159 = vpop.f32.mrb[0].mxu0
    %4160 = vdwg.mxu0
    %v4161 = vmul.f32 %v4123, %v4123
    %v4162 = vmul.f32 %v4128, %v4128
    %v4163 = vmul.f32 %v4133, %v4133
    %v4164 = vmul.f32 %v4138, %v4138
    %v4165 = vmul.f32 %v4143, %v4143
    %v4166 = vmul.f32 %v4148, %v4148
    %v4167 = vmul.f32 %v4153, %v4153
    %v4168 = vmul.f32 %v4158, %v4158
    %v4169 = vmul.f32 %v4123, %v4161
    %v4170 = vmul.f32 %v4128, %v4162
    %v4171 = vmul.f32 %v4133, %v4163
    %v4172 = vmul.f32 %v4138, %v4164
    %v4173 = vmul.f32 %v4143, %v4165
    %v4174 = vmul.f32 %v4148, %v4166
    %v4175 = vmul.f32 %v4153, %v4167
    %v4176 = vmul.f32 %v4158, %v4168
    %v4177 = vmul.f32 %v4169, 0.044715
    %v4178 = vmul.f32 %v4170, 0.044715
    %v4179 = vmul.f32 %v4171, 0.044715
    %v4180 = vmul.f32 %v4172, 0.044715
    %v4181 = vmul.f32 %v4173, 0.044715
    %v4182 = vmul.f32 %v4174, 0.044715
    %v4183 = vmul.f32 %v4175, 0.044715
    %v4184 = vmul.f32 %v4176, 0.044715
    %v4185 = vadd.f32 %v4123, %v4177
    %v4186 = vadd.f32 %v4128, %v4178
    %v4187 = vadd.f32 %v4133, %v4179
    %v4188 = vadd.f32 %v4138, %v4180
    %v4189 = vadd.f32 %v4143, %v4181
    %v4190 = vadd.f32 %v4148, %v4182
    %v4191 = vadd.f32 %v4153, %v4183
    %v4192 = vadd.f32 %v4158, %v4184
    %v4193 = vmul.f32 %v4185, 0.7978846
    %v4194 = vmul.f32 %v4186, 0.7978846
    %v4195 = vmul.f32 %v4187, 0.7978846
    %v4196 = vmul.f32 %v4188, 0.7978846
    %v4197 = vmul.f32 %v4189, 0.7978846
    %v4198 = vmul.f32 %v4190, 0.7978846
    %v4199 = vmul.f32 %v4191, 0.7978846
    %v4200 = vmul.f32 %v4192, 0.7978846
    %v4201 = vtanh.pop %v4193
    %v4202 = vtanh.pop %v4194
    %v4203 = vtanh.pop %v4195
    %v4204 = vtanh.pop %v4196
    %v4205 = vtanh.pop %v4197
    %v4206 = vtanh.pop %v4198
    %v4207 = vtanh.pop %v4199
    %v4208 = vtanh.pop %v4200
    %v4209 = vadd.f32 %v4201, 1.0
    %v4210 = vadd.f32 %v4202, 1.0
    %v4211 = vadd.f32 %v4203, 1.0
    %v4212 = vadd.f32 %v4204, 1.0
    %v4213 = vadd.f32 %v4205, 1.0
    %v4214 = vadd.f32 %v4206, 1.0
    %v4215 = vadd.f32 %v4207, 1.0
    %v4216 = vadd.f32 %v4208, 1.0
    %v4217 = vmul.f32 %v4209, 0.5
    %v4218 = vmul.f32 %v4210, 0.5
    %v4219 = vmul.f32 %v4211, 0.5
    %v4220 = vmul.f32 %v4212, 0.5
    %v4221 = vmul.f32 %v4213, 0.5
    %v4222 = vmul.f32 %v4214, 0.5
    %v4223 = vmul.f32 %v4215, 0.5
    %v4224 = vmul.f32 %v4216, 0.5
    %v4225 = vmul.f32 %v4123, %v4217
    %v4226 = vmul.f32 %v4128, %v4218
    %v4227 = vmul.f32 %v4133, %v4219
    %v4228 = vmul.f32 %v4138, %v4220
    %v4229 = vmul.f32 %v4143, %v4221
    %v4230 = vmul.f32 %v4148, %v4222
    %v4231 = vmul.f32 %v4153, %v4223
    %v4232 = vmul.f32 %v4158, %v4224
    %v4233 = vlaneseq
    %v4234 = vshrl.u32 %v4233, 7
    %v4235 = vsub.s32 0, %v4234
    %v4236 = vrot.slane %v2551, %v4235
    %v4238 = vsel %vm1091, %v4225, 0
    %v4241 = vsel %vm1091, %v4226, 0
    %v4244 = vsel %vm1091, %v4227, 0
    %v4247 = vsel %vm1091, %v4228, 0
    %v4250 = vsel %vm1091, %v4229, 0
    %v4253 = vsel %vm1091, %v4230, 0
    %v4256 = vsel %vm1091, %v4231, 0
    %v4259 = vsel %vm1091, %v4232, 0
    %4261 = vmatprep.subr.mxu0 0.0
    %4262 = vmatpush1.msra.mxu0 %v2538
    %4263 = vmatprep.subr.mxu0 0.0
    %4264 = vmatpush1.msra.mxu0 %v2539
    %4265 = vmatprep.subr.mxu0 0.0
    %4266 = vmatpush1.msra.mxu0 %v2540
    %4267 = vmatprep.subr.mxu0 0.0
    %4268 = vmatpush1.msra.mxu0 %v2541
    %4269 = vmatprep.subr.mxu0 0.0
    %4270 = vmatpush1.msra.mxu0 %v2542
    %4271 = vmatprep.subr.mxu0 0.0
    %4272 = vmatpush1.msra.mxu0 %v2543
    %4273 = vmatprep.subr.mxu0 0.0
    %4274 = vmatpush1.msra.mxu0 %v2544
    %4275 = vmatprep.subr.mxu0 0.0
    %4276 = vmatpush1.msra.mxu0 %v2545
    %4277 = vmatprep.subr.mxu0 0.0
    %4278 = vmatpush1.msra.mxu0 0.0
    %4279 = vmatprep.subr.mxu0 0.0
    %4280 = vmatpush1.msra.mxu0 0.0
    %4281 = vmatprep.subr.mxu0 0.0
    %4282 = vmatpush1.msra.mxu0 0.0
    %4283 = vmatprep.subr.mxu0 0.0
    %4284 = vmatpush1.msra.mxu0 0.0
    %4285 = vmatprep.subr.mxu0 0.0
    %4286 = vmatpush1.msra.mxu0 0.0
    %4287 = vmatprep.subr.mxu0 0.0
    %4288 = vmatpush1.msra.mxu0 0.0
    %4289 = vmatprep.subr.mxu0 0.0
    %4290 = vmatpush1.msra.mxu0 0.0
    %4291 = vmatprep.subr.mxu0 0.0
    %4292 = vmatpush1.msra.mxu0 0.0
    %4293 = vmatprep.subr.mxu0 0.0
    %4294 = vmatpush1.msra.mxu0 0.0
    %4295 = vmatprep.subr.mxu0 0.0
    %4296 = vmatpush1.msra.mxu0 0.0
    %4297 = vmatprep.subr.mxu0 0.0
    %4298 = vmatpush1.msra.mxu0 0.0
    %4299 = vmatprep.subr.mxu0 0.0
    %4300 = vmatpush1.msra.mxu0 0.0
    %4301 = vmatprep.subr.mxu0 0.0
    %4302 = vmatpush1.msra.mxu0 0.0
    %4303 = vmatprep.subr.mxu0 0.0
    %4304 = vmatpush1.msra.mxu0 0.0
    %4305 = vmatprep.subr.mxu0 0.0
    %4306 = vmatpush1.msra.mxu0 0.0
    %4307 = vmatprep.subr.mxu0 0.0
    %4308 = vmatpush1.msra.mxu0 0.0
    %4309 = vmatprep.subr.mxu0 0.0
    %4310 = vmatpush1.msra.mxu0 0.0
    %4311 = vmatprep.subr.mxu0 0.0
    %4312 = vmatpush1.msra.mxu0 0.0
    %4313 = vmatprep.subr.mxu0 0.0
    %4314 = vmatpush1.msra.mxu0 0.0
    %4315 = vmatprep.subr.mxu0 0.0
    %4316 = vmatpush1.msra.mxu0 0.0
    %4317 = vmatprep.subr.mxu0 0.0
    %4318 = vmatpush1.msra.mxu0 0.0
    %4319 = vmatprep.subr.mxu0 0.0
    %4320 = vmatpush1.msra.mxu0 0.0
    %4321 = vmatprep.subr.mxu0 0.0
    %4322 = vmatpush1.msra.mxu0 0.0
    %4323 = vmatprep.subr.mxu0 0.0
    %4324 = vmatpush1.msra.mxu0 0.0
    %4325 = vmatprep.mubr.f32.mxu0 0.0
    %4326 = vmatmul.mubr.f32.gmra.mrb[0].mxu0 %v4238
    %v4327 = vpop.f32.mrb[0].mxu0
    %v4328 = vadd.f32 %v4236, %v4327
    %v4329 = vpop.f32.mrb[0].mxu0
    %4330 = vmatprep.mubr.f32.mxu0 0.0
    %4331 = vmatmul.mubr.f32.gmra.mrb[0].mxu0 %v4241
    %v4332 = vpop.f32.mrb[0].mxu0
    %v4333 = vadd.f32 %v4236, %v4332
    %v4334 = vpop.f32.mrb[0].mxu0
    %4335 = vmatprep.mubr.f32.mxu0 0.0
    %4336 = vmatmul.mubr.f32.gmra.mrb[0].mxu0 %v4244
    %v4337 = vpop.f32.mrb[0].mxu0
    %v4338 = vadd.f32 %v4236, %v4337
    %v4339 = vpop.f32.mrb[0].mxu0
    %4340 = vmatprep.mubr.f32.mxu0 0.0
    %4341 = vmatmul.mubr.f32.gmra.mrb[0].mxu0 %v4247
    %v4342 = vpop.f32.mrb[0].mxu0
    %v4343 = vadd.f32 %v4236, %v4342
    %v4344 = vpop.f32.mrb[0].mxu0
    %4345 = vmatprep.mubr.f32.mxu0 0.0
    %4346 = vmatmul.mubr.f32.gmra.mrb[0].mxu0 %v4250
    %v4347 = vpop.f32.mrb[0].mxu0
    %v4348 = vadd.f32 %v4236, %v4347
    %v4349 = vpop.f32.mrb[0].mxu0
    %4350 = vmatprep.mubr.f32.mxu0 0.0
    %4351 = vmatmul.mubr.f32.gmra.mrb[0].mxu0 %v4253
    %v4352 = vpop.f32.mrb[0].mxu0
    %v4353 = vadd.f32 %v4236, %v4352
    %v4354 = vpop.f32.mrb[0].mxu0
    %4355 = vmatprep.mubr.f32.mxu0 0.0
    %4356 = vmatmul.mubr.f32.gmra.mrb[0].mxu0 %v4256
    %v4357 = vpop.f32.mrb[0].mxu0
    %v4358 = vadd.f32 %v4236, %v4357
    %v4359 = vpop.f32.mrb[0].mxu0
    %4360 = vmatprep.mubr.f32.mxu0 0.0
    %4361 = vmatmul.mubr.f32.gmra.mrb[0].mxu0 %v4259
    %v4362 = vpop.f32.mrb[0].mxu0
    %v4363 = vadd.f32 %v4236, %v4362
    %v4364 = vpop.f32.mrb[0].mxu0
    %4365 = vdwg.mxu0
    %v4366 = vadd.f32 %v4328, %v4020
    %v4367 = vadd.f32 %v4333, %v4021
    %v4368 = vadd.f32 %v4338, %v4022
    %v4369 = vadd.f32 %v4343, %v4023
    %v4370 = vadd.f32 %v4348, %v4024
    %v4371 = vadd.f32 %v4353, %v4025
    %v4372 = vadd.f32 %v4358, %v4026
    %v4373 = vadd.f32 %v4363, %v4027
    %v4374 = vsel %vm385, %v4366, 0.0
    %4375 = vadd.xlane.f32.xlu0 %v4374
    %v4376 = vpop.xlane.xlu0 %4375
    %v4377 = vsel %vm385, %v4367, 0.0
    %4378 = vadd.xlane.f32.xlu0 %v4377
    %v4379 = vpop.xlane.xlu0 %4378
    %v4380 = vsel %vm385, %v4368, 0.0
    %4381 = vadd.xlane.f32.xlu0 %v4380
    %v4382 = vpop.xlane.xlu0 %4381
    %v4383 = vsel %vm385, %v4369, 0.0
    %4384 = vadd.xlane.f32.xlu0 %v4383
    %v4385 = vpop.xlane.xlu0 %4384
    %v4386 = vsel %vm385, %v4370, 0.0
    %4387 = vadd.xlane.f32.xlu0 %v4386
    %v4388 = vpop.xlane.xlu0 %4387
    %v4389 = vsel %vm385, %v4371, 0.0
    %4390 = vadd.xlane.f32.xlu0 %v4389
    %v4391 = vpop.xlane.xlu0 %4390
    %v4392 = vsel %vm385, %v4372, 0.0
    %4393 = vadd.xlane.f32.xlu0 %v4392
    %v4394 = vpop.xlane.xlu0 %4393
    %v4395 = vsel %vm385, %v4373, 0.0
    %4396 = vadd.xlane.f32.xlu0 %v4395
    %v4397 = vpop.xlane.xlu0 %4396
    %v4398 = vmul.f32 %v4376, %v410
    %v4399 = vmul.f32 %v4379, %v410
    %v4400 = vmul.f32 %v4382, %v410
    %v4401 = vmul.f32 %v4385, %v410
    %v4402 = vmul.f32 %v4388, %v410
    %v4403 = vmul.f32 %v4391, %v410
    %v4404 = vmul.f32 %v4394, %v410
    %v4405 = vmul.f32 %v4397, %v410
    %v4406 = vsub.f32 %v4366, %v4398
    %v4407 = vsub.f32 %v4367, %v4399
    %v4408 = vsub.f32 %v4368, %v4400
    %v4409 = vsub.f32 %v4369, %v4401
    %v4410 = vsub.f32 %v4370, %v4402
    %v4411 = vsub.f32 %v4371, %v4403
    %v4412 = vsub.f32 %v4372, %v4404
    %v4413 = vsub.f32 %v4373, %v4405
    %v4414 = vmul.f32 %v4406, %v4406
    %v4415 = vmul.f32 %v4407, %v4407
    %v4416 = vmul.f32 %v4408, %v4408
    %v4417 = vmul.f32 %v4409, %v4409
    %v4418 = vmul.f32 %v4410, %v4410
    %v4419 = vmul.f32 %v4411, %v4411
    %v4420 = vmul.f32 %v4412, %v4412
    %v4421 = vmul.f32 %v4413, %v4413
    %v4422 = vsel %vm385, %v4414, 0.0
    %4423 = vadd.xlane.f32.xlu0 %v4422
    %v4424 = vpop.xlane.xlu0 %4423
    %v4425 = vsel %vm385, %v4415, 0.0
    %4426 = vadd.xlane.f32.xlu0 %v4425
    %v4427 = vpop.xlane.xlu0 %4426
    %v4428 = vsel %vm385, %v4416, 0.0
    %4429 = vadd.xlane.f32.xlu0 %v4428
    %v4430 = vpop.xlane.xlu0 %4429
    %v4431 = vsel %vm385, %v4417, 0.0
    %4432 = vadd.xlane.f32.xlu0 %v4431
    %v4433 = vpop.xlane.xlu0 %4432
    %v4434 = vsel %vm385, %v4418, 0.0
    %4435 = vadd.xlane.f32.xlu0 %v4434
    %v4436 = vpop.xlane.xlu0 %4435
    %v4437 = vsel %vm385, %v4419, 0.0
    %4438 = vadd.xlane.f32.xlu0 %v4437
    %v4439 = vpop.xlane.xlu0 %4438
    %v4440 = vsel %vm385, %v4420, 0.0
    %4441 = vadd.xlane.f32.xlu0 %v4440
    %v4442 = vpop.xlane.xlu0 %4441
    %v4443 = vsel %vm385, %v4421, 0.0
    %4444 = vadd.xlane.f32.xlu0 %v4443
    %v4445 = vpop.xlane.xlu0 %4444
    %v4446 = vmul.f32 %v4424, %v410
    %v4447 = vmul.f32 %v4427, %v410
    %v4448 = vmul.f32 %v4430, %v410
    %v4449 = vmul.f32 %v4433, %v410
    %v4450 = vmul.f32 %v4436, %v410
    %v4451 = vmul.f32 %v4439, %v410
    %v4452 = vmul.f32 %v4442, %v410
    %v4453 = vmul.f32 %v4445, %v410
    %v4454 = vadd.f32 %v4446, 1e-12
    %v4455 = vadd.f32 %v4447, 1e-12
    %v4456 = vadd.f32 %v4448, 1e-12
    %v4457 = vadd.f32 %v4449, 1e-12
    %v4458 = vadd.f32 %v4450, 1e-12
    %v4459 = vadd.f32 %v4451, 1e-12
    %v4460 = vadd.f32 %v4452, 1e-12
    %v4461 = vadd.f32 %v4453, 1e-12
    %v4462 = vrsqrt.pop %v4454
    %v4463 = vrsqrt.pop %v4455
    %v4464 = vrsqrt.pop %v4456
    %v4465 = vrsqrt.pop %v4457
    %v4466 = vrsqrt.pop %v4458
    %v4467 = vrsqrt.pop %v4459
    %v4468 = vrsqrt.pop %v4460
    %v4469 = vrsqrt.pop %v4461
    %v4470 = vmul.f32 %v4406, %v4462
    %v4471 = vmul.f32 %v4407, %v4463
    %v4472 = vmul.f32 %v4408, %v4464
    %v4473 = vmul.f32 %v4409, %v4465
    %v4474 = vmul.f32 %v4410, %v4466
    %v4475 = vmul.f32 %v4411, %v4467
    %v4476 = vmul.f32 %v4412, %v4468
    %v4477 = vmul.f32 %v4413, %v4469
    %v4478 = vlaneseq
    %v4479 = vshrl.u32 %v4478, 7
    %v4480 = vsub.s32 0, %v4479
    %v4481 = vrot.slane %v2554, %v4480
    %v4482 = vmul.f32 %v4470, %v4481
    %v4483 = vmul.f32 %v4471, %v4481
    %v4484 = vmul.f32 %v4472, %v4481
    %v4485 = vmul.f32 %v4473, %v4481
    %v4486 = vmul.f32 %v4474, %v4481
    %v4487 = vmul.f32 %v4475, %v4481
    %v4488 = vmul.f32 %v4476, %v4481
    %v4489 = vmul.f32 %v4477, %v4481
    %v4490 = vlaneseq
    %v4491 = vshrl.u32 %v4490, 7
    %v4492 = vsub.s32 0, %v4491
    %v4493 = vrot.slane %v2555, %v4492
    %v4494 = vadd.f32 %v4482, %v4493
    %v4495 = vadd.f32 %v4483, %v4493
    %v4496 = vadd.f32 %v4484, %v4493
    %v4497 = vadd.f32 %v4485, %v4493
    %v4498 = vadd.f32 %v4486, %v4493
    %v4499 = vadd.f32 %v4487, %v4493
    %v4500 = vadd.f32 %v4488, %v4493
    %v4501 = vadd.f32 %v4489, %v4493
    %v4502 = vmul.u32 %v116, 8
    %vm4503 = vcmp.eq.s32.totalorder %v4502, %v51
    %v4504 = vsel %vm4503, 1.0, 0.0
    %v4506 = vsel %vm1091, %v4504, 0
    %4508 = vmatprep.subr.mxu0 0.0
    %4509 = vmatpush1.msra.mxu0 %v4494
    %4510 = vmatprep.subr.mxu0 0.0
    %4511 = vmatpush1.msra.mxu0 %v4495
    %4512 = vmatprep.subr.mxu0 0.0
    %4513 = vmatpush1.msra.mxu0 %v4496
    %4514 = vmatprep.subr.mxu0 0.0
    %4515 = vmatpush1.msra.mxu0 %v4497
    %4516 = vmatprep.subr.mxu0 0.0
    %4517 = vmatpush1.msra.mxu0 %v4498
    %4518 = vmatprep.subr.mxu0 0.0
    %4519 = vmatpush1.msra.mxu0 %v4499
    %4520 = vmatprep.subr.mxu0 0.0
    %4521 = vmatpush1.msra.mxu0 %v4500
    %4522 = vmatprep.subr.mxu0 0.0
    %4523 = vmatpush1.msra.mxu0 %v4501
    %4524 = vmatprep.subr.mxu0 0.0
    %4525 = vmatpush1.msra.mxu0 0.0
    %4526 = vmatprep.subr.mxu0 0.0
    %4527 = vmatpush1.msra.mxu0 0.0
    %4528 = vmatprep.subr.mxu0 0.0
    %4529 = vmatpush1.msra.mxu0 0.0
    %4530 = vmatprep.subr.mxu0 0.0
    %4531 = vmatpush1.msra.mxu0 0.0
    %4532 = vmatprep.subr.mxu0 0.0
    %4533 = vmatpush1.msra.mxu0 0.0
    %4534 = vmatprep.subr.mxu0 0.0
    %4535 = vmatpush1.msra.mxu0 0.0
    %4536 = vmatprep.subr.mxu0 0.0
    %4537 = vmatpush1.msra.mxu0 0.0
    %4538 = vmatprep.subr.mxu0 0.0
    %4539 = vmatpush1.msra.mxu0 0.0
    %4540 = vmatprep.subr.mxu0 0.0
    %4541 = vmatpush1.msra.mxu0 0.0
    %4542 = vmatprep.subr.mxu0 0.0
    %4543 = vmatpush1.msra.mxu0 0.0
    %4544 = vmatprep.subr.mxu0 0.0
    %4545 = vmatpush1.msra.mxu0 0.0
    %4546 = vmatprep.subr.mxu0 0.0
    %4547 = vmatpush1.msra.mxu0 0.0
    %4548 = vmatprep.subr.mxu0 0.0
    %4549 = vmatpush1.msra.mxu0 0.0
    %4550 = vmatprep.subr.mxu0 0.0
    %4551 = vmatpush1.msra.mxu0 0.0
    %4552 = vmatprep.subr.mxu0 0.0
    %4553 = vmatpush1.msra.mxu0 0.0
    %4554 = vmatprep.subr.mxu0 0.0
    %4555 = vmatpush1.msra.mxu0 0.0
    %4556 = vmatprep.subr.mxu0 0.0
    %4557 = vmatpush1.msra.mxu0 0.0
    %4558 = vmatprep.subr.mxu0 0.0
    %4559 = vmatpush1.msra.mxu0 0.0
    %4560 = vmatprep.subr.mxu0 0.0
    %4561 = vmatpush1.msra.mxu0 0.0
    %4562 = vmatprep.subr.mxu0 0.0
    %4563 = vmatpush1.msra.mxu0 0.0
    %4564 = vmatprep.subr.mxu0 0.0
    %4565 = vmatpush1.msra.mxu0 0.0
    %4566 = vmatprep.subr.mxu0 0.0
    %4567 = vmatpush1.msra.mxu0 0.0
    %4568 = vmatprep.subr.mxu0 0.0
    %4569 = vmatpush1.msra.mxu0 0.0
    %4570 = vmatprep.subr.mxu0 0.0
    %4571 = vmatpush1.msra.mxu0 0.0
    %4572 = vmatprep.mubr.f32.mxu0 0.0
    %4573 = vmatmul.mubr.f32.gmra.mrb[0].mxu0 %v4506
    %v4574 = vpop.f32.mrb[0].mxu0
    %v4575 = vadd.f32 0.0, %v4574
    %v4576 = vpop.f32.mrb[0].mxu0
    %4577 = vdwg.mxu0
    %v4578 = vld [vmem:[#allocation4 + $0x90] sm:$0xff]
    %v4579 = vld [vmem:[#allocation4 + $0x98] sm:$0xff]
    %v4580 = vld [vmem:[#allocation4 + $0xa0] sm:$0xff]
    %v4581 = vld [vmem:[#allocation4 + $0xa8] sm:$0xff]
    %v4582 = vld [vmem:[#allocation4 + $0xd4] sm:$0x1]
    %v4583 = vlaneseq
    %v4584 = vshrl.u32 %v4583, 7
    %v4585 = vsub.s32 0, %v4584
    %v4586 = vrot.slane %v4582, %v4585
    %v4588 = vsel %vm385, %v4575, 0
    %4590 = vmatprep.subr.mxu0 0.0
    %4591 = vmatpush1.msra.mxu0 %v4578
    %4592 = vmatprep.subr.mxu0 0.0
    %4593 = vmatpush1.msra.mxu0 %v4579
    %4594 = vmatprep.subr.mxu0 0.0
    %4595 = vmatpush1.msra.mxu0 %v4580
    %4596 = vmatprep.subr.mxu0 0.0
    %4597 = vmatpush1.msra.mxu0 %v4581
    %4598 = vmatprep.subr.mxu0 0.0
    %4599 = vmatpush1.msra.mxu0 0.0
    %4600 = vmatprep.subr.mxu0 0.0
    %4601 = vmatpush1.msra.mxu0 0.0
    %4602 = vmatprep.subr.mxu0 0.0
    %4603 = vmatpush1.msra.mxu0 0.0
    %4604 = vmatprep.subr.mxu0 0.0
    %4605 = vmatpush1.msra.mxu0 0.0
    %4606 = vmatprep.subr.mxu0 0.0
    %4607 = vmatpush1.msra.mxu0 0.0
    %4608 = vmatprep.subr.mxu0 0.0
    %4609 = vmatpush1.msra.mxu0 0.0
    %4610 = vmatprep.subr.mxu0 0.0
    %4611 = vmatpush1.msra.mxu0 0.0
    %4612 = vmatprep.subr.mxu0 0.0
    %4613 = vmatpush1.msra.mxu0 0.0
    %4614 = vmatprep.subr.mxu0 0.0
    %4615 = vmatpush1.msra.mxu0 0.0
    %4616 = vmatprep.subr.mxu0 0.0
    %4617 = vmatpush1.msra.mxu0 0.0
    %4618 = vmatprep.subr.mxu0 0.0
    %4619 = vmatpush1.msra.mxu0 0.0
    %4620 = vmatprep.subr.mxu0 0.0
    %4621 = vmatpush1.msra.mxu0 0.0
    %4622 = vmatprep.subr.mxu0 0.0
    %4623 = vmatpush1.msra.mxu0 0.0
    %4624 = vmatprep.subr.mxu0 0.0
    %4625 = vmatpush1.msra.mxu0 0.0
    %4626 = vmatprep.subr.mxu0 0.0
    %4627 = vmatpush1.msra.mxu0 0.0
    %4628 = vmatprep.subr.mxu0 0.0
    %4629 = vmatpush1.msra.mxu0 0.0
    %4630 = vmatprep.subr.mxu0 0.0
    %4631 = vmatpush1.msra.mxu0 0.0
    %4632 = vmatprep.subr.mxu0 0.0
    %4633 = vmatpush1.msra.mxu0 0.0
    %4634 = vmatprep.subr.mxu0 0.0
    %4635 = vmatpush1.msra.mxu0 0.0
    %4636 = vmatprep.subr.mxu0 0.0
    %4637 = vmatpush1.msra.mxu0 0.0
    %4638 = vmatprep.subr.mxu0 0.0
    %4639 = vmatpush1.msra.mxu0 0.0
    %4640 = vmatprep.subr.mxu0 0.0
    %4641 = vmatpush1.msra.mxu0 0.0
    %4642 = vmatprep.subr.mxu0 0.0
    %4643 = vmatpush1.msra.mxu0 0.0
    %4644 = vmatprep.subr.mxu0 0.0
    %4645 = vmatpush1.msra.mxu0 0.0
    %4646 = vmatprep.subr.mxu0 0.0
    %4647 = vmatpush1.msra.mxu0 0.0
    %4648 = vmatprep.subr.mxu0 0.0
    %4649 = vmatpush1.msra.mxu0 0.0
    %4650 = vmatprep.subr.mxu0 0.0
    %4651 = vmatpush1.msra.mxu0 0.0
    %4652 = vmatprep.subr.mxu0 0.0
    %4653 = vmatpush1.msra.mxu0 0.0
    %4654 = vmatprep.mubr.f32.mxu0 0.0
    %4655 = vmatmul.mubr.f32.gmra.mrb[0].mxu0 %v4588
    %v4656 = vpop.f32.mrb[0].mxu0
    %v4657 = vadd.f32 %v4586, %v4656
    %v4658 = vpop.f32.mrb[0].mxu0
    %4659 = vdwg.mxu0
    %v4660 = vtanh.pop %v4657
    %v4661 = vld [vmem:[#allocation4 + $0xb0] sm:$0xff]
    %v4662 = vld [vmem:[#allocation4 + $0xb8] sm:$0xff]
    %v4663 = vld [vmem:[#allocation4 + $0xc0] sm:$0xff]
    %v4664 = vld [vmem:[#allocation4 + $0xc8] sm:$0xff]
    %v4665 = vld [vmem:[#allocation4 + $0xd5] sm:$0x1]
    %v4666 = vlaneseq
    %v4667 = vshrl.u32 %v4666, 7
    %v4668 = vsub.s32 0, %v4667
    %v4669 = vrot.slane %v4665, %v4668
    %v4671 = vsel %vm385, %v4660, 0
    %4673 = vmatprep.subr.mxu0 0.0
    %4674 = vmatpush1.msra.mxu0 %v4661
    %4675 = vmatprep.subr.mxu0 0.0
    %4676 = vmatpush1.msra.mxu0 %v4662
    %4677 = vmatprep.subr.mxu0 0.0
    %4678 = vmatpush1.msra.mxu0 %v4663
    %4679 = vmatprep.subr.mxu0 0.0
    %4680 = vmatpush1.msra.mxu0 %v4664
    %4681 = vmatprep.subr.mxu0 0.0
    %4682 = vmatpush1.msra.mxu0 0.0
    %4683 = vmatprep.subr.mxu0 0.0
    %4684 = vmatpush1.msra.mxu0 0.0
    %4685 = vmatprep.subr.mxu0 0.0
    %4686 = vmatpush1.msra.mxu0 0.0
    %4687 = vmatprep.subr.mxu0 0.0
    %4688 = vmatpush1.msra.mxu0 0.0
    %4689 = vmatprep.subr.mxu0 0.0
    %4690 = vmatpush1.msra.mxu0 0.0
    %4691 = vmatprep.subr.mxu0 0.0
    %4692 = vmatpush1.msra.mxu0 0.0
    %4693 = vmatprep.subr.mxu0 0.0
    %4694 = vmatpush1.msra.mxu0 0.0
    %4695 = vmatprep.subr.mxu0 0.0
    %4696 = vmatpush1.msra.mxu0 0.0
    %4697 = vmatprep.subr.mxu0 0.0
    %4698 = vmatpush1.msra.mxu0 0.0
    %4699 = vmatprep.subr.mxu0 0.0
    %4700 = vmatpush1.msra.mxu0 0.0
    %4701 = vmatprep.subr.mxu0 0.0
    %4702 = vmatpush1.msra.mxu0 0.0
    %4703 = vmatprep.subr.mxu0 0.0
    %4704 = vmatpush1.msra.mxu0 0.0
    %4705 = vmatprep.subr.mxu0 0.0
    %4706 = vmatpush1.msra.mxu0 0.0
    %4707 = vmatprep.subr.mxu0 0.0
    %4708 = vmatpush1.msra.mxu0 0.0
    %4709 = vmatprep.subr.mxu0 0.0
    %4710 = vmatpush1.msra.mxu0 0.0
    %4711 = vmatprep.subr.mxu0 0.0
    %4712 = vmatpush1.msra.mxu0 0.0
    %4713 = vmatprep.subr.mxu0 0.0
    %4714 = vmatpush1.msra.mxu0 0.0
    %4715 = vmatprep.subr.mxu0 0.0
    %4716 = vmatpush1.msra.mxu0 0.0
    %4717 = vmatprep.subr.mxu0 0.0
    %4718 = vmatpush1.msra.mxu0 0.0
    %4719 = vmatprep.subr.mxu0 0.0
    %4720 = vmatpush1.msra.mxu0 0.0
    %4721 = vmatprep.subr.mxu0 0.0
    %4722 = vmatpush1.msra.mxu0 0.0
    %4723 = vmatprep.subr.mxu0 0.0
    %4724 = vmatpush1.msra.mxu0 0.0
    %4725 = vmatprep.subr.mxu0 0.0
    %4726 = vmatpush1.msra.mxu0 0.0
    %4727 = vmatprep.subr.mxu0 0.0
    %4728 = vmatpush1.msra.mxu0 0.0
    %4729 = vmatprep.subr.mxu0 0.0
    %4730 = vmatpush1.msra.mxu0 0.0
    %4731 = vmatprep.subr.mxu0 0.0
    %4732 = vmatpush1.msra.mxu0 0.0
    %4733 = vmatprep.subr.mxu0 0.0
    %4734 = vmatpush1.msra.mxu0 0.0
    %4735 = vmatprep.subr.mxu0 0.0
    %4736 = vmatpush1.msra.mxu0 0.0
    %4737 = vmatprep.mubr.f32.mxu0 0.0
    %4738 = vmatmul.mubr.f32.gmra.mrb[0].mxu0 %v4671
    %v4739 = vpop.f32.mrb[0].mxu0
    %v4740 = vadd.f32 %v4669, %v4739
    %v4741 = vpop.f32.mrb[0].mxu0
    %4742 = vdwg.mxu0
    %v4743 = vld [vmem:[#allocation4 + $0xd6] sm:$0x1]
    %v4744 = vlaneseq
    %v4745 = vshrl.u32 %v4744, 7
    %v4746 = vsub.s32 0, %v4745
    %v4747 = vrot.slane %v4743, %v4746
    %v4748 = vmul.f32 %v4740, %v4747
    %v4749 = vsel %vm385, %v4748, 0.0
    %4750 = vadd.xlane.f32.xlu0 %v4749
    %v4751 = vpop.xlane.xlu0 %4750
    %v4752 = vld [vmem:[#allocation4 + $0xd7] sm:$0x1]
    %v4753 = vlaneseq
    %v4754 = vshrl.u32 %v4753, 7
    %v4755 = vsub.s32 0, %v4754
    %v4756 = vrot.slane %v4752, %v4755
    %v4757 = vadd.f32 %v4751, %v4756
    %vm4758 = vcmask 7168
    %4759 = vst.msk [vmem:[%s3] sm:$0xff] %vm4758, %v4757
    // Predicated region
    $region22: #{bert_for_race_forward.1} parent=1 // pred_check
      _
    $region23: #{bert_for_race_forward.1} parent=1 // pred_check_branch
      %4761 = sbr.rel (0) target = $region25
    $region24: #{bert_for_race_forward.1} parent=1 // pred_region
      _
    $region25: #{bert_for_race_forward.1} parent=1 // pred_fallthru
      _
    // Predicated region
    $region26: #{bert_for_race_forward.1} parent=1 // pred_check
      _
    $region27: #{bert_for_race_forward.1} parent=1 // pred_check_branch
      %4763 = sbr.rel (0) target = $region29
    $region28: #{bert_for_race_forward.1} parent=1 // pred_region
      _
    $region29: #{bert_for_race_forward.1} parent=1 // pred_fallthru
      _
    %4764 = vsyncpa [#allocation3], 1
    %4765 = vsyncpa [#allocation5], 1

</llo_original>
